<compile_context>
chip_gen: v7x
topology: tpu7x:2x2x1
jax: 0.10.0
libtpu: 0.0.40
codegen_flags: <defaults>
</compile_context>

<pallas_src>
import numpy as np

import jax
import jax.numpy as jnp
from jax.experimental import pallas as pl
from jax.experimental.pallas import tpu as pltpu

F32 = jnp.float32
_INV_SQRT2 = 0.7071067811865476


def _erf(x):
    # Abramowitz & Stegun 7.1.26 rational approximation; |error| < 1.5e-7,
    # i.e. exact at float32 resolution (matches torch.erf / F.gelu).
    t = 1.0 / (1.0 + 0.3275911 * jnp.abs(x))
    poly = t * (0.254829592 + t * (-0.284496736 + t * (1.421413741
               + t * (-1.453152027 + t * 1.061405429))))
    y = 1.0 - poly * jnp.exp(-x * x)
    return jnp.where(x >= 0.0, y, -y)


# ------------------------------ fused kernel -------------------------------

def fused_forward_kernel(x_ref, in_w_ref, in_b_ref,
                         a_re_ref, a_im_ref, c_re_ref, c_im_ref, step_ref,
                         ln_g_ref, ln_b_ref, dvec_ref, w12_ref, b12_ref,
                         out_w_ref, out_b_ref, mix_w_ref, mix_b_ref,
                         o_ref, y_sc):
    """One grid step == one SeqBlockGLU layer; activations stay in VMEM."""
    i = pl.program_id(0)
    n_layers = pl.num_programs(0)
    N, Hw = a_re_ref.shape
    B = o_ref.shape[0]
    BL = y_sc.shape[0]
    L = BL // B

    # ---------------- step 0: input Linear(1, width) -----------------------
    @pl.when(i == 0)
    def _():
        y_sc[...] = x_ref[...] * in_w_ref[...] + in_b_ref[...]

    # --------- S4D-ZOH kernel for layer i: kT[t, h] = K[h, t] --------------
    a_re = jnp.minimum(a_re_ref[...], -1e-4)        # torch.clip(A_re, None, -1e-4)
    a_im = a_im_ref[...]
    step = step_ref[...]                            # (1, Hw)
    dt_re = step * a_re                             # Re(step * A)   (N, Hw)
    dt_im = step * a_im                             # Im(step * A)
    e = jnp.exp(dt_re)
    e_re = e * jnp.cos(dt_im) - 1.0                 # exp(step*A) - 1
    e_im = e * jnp.sin(dt_im)
    denom = a_re * a_re + a_im * a_im
    cons_re = (e_re * a_re + e_im * a_im) / denom   # (exp(step*A)-1)/A
    cons_im = (e_im * a_re - e_re * a_im) / denom
    cc_re = c_re_ref[...] * cons_re - c_im_ref[...] * cons_im   # C * cons
    cc_im = c_re_ref[...] * cons_im + c_im_ref[...] * cons_re
    tpos = jax.lax.broadcasted_iota(jnp.int32, (L, Hw), 0).astype(jnp.float32)
    kT = jnp.zeros((L, Hw), jnp.float32)
    for n in range(N):                              # static unroll over state dim
        mag = jnp.exp(tpos * dt_re[n:n + 1, :])     # |exp(t*step*A_n)|
        ang = tpos * dt_im[n:n + 1, :]
        kT = kT + mag * (cc_re[n:n + 1, :] * jnp.cos(ang)
                         - cc_im[n:n + 1, :] * jnp.sin(ang))

    # ----------------------- SeqBlockGLU layer i ---------------------------
    y = y_sc[...]                                   # (B*L, Hw) residual in
    # LayerNorm(width): eps=1e-5, biased variance (PyTorch semantics)
    mean = jnp.mean(y, axis=-1, keepdims=True)
    var = jnp.mean((y - mean) ** 2, axis=-1, keepdims=True)
    u = (y - mean) * jax.lax.rsqrt(var + 1e-5) * ln_g_ref[...] + ln_b_ref[...]

    # causal S4D conv + D skip, channel-last, shift-and-accumulate:
    #   conv[b,t,h] = sum_{s<=t} u[b,s,h] * K[h,t-s] + D[h]*u[b,t,h]
    u3 = u.reshape(B, L, Hw)
    pad = jnp.concatenate([jnp.zeros((B, L, Hw), jnp.float32), u3], axis=1)
    acc = dvec_ref[...][None, :, :] * u3            # D * x
    for sh in range(L):                             # static unroll over lag
        acc = acc + pad[:, L - sh:2 * L - sh, :] * kT[sh:sh + 1, :][None, :, :]
    x2 = acc.reshape(BL, Hw)

    # exact GELU -> one fused [mlp1 | mlp2] MXU matmul -> GLU -> residual
    g = 0.5 * x2 * (1.0 + _erf(x2 * _INV_SQRT2))
    h12 = jnp.dot(g, w12_ref[...], preferred_element_type=jnp.float32) + b12_ref[...]
    h1 = h12[:, :Hw]
    h2 = h12[:, Hw:]
    y_new = y + h1 * (1.0 / (1.0 + jnp.exp(-h2)))   # dropout == identity
    y_sc[...] = y_new

    # ------- last step: output Linear(width, 1) + horizon mixer ------------
    @pl.when(i == n_layers - 1)
    def _():
        yo = jnp.sum(y_new.reshape(B, L, Hw) * out_w_ref[...][None, :, :],
                     axis=-1) + out_b_ref[...]      # (B, L)
        o_ref[...] = jnp.dot(yo, mix_w_ref[...],
                             preferred_element_type=jnp.float32) + mix_b_ref[...]


# --------------------------- parameter building ----------------------------

def gen_hippo_s4d(N):
    ab = np.sqrt(1.0 + 2.0 * np.arange(N))
    A = ab[:, None] * ab[None, :]
    A = np.diag(np.arange(N).astype(np.float64)) - np.tril(A)
    P = np.sqrt(np.arange(N) + 0.5)
    S = A + P[:, None] * P[None, :]
    lam_re = np.mean(np.diagonal(S)) * np.ones(N)
    # torch.linalg.eigh(-S*1j) uses the lower triangle; numpy eigvalsh matches.
    lam_im = np.linalg.eigvalsh(-1j * S)
    return lam_re.astype(np.float32), lam_im.astype(np.float32)


def init_params(key, *, input_size, num_horizons, d_state, width, depth):
    L, N, Hw = input_size, d_state, width
    lam_re, lam_im = gen_hippo_s4d(N)
    keys = iter(jax.random.split(key, 4 + depth * 4))

    def lin(kk, fan_in, fan_out, zero_bias=False):
        bound = 1.0 / np.sqrt(fan_in)
        w = jax.random.uniform(kk, (fan_in, fan_out), F32, -bound, bound)
        if zero_bias:
            b = jnp.zeros((1, fan_out), F32)
        else:
            b = jax.random.uniform(jax.random.fold_in(kk, 1), (1, fan_out), F32,
                                   -bound, bound)
        return w, b

    params = {}
    params["in_w"], params["in_b"] = lin(next(keys), 1, Hw)      # Linear(1, width)
    ow, ob = lin(next(keys), Hw, 1)                              # Linear(width, 1)
    params["out_w"] = ow.reshape(1, Hw)                          # row layout
    params["out_b"] = ob.reshape(1, 1)
    params["mix_w"], params["mix_b"] = lin(next(keys), L, num_horizons)

    A_re_T = jnp.broadcast_to(jnp.asarray(lam_re)[:, None], (N, Hw)).astype(F32)
    A_im_T = jnp.broadcast_to(jnp.asarray(lam_im)[:, None], (N, Hw)).astype(F32)

    ln_g, ln_b, c_re, c_im, step_t, d_v, w12, b12 = ([] for _ in range(8))
    log_dmin, log_dmax = np.log(0.001), np.log(0.1)
    for _ in range(depth):
        ln_g.append(jnp.ones((1, Hw), F32))
        ln_b.append(jnp.zeros((1, Hw), F32))
        C = np.float32(np.sqrt(0.5)) * jax.random.normal(next(keys), (N, Hw, 2), F32)
        c_re.append(C[..., 0]); c_im.append(C[..., 1])
        unif = jax.random.uniform(next(keys), (1, Hw), F32)
        step_t.append(jnp.exp(unif * (log_dmax - log_dmin) + log_dmin))
        d_v.append(jnp.ones((1, Hw), F32))
        w1, b1 = lin(next(keys), Hw, Hw, zero_bias=True)
        w2, b2 = lin(next(keys), Hw, Hw, zero_bias=True)
        w12.append(jnp.concatenate([w1, w2], axis=1))            # fused [mlp1|mlp2]
        b12.append(jnp.concatenate([b1, b2], axis=1))

    params["A_re_T"] = jnp.broadcast_to(A_re_T[None], (depth, N, Hw))
    params["A_im_T"] = jnp.broadcast_to(A_im_T[None], (depth, N, Hw))
    params["C_re_T"] = jnp.stack(c_re)
    params["C_im_T"] = jnp.stack(c_im)
    params["step_T"] = jnp.stack(step_t)
    params["ln_g"] = jnp.stack(ln_g)
    params["ln_b"] = jnp.stack(ln_b)
    params["D"] = jnp.stack(d_v)
    params["w12"] = jnp.stack(w12)
    params["b12"] = jnp.stack(b12)
    return params


# ------------------------------- forward -----------------------------------

@jax.jit
def s4_backbone_forward(params, xt_target, xt, xs, xf):
    # xt, xs, xf are unused by the reference forward (only xt_target is consumed).
    B, L, _ = xt_target.shape
    Hw = params["in_w"].shape[1]
    depth, N, _ = params["A_re_T"].shape
    num_h = params["mix_w"].shape[1]

    def fixed(shape):
        return pl.BlockSpec(shape, lambda i, _s=shape: (0,) * len(_s))

    def per_layer(shape):
        return pl.BlockSpec((None,) + shape,
                            lambda i, _s=shape: (i,) + (0,) * len(_s))

    out = pl.pallas_call(
        fused_forward_kernel,
        out_shape=jax.ShapeDtypeStruct((B, num_h), F32),
        grid=(depth,),
        in_specs=[
            fixed((B * L, 1)),               # xt_target (flattened)
            fixed((1, Hw)),                  # in_w
            fixed((1, Hw)),                  # in_b
            per_layer((N, Hw)),              # A_re
            per_layer((N, Hw)),              # A_im
            per_layer((N, Hw)),              # C_re
            per_layer((N, Hw)),              # C_im
            per_layer((1, Hw)),              # step
            per_layer((1, Hw)),              # ln gamma
            per_layer((1, Hw)),              # ln beta
            per_layer((1, Hw)),              # D
            per_layer((Hw, 2 * Hw)),         # [w1 | w2]
            per_layer((1, 2 * Hw)),          # [b1 | b2]
            fixed((1, Hw)),                  # out_w (row)
            fixed((1, 1)),                   # out_b
            fixed((L, num_h)),               # mix_w
            fixed((1, num_h)),               # mix_b
        ],
        out_specs=pl.BlockSpec((B, num_h), lambda i: (0, 0)),
        scratch_shapes=[pltpu.VMEM((B * L, Hw), F32)],   # running activation y
        compiler_params=pltpu.CompilerParams(
            dimension_semantics=("arbitrary",)),
    )(xt_target.reshape(B * L, 1),
      params["in_w"], params["in_b"],
      params["A_re_T"], params["A_im_T"],
      params["C_re_T"], params["C_im_T"], params["step_T"],
      params["ln_g"], params["ln_b"], params["D"],
      params["w12"], params["b12"],
      params["out_w"], params["out_b"],
      params["mix_w"], params["mix_b"])
    return out


# --------------------------------- main -------------------------------------

if __name__ == "__main__":
    B = 2            # batch
    L = 16           # input_size (sequence length)
    NUM_H = 4        # num_horizons
    N_STATE = 8      # d_state
    WIDTH = 32       # width
    DEPTH = 2        # depth

    key = jax.random.PRNGKey(0)
    kp, k1, k2, k3, k4 = jax.random.split(key, 5)

    params = init_params(kp, input_size=L, num_horizons=NUM_H,
                         d_state=N_STATE, width=WIDTH, depth=DEPTH)

    xt_target = jax.random.normal(k1, (B, L, 1), F32)
    xt = jax.random.normal(k2, (B, L, 3), F32)            # unused (signature parity)
    xs = jax.random.normal(k3, (B, 2), F32)                # unused
    xf = jax.random.normal(k4, (B, L + NUM_H, 2), F32)     # unused

    out = s4_backbone_forward(params, xt_target, xt, xs, xf)
    out = jax.block_until_ready(out)
    assert out.shape == (B, NUM_H), out.shape
    assert bool(jnp.all(jnp.isfinite(out)))
    print("KERNEL_OK")
</pallas_src>

<mosaic_0001>
module attributes {stable_mosaic.version = 11 : i64} {
  func.func @fused_forward_kernel(%arg0: i32, %arg1: memref<32x1xf32, #tpu.memory_space<vmem>>, %arg2: memref<1x32xf32, #tpu.memory_space<vmem>>, %arg3: memref<1x32xf32, #tpu.memory_space<vmem>>, %arg4: memref<1x8x32xf32, #tpu.memory_space<vmem>>, %arg5: memref<1x8x32xf32, #tpu.memory_space<vmem>>, %arg6: memref<1x8x32xf32, #tpu.memory_space<vmem>>, %arg7: memref<1x8x32xf32, #tpu.memory_space<vmem>>, %arg8: memref<1x1x32xf32, #tpu.memory_space<vmem>>, %arg9: memref<1x1x32xf32, #tpu.memory_space<vmem>>, %arg10: memref<1x1x32xf32, #tpu.memory_space<vmem>>, %arg11: memref<1x1x32xf32, #tpu.memory_space<vmem>>, %arg12: memref<1x32x64xf32, #tpu.memory_space<vmem>>, %arg13: memref<1x1x64xf32, #tpu.memory_space<vmem>>, %arg14: memref<1x32xf32, #tpu.memory_space<vmem>>, %arg15: memref<1x1xf32, #tpu.memory_space<vmem>>, %arg16: memref<16x4xf32, #tpu.memory_space<vmem>>, %arg17: memref<1x4xf32, #tpu.memory_space<vmem>>, %arg18: memref<2x4xf32, #tpu.memory_space<vmem>>, %arg19: memref<32x32xf32, #tpu.memory_space<vmem>>) attributes {dimension_semantics = [#tpu.dimension_semantics<arbitrary>], iteration_bounds = array<i64: 2>, scalar_prefetch = 0 : i64, scratch_operands = 1 : i64, tpu.core_type = #tpu.core_type<tc>, window_params = [{pipeline_mode = #tpu.pipeline_mode<synchronous>, transform_indices = @transform_0, window_bounds = array<i64: 32, 1>}, {pipeline_mode = #tpu.pipeline_mode<synchronous>, transform_indices = @transform_1, window_bounds = array<i64: 1, 32>}, {pipeline_mode = #tpu.pipeline_mode<synchronous>, transform_indices = @transform_2, window_bounds = array<i64: 1, 32>}, {transform_indices = @transform_3, window_bounds = array<i64: 1, 8, 32>}, {transform_indices = @transform_4, window_bounds = array<i64: 1, 8, 32>}, {transform_indices = @transform_5, window_bounds = array<i64: 1, 8, 32>}, {transform_indices = @transform_6, window_bounds = array<i64: 1, 8, 32>}, {transform_indices = @transform_7, window_bounds = array<i64: 1, 1, 32>}, {transform_indices = @transform_8, window_bounds = array<i64: 1, 1, 32>}, {transform_indices = @transform_9, window_bounds = array<i64: 1, 1, 32>}, {transform_indices = @transform_10, window_bounds = array<i64: 1, 1, 32>}, {transform_indices = @transform_11, window_bounds = array<i64: 1, 32, 64>}, {transform_indices = @transform_12, window_bounds = array<i64: 1, 1, 64>}, {pipeline_mode = #tpu.pipeline_mode<synchronous>, transform_indices = @transform_13, window_bounds = array<i64: 1, 32>}, {pipeline_mode = #tpu.pipeline_mode<synchronous>, transform_indices = @transform_14, window_bounds = array<i64: 1, 1>}, {pipeline_mode = #tpu.pipeline_mode<synchronous>, transform_indices = @transform_15, window_bounds = array<i64: 16, 4>}, {pipeline_mode = #tpu.pipeline_mode<synchronous>, transform_indices = @transform_16, window_bounds = array<i64: 1, 4>}, {pipeline_mode = #tpu.pipeline_mode<synchronous>, transform_indices = @transform_17, window_bounds = array<i64: 2, 4>}]} {
    %c0_i32 = arith.constant 0 : i32
    %0 = arith.cmpi eq, %arg0, %c0_i32 : i32
    %1 = arith.extui %0 : i1 to i32
    %c0_i32_0 = arith.constant 0 : i32
    %2 = arith.cmpi ne, %1, %c0_i32_0 : i32
    scf.if %2 {
      %c0_68 = arith.constant 0 : index
      %c0_69 = arith.constant 0 : index
      %388 = vector.load %arg1[%c0_68, %c0_69] : memref<32x1xf32, #tpu.memory_space<vmem>>, vector<32x1xf32>
      %c0_70 = arith.constant 0 : index
      %c0_71 = arith.constant 0 : index
      %389 = vector.load %arg2[%c0_70, %c0_71] : memref<1x32xf32, #tpu.memory_space<vmem>>, vector<1x32xf32>
      %390 = vector.broadcast %388 : vector<32x1xf32> to vector<32x32xf32>
      %391 = vector.broadcast %389 : vector<1x32xf32> to vector<32x32xf32>
      %392 = arith.mulf %390, %391 : vector<32x32xf32>
      %c0_72 = arith.constant 0 : index
      %c0_73 = arith.constant 0 : index
      %393 = vector.load %arg3[%c0_72, %c0_73] : memref<1x32xf32, #tpu.memory_space<vmem>>, vector<1x32xf32>
      %394 = vector.broadcast %393 : vector<1x32xf32> to vector<32x32xf32>
      %395 = arith.addf %392, %394 : vector<32x32xf32>
      %c0_74 = arith.constant 0 : index
      %c0_75 = arith.constant 0 : index
      %396 = vector.load %arg19[%c0_74, %c0_75] : memref<32x32xf32, #tpu.memory_space<vmem>>, vector<32x32xf32>
      tpu.vector_store %arg19[%c0_74, %c0_75], %395 {strides = array<i32>} : memref<32x32xf32, #tpu.memory_space<vmem>>, vector<32x32xf32>,
    } else {
    }
    %c0 = arith.constant 0 : index
    %c0_1 = arith.constant 0 : index
    %c0_2 = arith.constant 0 : index
    %3 = vector.load %arg4[%c0, %c0_1, %c0_2] : memref<1x8x32xf32, #tpu.memory_space<vmem>>, vector<1x8x32xf32>
    %4 = vector.shape_cast %3 : vector<1x8x32xf32> to vector<8x32xf32>
    %cst = arith.constant -9.99999974E-5 : f32
    %5 = vector.broadcast %cst : f32 to vector<8x32xf32>
    %6 = arith.minimumf %4, %5 : vector<8x32xf32>
    %c0_3 = arith.constant 0 : index
    %c0_4 = arith.constant 0 : index
    %c0_5 = arith.constant 0 : index
    %7 = vector.load %arg5[%c0_3, %c0_4, %c0_5] : memref<1x8x32xf32, #tpu.memory_space<vmem>>, vector<1x8x32xf32>
    %8 = vector.shape_cast %7 : vector<1x8x32xf32> to vector<8x32xf32>
    %c0_6 = arith.constant 0 : index
    %c0_7 = arith.constant 0 : index
    %c0_8 = arith.constant 0 : index
    %9 = vector.load %arg8[%c0_6, %c0_7, %c0_8] : memref<1x1x32xf32, #tpu.memory_space<vmem>>, vector<1x1x32xf32>
    %10 = vector.shape_cast %9 : vector<1x1x32xf32> to vector<1x32xf32>
    %11 = vector.broadcast %10 : vector<1x32xf32> to vector<8x32xf32>
    %12 = arith.mulf %11, %6 : vector<8x32xf32>
    %13 = vector.broadcast %10 : vector<1x32xf32> to vector<8x32xf32>
    %14 = arith.mulf %13, %8 : vector<8x32xf32>
    %15 = math.exp %12 : vector<8x32xf32>
    %16 = math.cos %14 : vector<8x32xf32>
    %17 = arith.mulf %15, %16 : vector<8x32xf32>
    %cst_9 = arith.constant 1.000000e+00 : f32
    %18 = vector.broadcast %cst_9 : f32 to vector<8x32xf32>
    %19 = arith.subf %17, %18 : vector<8x32xf32>
    %20 = math.sin %14 : vector<8x32xf32>
    %21 = arith.mulf %15, %20 : vector<8x32xf32>
    %22 = arith.mulf %6, %6 : vector<8x32xf32>
    %23 = arith.mulf %8, %8 : vector<8x32xf32>
    %24 = arith.addf %22, %23 : vector<8x32xf32>
    %25 = arith.mulf %19, %6 : vector<8x32xf32>
    %26 = arith.mulf %21, %8 : vector<8x32xf32>
    %27 = arith.addf %25, %26 : vector<8x32xf32>
    %28 = arith.divf %27, %24 : vector<8x32xf32>
    %29 = arith.mulf %21, %6 : vector<8x32xf32>
    %30 = arith.mulf %19, %8 : vector<8x32xf32>
    %31 = arith.subf %29, %30 : vector<8x32xf32>
    %32 = arith.divf %31, %24 : vector<8x32xf32>
    %c0_10 = arith.constant 0 : index
    %c0_11 = arith.constant 0 : index
    %c0_12 = arith.constant 0 : index
    %33 = vector.load %arg6[%c0_10, %c0_11, %c0_12] : memref<1x8x32xf32, #tpu.memory_space<vmem>>, vector<1x8x32xf32>
    %34 = vector.shape_cast %33 : vector<1x8x32xf32> to vector<8x32xf32>
    %35 = arith.mulf %34, %28 : vector<8x32xf32>
    %c0_13 = arith.constant 0 : index
    %c0_14 = arith.constant 0 : index
    %c0_15 = arith.constant 0 : index
    %36 = vector.load %arg7[%c0_13, %c0_14, %c0_15] : memref<1x8x32xf32, #tpu.memory_space<vmem>>, vector<1x8x32xf32>
    %37 = vector.shape_cast %36 : vector<1x8x32xf32> to vector<8x32xf32>
    %38 = arith.mulf %37, %32 : vector<8x32xf32>
    %39 = arith.subf %35, %38 : vector<8x32xf32>
    %c0_16 = arith.constant 0 : index
    %c0_17 = arith.constant 0 : index
    %c0_18 = arith.constant 0 : index
    %40 = vector.load %arg6[%c0_16, %c0_17, %c0_18] : memref<1x8x32xf32, #tpu.memory_space<vmem>>, vector<1x8x32xf32>
    %41 = vector.shape_cast %40 : vector<1x8x32xf32> to vector<8x32xf32>
    %42 = arith.mulf %41, %32 : vector<8x32xf32>
    %c0_19 = arith.constant 0 : index
    %c0_20 = arith.constant 0 : index
    %c0_21 = arith.constant 0 : index
    %43 = vector.load %arg7[%c0_19, %c0_20, %c0_21] : memref<1x8x32xf32, #tpu.memory_space<vmem>>, vector<1x8x32xf32>
    %44 = vector.shape_cast %43 : vector<1x8x32xf32> to vector<8x32xf32>
    %45 = arith.mulf %44, %28 : vector<8x32xf32>
    %46 = arith.addf %42, %45 : vector<8x32xf32>
    %47 = tpu.iota {dimensions = array<i32: 0>} : vector<16x32xi32>
    %48 = arith.sitofp %47 : vector<16x32xi32> to vector<16x32xf32>
    %cst_22 = arith.constant 0.000000e+00 : f32
    %49 = vector.broadcast %cst_22 : f32 to vector<16x32xf32>
    %50 = vector.extract_strided_slice %12 {offsets = [0, 0], sizes = [1, 32], strides = [1, 1]} : vector<8x32xf32> to vector<1x32xf32>
    %51 = vector.broadcast %50 : vector<1x32xf32> to vector<16x32xf32>
    %52 = arith.mulf %48, %51 : vector<16x32xf32>
    %53 = math.exp %52 : vector<16x32xf32>
    %54 = vector.extract_strided_slice %14 {offsets = [0, 0], sizes = [1, 32], strides = [1, 1]} : vector<8x32xf32> to vector<1x32xf32>
    %55 = vector.broadcast %54 : vector<1x32xf32> to vector<16x32xf32>
    %56 = arith.mulf %48, %55 : vector<16x32xf32>
    %57 = vector.extract_strided_slice %39 {offsets = [0, 0], sizes = [1, 32], strides = [1, 1]} : vector<8x32xf32> to vector<1x32xf32>
    %58 = math.cos %56 : vector<16x32xf32>
    %59 = vector.broadcast %57 : vector<1x32xf32> to vector<16x32xf32>
    %60 = arith.mulf %59, %58 : vector<16x32xf32>
    %61 = vector.extract_strided_slice %46 {offsets = [0, 0], sizes = [1, 32], strides = [1, 1]} : vector<8x32xf32> to vector<1x32xf32>
    %62 = math.sin %56 : vector<16x32xf32>
    %63 = vector.broadcast %61 : vector<1x32xf32> to vector<16x32xf32>
    %64 = arith.mulf %63, %62 : vector<16x32xf32>
    %65 = arith.subf %60, %64 : vector<16x32xf32>
    %66 = arith.mulf %53, %65 : vector<16x32xf32>
    %67 = arith.addf %49, %66 : vector<16x32xf32>
    %68 = vector.extract_strided_slice %12 {offsets = [1, 0], sizes = [1, 32], strides = [1, 1]} : vector<8x32xf32> to vector<1x32xf32>
    %69 = vector.broadcast %68 : vector<1x32xf32> to vector<16x32xf32>
    %70 = arith.mulf %48, %69 : vector<16x32xf32>
    %71 = math.exp %70 : vector<16x32xf32>
    %72 = vector.extract_strided_slice %14 {offsets = [1, 0], sizes = [1, 32], strides = [1, 1]} : vector<8x32xf32> to vector<1x32xf32>
    %73 = vector.broadcast %72 : vector<1x32xf32> to vector<16x32xf32>
    %74 = arith.mulf %48, %73 : vector<16x32xf32>
    %75 = vector.extract_strided_slice %39 {offsets = [1, 0], sizes = [1, 32], strides = [1, 1]} : vector<8x32xf32> to vector<1x32xf32>
    %76 = math.cos %74 : vector<16x32xf32>
    %77 = vector.broadcast %75 : vector<1x32xf32> to vector<16x32xf32>
    %78 = arith.mulf %77, %76 : vector<16x32xf32>
    %79 = vector.extract_strided_slice %46 {offsets = [1, 0], sizes = [1, 32], strides = [1, 1]} : vector<8x32xf32> to vector<1x32xf32>
    %80 = math.sin %74 : vector<16x32xf32>
    %81 = vector.broadcast %79 : vector<1x32xf32> to vector<16x32xf32>
    %82 = arith.mulf %81, %80 : vector<16x32xf32>
    %83 = arith.subf %78, %82 : vector<16x32xf32>
    %84 = arith.mulf %71, %83 : vector<16x32xf32>
    %85 = arith.addf %67, %84 : vector<16x32xf32>
    %86 = vector.extract_strided_slice %12 {offsets = [2, 0], sizes = [1, 32], strides = [1, 1]} : vector<8x32xf32> to vector<1x32xf32>
    %87 = vector.broadcast %86 : vector<1x32xf32> to vector<16x32xf32>
    %88 = arith.mulf %48, %87 : vector<16x32xf32>
    %89 = math.exp %88 : vector<16x32xf32>
    %90 = vector.extract_strided_slice %14 {offsets = [2, 0], sizes = [1, 32], strides = [1, 1]} : vector<8x32xf32> to vector<1x32xf32>
    %91 = vector.broadcast %90 : vector<1x32xf32> to vector<16x32xf32>
    %92 = arith.mulf %48, %91 : vector<16x32xf32>
    %93 = vector.extract_strided_slice %39 {offsets = [2, 0], sizes = [1, 32], strides = [1, 1]} : vector<8x32xf32> to vector<1x32xf32>
    %94 = math.cos %92 : vector<16x32xf32>
    %95 = vector.broadcast %93 : vector<1x32xf32> to vector<16x32xf32>
    %96 = arith.mulf %95, %94 : vector<16x32xf32>
    %97 = vector.extract_strided_slice %46 {offsets = [2, 0], sizes = [1, 32], strides = [1, 1]} : vector<8x32xf32> to vector<1x32xf32>
    %98 = math.sin %92 : vector<16x32xf32>
    %99 = vector.broadcast %97 : vector<1x32xf32> to vector<16x32xf32>
    %100 = arith.mulf %99, %98 : vector<16x32xf32>
    %101 = arith.subf %96, %100 : vector<16x32xf32>
    %102 = arith.mulf %89, %101 : vector<16x32xf32>
    %103 = arith.addf %85, %102 : vector<16x32xf32>
    %104 = vector.extract_strided_slice %12 {offsets = [3, 0], sizes = [1, 32], strides = [1, 1]} : vector<8x32xf32> to vector<1x32xf32>
    %105 = vector.broadcast %104 : vector<1x32xf32> to vector<16x32xf32>
    %106 = arith.mulf %48, %105 : vector<16x32xf32>
    %107 = math.exp %106 : vector<16x32xf32>
    %108 = vector.extract_strided_slice %14 {offsets = [3, 0], sizes = [1, 32], strides = [1, 1]} : vector<8x32xf32> to vector<1x32xf32>
    %109 = vector.broadcast %108 : vector<1x32xf32> to vector<16x32xf32>
    %110 = arith.mulf %48, %109 : vector<16x32xf32>
    %111 = vector.extract_strided_slice %39 {offsets = [3, 0], sizes = [1, 32], strides = [1, 1]} : vector<8x32xf32> to vector<1x32xf32>
    %112 = math.cos %110 : vector<16x32xf32>
    %113 = vector.broadcast %111 : vector<1x32xf32> to vector<16x32xf32>
    %114 = arith.mulf %113, %112 : vector<16x32xf32>
    %115 = vector.extract_strided_slice %46 {offsets = [3, 0], sizes = [1, 32], strides = [1, 1]} : vector<8x32xf32> to vector<1x32xf32>
    %116 = math.sin %110 : vector<16x32xf32>
    %117 = vector.broadcast %115 : vector<1x32xf32> to vector<16x32xf32>
    %118 = arith.mulf %117, %116 : vector<16x32xf32>
    %119 = arith.subf %114, %118 : vector<16x32xf32>
    %120 = arith.mulf %107, %119 : vector<16x32xf32>
    %121 = arith.addf %103, %120 : vector<16x32xf32>
    %122 = vector.extract_strided_slice %12 {offsets = [4, 0], sizes = [1, 32], strides = [1, 1]} : vector<8x32xf32> to vector<1x32xf32>
    %123 = vector.broadcast %122 : vector<1x32xf32> to vector<16x32xf32>
    %124 = arith.mulf %48, %123 : vector<16x32xf32>
    %125 = math.exp %124 : vector<16x32xf32>
    %126 = vector.extract_strided_slice %14 {offsets = [4, 0], sizes = [1, 32], strides = [1, 1]} : vector<8x32xf32> to vector<1x32xf32>
    %127 = vector.broadcast %126 : vector<1x32xf32> to vector<16x32xf32>
    %128 = arith.mulf %48, %127 : vector<16x32xf32>
    %129 = vector.extract_strided_slice %39 {offsets = [4, 0], sizes = [1, 32], strides = [1, 1]} : vector<8x32xf32> to vector<1x32xf32>
    %130 = math.cos %128 : vector<16x32xf32>
    %131 = vector.broadcast %129 : vector<1x32xf32> to vector<16x32xf32>
    %132 = arith.mulf %131, %130 : vector<16x32xf32>
    %133 = vector.extract_strided_slice %46 {offsets = [4, 0], sizes = [1, 32], strides = [1, 1]} : vector<8x32xf32> to vector<1x32xf32>
    %134 = math.sin %128 : vector<16x32xf32>
    %135 = vector.broadcast %133 : vector<1x32xf32> to vector<16x32xf32>
    %136 = arith.mulf %135, %134 : vector<16x32xf32>
    %137 = arith.subf %132, %136 : vector<16x32xf32>
    %138 = arith.mulf %125, %137 : vector<16x32xf32>
    %139 = arith.addf %121, %138 : vector<16x32xf32>
    %140 = vector.extract_strided_slice %12 {offsets = [5, 0], sizes = [1, 32], strides = [1, 1]} : vector<8x32xf32> to vector<1x32xf32>
    %141 = vector.broadcast %140 : vector<1x32xf32> to vector<16x32xf32>
    %142 = arith.mulf %48, %141 : vector<16x32xf32>
    %143 = math.exp %142 : vector<16x32xf32>
    %144 = vector.extract_strided_slice %14 {offsets = [5, 0], sizes = [1, 32], strides = [1, 1]} : vector<8x32xf32> to vector<1x32xf32>
    %145 = vector.broadcast %144 : vector<1x32xf32> to vector<16x32xf32>
    %146 = arith.mulf %48, %145 : vector<16x32xf32>
    %147 = vector.extract_strided_slice %39 {offsets = [5, 0], sizes = [1, 32], strides = [1, 1]} : vector<8x32xf32> to vector<1x32xf32>
    %148 = math.cos %146 : vector<16x32xf32>
    %149 = vector.broadcast %147 : vector<1x32xf32> to vector<16x32xf32>
    %150 = arith.mulf %149, %148 : vector<16x32xf32>
    %151 = vector.extract_strided_slice %46 {offsets = [5, 0], sizes = [1, 32], strides = [1, 1]} : vector<8x32xf32> to vector<1x32xf32>
    %152 = math.sin %146 : vector<16x32xf32>
    %153 = vector.broadcast %151 : vector<1x32xf32> to vector<16x32xf32>
    %154 = arith.mulf %153, %152 : vector<16x32xf32>
    %155 = arith.subf %150, %154 : vector<16x32xf32>
    %156 = arith.mulf %143, %155 : vector<16x32xf32>
    %157 = arith.addf %139, %156 : vector<16x32xf32>
    %158 = vector.extract_strided_slice %12 {offsets = [6, 0], sizes = [1, 32], strides = [1, 1]} : vector<8x32xf32> to vector<1x32xf32>
    %159 = vector.broadcast %158 : vector<1x32xf32> to vector<16x32xf32>
    %160 = arith.mulf %48, %159 : vector<16x32xf32>
    %161 = math.exp %160 : vector<16x32xf32>
    %162 = vector.extract_strided_slice %14 {offsets = [6, 0], sizes = [1, 32], strides = [1, 1]} : vector<8x32xf32> to vector<1x32xf32>
    %163 = vector.broadcast %162 : vector<1x32xf32> to vector<16x32xf32>
    %164 = arith.mulf %48, %163 : vector<16x32xf32>
    %165 = vector.extract_strided_slice %39 {offsets = [6, 0], sizes = [1, 32], strides = [1, 1]} : vector<8x32xf32> to vector<1x32xf32>
    %166 = math.cos %164 : vector<16x32xf32>
    %167 = vector.broadcast %165 : vector<1x32xf32> to vector<16x32xf32>
    %168 = arith.mulf %167, %166 : vector<16x32xf32>
    %169 = vector.extract_strided_slice %46 {offsets = [6, 0], sizes = [1, 32], strides = [1, 1]} : vector<8x32xf32> to vector<1x32xf32>
    %170 = math.sin %164 : vector<16x32xf32>
    %171 = vector.broadcast %169 : vector<1x32xf32> to vector<16x32xf32>
    %172 = arith.mulf %171, %170 : vector<16x32xf32>
    %173 = arith.subf %168, %172 : vector<16x32xf32>
    %174 = arith.mulf %161, %173 : vector<16x32xf32>
    %175 = arith.addf %157, %174 : vector<16x32xf32>
    %176 = vector.extract_strided_slice %12 {offsets = [7, 0], sizes = [1, 32], strides = [1, 1]} : vector<8x32xf32> to vector<1x32xf32>
    %177 = vector.broadcast %176 : vector<1x32xf32> to vector<16x32xf32>
    %178 = arith.mulf %48, %177 : vector<16x32xf32>
    %179 = math.exp %178 : vector<16x32xf32>
    %180 = vector.extract_strided_slice %14 {offsets = [7, 0], sizes = [1, 32], strides = [1, 1]} : vector<8x32xf32> to vector<1x32xf32>
    %181 = vector.broadcast %180 : vector<1x32xf32> to vector<16x32xf32>
    %182 = arith.mulf %48, %181 : vector<16x32xf32>
    %183 = vector.extract_strided_slice %39 {offsets = [7, 0], sizes = [1, 32], strides = [1, 1]} : vector<8x32xf32> to vector<1x32xf32>
    %184 = math.cos %182 : vector<16x32xf32>
    %185 = vector.broadcast %183 : vector<1x32xf32> to vector<16x32xf32>
    %186 = arith.mulf %185, %184 : vector<16x32xf32>
    %187 = vector.extract_strided_slice %46 {offsets = [7, 0], sizes = [1, 32], strides = [1, 1]} : vector<8x32xf32> to vector<1x32xf32>
    %188 = math.sin %182 : vector<16x32xf32>
    %189 = vector.broadcast %187 : vector<1x32xf32> to vector<16x32xf32>
    %190 = arith.mulf %189, %188 : vector<16x32xf32>
    %191 = arith.subf %186, %190 : vector<16x32xf32>
    %192 = arith.mulf %179, %191 : vector<16x32xf32>
    %193 = arith.addf %175, %192 : vector<16x32xf32>
    %c0_23 = arith.constant 0 : index
    %c0_24 = arith.constant 0 : index
    %194 = vector.load %arg19[%c0_23, %c0_24] : memref<32x32xf32, #tpu.memory_space<vmem>>, vector<32x32xf32>
    %cst_25 = arith.constant dense<0.000000e+00> : vector<32xf32>
    %195 = vector.multi_reduction <add>, %194, %cst_25 [1] : vector<32x32xf32> to vector<32xf32>
    %196 = vector.shape_cast %195 : vector<32xf32> to vector<32x1xf32>
    %cst_26 = arith.constant 3.200000e+01 : f32
    %197 = vector.broadcast %cst_26 : f32 to vector<32x1xf32>
    %198 = arith.divf %196, %197 : vector<32x1xf32>
    %199 = vector.broadcast %198 : vector<32x1xf32> to vector<32x32xf32>
    %200 = arith.subf %194, %199 : vector<32x32xf32>
    %201 = arith.mulf %200, %200 : vector<32x32xf32>
    %cst_27 = arith.constant dense<0.000000e+00> : vector<32xf32>
    %202 = vector.multi_reduction <add>, %201, %cst_27 [1] : vector<32x32xf32> to vector<32xf32>
    %203 = vector.shape_cast %202 : vector<32xf32> to vector<32x1xf32>
    %cst_28 = arith.constant 3.200000e+01 : f32
    %204 = vector.broadcast %cst_28 : f32 to vector<32x1xf32>
    %205 = arith.divf %203, %204 : vector<32x1xf32>
    %206 = vector.broadcast %198 : vector<32x1xf32> to vector<32x32xf32>
    %207 = arith.subf %194, %206 : vector<32x32xf32>
    %cst_29 = arith.constant 9.99999974E-6 : f32
    %208 = vector.broadcast %cst_29 : f32 to vector<32x1xf32>
    %209 = arith.addf %205, %208 : vector<32x1xf32>
    %210 = math.rsqrt %209 : vector<32x1xf32>
    %211 = vector.broadcast %210 : vector<32x1xf32> to vector<32x32xf32>
    %212 = arith.mulf %207, %211 : vector<32x32xf32>
    %c0_30 = arith.constant 0 : index
    %c0_31 = arith.constant 0 : index
    %c0_32 = arith.constant 0 : index
    %213 = vector.load %arg9[%c0_30, %c0_31, %c0_32] : memref<1x1x32xf32, #tpu.memory_space<vmem>>, vector<1x1x32xf32>
    %214 = vector.shape_cast %213 : vector<1x1x32xf32> to vector<1x32xf32>
    %215 = vector.broadcast %214 : vector<1x32xf32> to vector<32x32xf32>
    %216 = arith.mulf %212, %215 : vector<32x32xf32>
    %c0_33 = arith.constant 0 : index
    %c0_34 = arith.constant 0 : index
    %c0_35 = arith.constant 0 : index
    %217 = vector.load %arg10[%c0_33, %c0_34, %c0_35] : memref<1x1x32xf32, #tpu.memory_space<vmem>>, vector<1x1x32xf32>
    %218 = vector.shape_cast %217 : vector<1x1x32xf32> to vector<1x32xf32>
    %219 = vector.broadcast %218 : vector<1x32xf32> to vector<32x32xf32>
    %220 = arith.addf %216, %219 : vector<32x32xf32>
    %221 = vector.shape_cast %220 : vector<32x32xf32> to vector<2x16x32xf32>
    %cst_36 = arith.constant 0.000000e+00 : f32
    %222 = vector.broadcast %cst_36 : f32 to vector<2x16x32xf32>
    %223 = tpu.concatenate %222, %221 in 1 : vector<2x16x32xf32>, vector<2x16x32xf32> -> vector<2x32x32xf32>
    %c0_37 = arith.constant 0 : index
    %c0_38 = arith.constant 0 : index
    %c0_39 = arith.constant 0 : index
    %224 = vector.load %arg11[%c0_37, %c0_38, %c0_39] : memref<1x1x32xf32, #tpu.memory_space<vmem>>, vector<1x1x32xf32>
    %225 = vector.shape_cast %224 : vector<1x1x32xf32> to vector<1x32xf32>
    %226 = vector.shape_cast %225 : vector<1x32xf32> to vector<1x1x32xf32>
    %227 = vector.broadcast %226 : vector<1x1x32xf32> to vector<2x16x32xf32>
    %228 = arith.mulf %227, %221 : vector<2x16x32xf32>
    %229 = vector.extract_strided_slice %223 {offsets = [0, 16, 0], sizes = [2, 16, 32], strides = [1, 1, 1]} : vector<2x32x32xf32> to vector<2x16x32xf32>
    %230 = vector.extract_strided_slice %193 {offsets = [0, 0], sizes = [1, 32], strides = [1, 1]} : vector<16x32xf32> to vector<1x32xf32>
    %231 = vector.shape_cast %230 : vector<1x32xf32> to vector<1x1x32xf32>
    %232 = vector.broadcast %231 : vector<1x1x32xf32> to vector<2x16x32xf32>
    %233 = arith.mulf %229, %232 : vector<2x16x32xf32>
    %234 = arith.addf %228, %233 : vector<2x16x32xf32>
    %235 = vector.extract_strided_slice %223 {offsets = [0, 15, 0], sizes = [2, 16, 32], strides = [1, 1, 1]} : vector<2x32x32xf32> to vector<2x16x32xf32>
    %236 = vector.extract_strided_slice %193 {offsets = [1, 0], sizes = [1, 32], strides = [1, 1]} : vector<16x32xf32> to vector<1x32xf32>
    %237 = vector.shape_cast %236 : vector<1x32xf32> to vector<1x1x32xf32>
    %238 = vector.broadcast %237 : vector<1x1x32xf32> to vector<2x16x32xf32>
    %239 = arith.mulf %235, %238 : vector<2x16x32xf32>
    %240 = arith.addf %234, %239 : vector<2x16x32xf32>
    %241 = vector.extract_strided_slice %223 {offsets = [0, 14, 0], sizes = [2, 16, 32], strides = [1, 1, 1]} : vector<2x32x32xf32> to vector<2x16x32xf32>
    %242 = vector.extract_strided_slice %193 {offsets = [2, 0], sizes = [1, 32], strides = [1, 1]} : vector<16x32xf32> to vector<1x32xf32>
    %243 = vector.shape_cast %242 : vector<1x32xf32> to vector<1x1x32xf32>
    %244 = vector.broadcast %243 : vector<1x1x32xf32> to vector<2x16x32xf32>
    %245 = arith.mulf %241, %244 : vector<2x16x32xf32>
    %246 = arith.addf %240, %245 : vector<2x16x32xf32>
    %247 = vector.extract_strided_slice %223 {offsets = [0, 13, 0], sizes = [2, 16, 32], strides = [1, 1, 1]} : vector<2x32x32xf32> to vector<2x16x32xf32>
    %248 = vector.extract_strided_slice %193 {offsets = [3, 0], sizes = [1, 32], strides = [1, 1]} : vector<16x32xf32> to vector<1x32xf32>
    %249 = vector.shape_cast %248 : vector<1x32xf32> to vector<1x1x32xf32>
    %250 = vector.broadcast %249 : vector<1x1x32xf32> to vector<2x16x32xf32>
    %251 = arith.mulf %247, %250 : vector<2x16x32xf32>
    %252 = arith.addf %246, %251 : vector<2x16x32xf32>
    %253 = vector.extract_strided_slice %223 {offsets = [0, 12, 0], sizes = [2, 16, 32], strides = [1, 1, 1]} : vector<2x32x32xf32> to vector<2x16x32xf32>
    %254 = vector.extract_strided_slice %193 {offsets = [4, 0], sizes = [1, 32], strides = [1, 1]} : vector<16x32xf32> to vector<1x32xf32>
    %255 = vector.shape_cast %254 : vector<1x32xf32> to vector<1x1x32xf32>
    %256 = vector.broadcast %255 : vector<1x1x32xf32> to vector<2x16x32xf32>
    %257 = arith.mulf %253, %256 : vector<2x16x32xf32>
    %258 = arith.addf %252, %257 : vector<2x16x32xf32>
    %259 = vector.extract_strided_slice %223 {offsets = [0, 11, 0], sizes = [2, 16, 32], strides = [1, 1, 1]} : vector<2x32x32xf32> to vector<2x16x32xf32>
    %260 = vector.extract_strided_slice %193 {offsets = [5, 0], sizes = [1, 32], strides = [1, 1]} : vector<16x32xf32> to vector<1x32xf32>
    %261 = vector.shape_cast %260 : vector<1x32xf32> to vector<1x1x32xf32>
    %262 = vector.broadcast %261 : vector<1x1x32xf32> to vector<2x16x32xf32>
    %263 = arith.mulf %259, %262 : vector<2x16x32xf32>
    %264 = arith.addf %258, %263 : vector<2x16x32xf32>
    %265 = vector.extract_strided_slice %223 {offsets = [0, 10, 0], sizes = [2, 16, 32], strides = [1, 1, 1]} : vector<2x32x32xf32> to vector<2x16x32xf32>
    %266 = vector.extract_strided_slice %193 {offsets = [6, 0], sizes = [1, 32], strides = [1, 1]} : vector<16x32xf32> to vector<1x32xf32>
    %267 = vector.shape_cast %266 : vector<1x32xf32> to vector<1x1x32xf32>
    %268 = vector.broadcast %267 : vector<1x1x32xf32> to vector<2x16x32xf32>
    %269 = arith.mulf %265, %268 : vector<2x16x32xf32>
    %270 = arith.addf %264, %269 : vector<2x16x32xf32>
    %271 = vector.extract_strided_slice %223 {offsets = [0, 9, 0], sizes = [2, 16, 32], strides = [1, 1, 1]} : vector<2x32x32xf32> to vector<2x16x32xf32>
    %272 = vector.extract_strided_slice %193 {offsets = [7, 0], sizes = [1, 32], strides = [1, 1]} : vector<16x32xf32> to vector<1x32xf32>
    %273 = vector.shape_cast %272 : vector<1x32xf32> to vector<1x1x32xf32>
    %274 = vector.broadcast %273 : vector<1x1x32xf32> to vector<2x16x32xf32>
    %275 = arith.mulf %271, %274 : vector<2x16x32xf32>
    %276 = arith.addf %270, %275 : vector<2x16x32xf32>
    %277 = vector.extract_strided_slice %223 {offsets = [0, 8, 0], sizes = [2, 16, 32], strides = [1, 1, 1]} : vector<2x32x32xf32> to vector<2x16x32xf32>
    %278 = vector.extract_strided_slice %193 {offsets = [8, 0], sizes = [1, 32], strides = [1, 1]} : vector<16x32xf32> to vector<1x32xf32>
    %279 = vector.shape_cast %278 : vector<1x32xf32> to vector<1x1x32xf32>
    %280 = vector.broadcast %279 : vector<1x1x32xf32> to vector<2x16x32xf32>
    %281 = arith.mulf %277, %280 : vector<2x16x32xf32>
    %282 = arith.addf %276, %281 : vector<2x16x32xf32>
    %283 = vector.extract_strided_slice %223 {offsets = [0, 7, 0], sizes = [2, 16, 32], strides = [1, 1, 1]} : vector<2x32x32xf32> to vector<2x16x32xf32>
    %284 = vector.extract_strided_slice %193 {offsets = [9, 0], sizes = [1, 32], strides = [1, 1]} : vector<16x32xf32> to vector<1x32xf32>
    %285 = vector.shape_cast %284 : vector<1x32xf32> to vector<1x1x32xf32>
    %286 = vector.broadcast %285 : vector<1x1x32xf32> to vector<2x16x32xf32>
    %287 = arith.mulf %283, %286 : vector<2x16x32xf32>
    %288 = arith.addf %282, %287 : vector<2x16x32xf32>
    %289 = vector.extract_strided_slice %223 {offsets = [0, 6, 0], sizes = [2, 16, 32], strides = [1, 1, 1]} : vector<2x32x32xf32> to vector<2x16x32xf32>
    %290 = vector.extract_strided_slice %193 {offsets = [10, 0], sizes = [1, 32], strides = [1, 1]} : vector<16x32xf32> to vector<1x32xf32>
    %291 = vector.shape_cast %290 : vector<1x32xf32> to vector<1x1x32xf32>
    %292 = vector.broadcast %291 : vector<1x1x32xf32> to vector<2x16x32xf32>
    %293 = arith.mulf %289, %292 : vector<2x16x32xf32>
    %294 = arith.addf %288, %293 : vector<2x16x32xf32>
    %295 = vector.extract_strided_slice %223 {offsets = [0, 5, 0], sizes = [2, 16, 32], strides = [1, 1, 1]} : vector<2x32x32xf32> to vector<2x16x32xf32>
    %296 = vector.extract_strided_slice %193 {offsets = [11, 0], sizes = [1, 32], strides = [1, 1]} : vector<16x32xf32> to vector<1x32xf32>
    %297 = vector.shape_cast %296 : vector<1x32xf32> to vector<1x1x32xf32>
    %298 = vector.broadcast %297 : vector<1x1x32xf32> to vector<2x16x32xf32>
    %299 = arith.mulf %295, %298 : vector<2x16x32xf32>
    %300 = arith.addf %294, %299 : vector<2x16x32xf32>
    %301 = vector.extract_strided_slice %223 {offsets = [0, 4, 0], sizes = [2, 16, 32], strides = [1, 1, 1]} : vector<2x32x32xf32> to vector<2x16x32xf32>
    %302 = vector.extract_strided_slice %193 {offsets = [12, 0], sizes = [1, 32], strides = [1, 1]} : vector<16x32xf32> to vector<1x32xf32>
    %303 = vector.shape_cast %302 : vector<1x32xf32> to vector<1x1x32xf32>
    %304 = vector.broadcast %303 : vector<1x1x32xf32> to vector<2x16x32xf32>
    %305 = arith.mulf %301, %304 : vector<2x16x32xf32>
    %306 = arith.addf %300, %305 : vector<2x16x32xf32>
    %307 = vector.extract_strided_slice %223 {offsets = [0, 3, 0], sizes = [2, 16, 32], strides = [1, 1, 1]} : vector<2x32x32xf32> to vector<2x16x32xf32>
    %308 = vector.extract_strided_slice %193 {offsets = [13, 0], sizes = [1, 32], strides = [1, 1]} : vector<16x32xf32> to vector<1x32xf32>
    %309 = vector.shape_cast %308 : vector<1x32xf32> to vector<1x1x32xf32>
    %310 = vector.broadcast %309 : vector<1x1x32xf32> to vector<2x16x32xf32>
    %311 = arith.mulf %307, %310 : vector<2x16x32xf32>
    %312 = arith.addf %306, %311 : vector<2x16x32xf32>
    %313 = vector.extract_strided_slice %223 {offsets = [0, 2, 0], sizes = [2, 16, 32], strides = [1, 1, 1]} : vector<2x32x32xf32> to vector<2x16x32xf32>
    %314 = vector.extract_strided_slice %193 {offsets = [14, 0], sizes = [1, 32], strides = [1, 1]} : vector<16x32xf32> to vector<1x32xf32>
    %315 = vector.shape_cast %314 : vector<1x32xf32> to vector<1x1x32xf32>
    %316 = vector.broadcast %315 : vector<1x1x32xf32> to vector<2x16x32xf32>
    %317 = arith.mulf %313, %316 : vector<2x16x32xf32>
    %318 = arith.addf %312, %317 : vector<2x16x32xf32>
    %319 = vector.extract_strided_slice %223 {offsets = [0, 1, 0], sizes = [2, 16, 32], strides = [1, 1, 1]} : vector<2x32x32xf32> to vector<2x16x32xf32>
    %320 = vector.extract_strided_slice %193 {offsets = [15, 0], sizes = [1, 32], strides = [1, 1]} : vector<16x32xf32> to vector<1x32xf32>
    %321 = vector.shape_cast %320 : vector<1x32xf32> to vector<1x1x32xf32>
    %322 = vector.broadcast %321 : vector<1x1x32xf32> to vector<2x16x32xf32>
    %323 = arith.mulf %319, %322 : vector<2x16x32xf32>
    %324 = arith.addf %318, %323 : vector<2x16x32xf32>
    %325 = vector.shape_cast %324 : vector<2x16x32xf32> to vector<32x32xf32>
    %cst_40 = arith.constant 5.000000e-01 : f32
    %326 = vector.broadcast %cst_40 : f32 to vector<32x32xf32>
    %327 = arith.mulf %326, %325 : vector<32x32xf32>
    %cst_41 = arith.constant 0.707106769 : f32
    %328 = vector.broadcast %cst_41 : f32 to vector<32x32xf32>
    %329 = arith.mulf %325, %328 : vector<32x32xf32>
    %330 = math.absf %329 : vector<32x32xf32>
    %cst_42 = arith.constant 0.327591091 : f32
    %331 = vector.broadcast %cst_42 : f32 to vector<32x32xf32>
    %332 = arith.mulf %331, %330 : vector<32x32xf32>
    %cst_43 = arith.constant 1.000000e+00 : f32
    %333 = vector.broadcast %cst_43 : f32 to vector<32x32xf32>
    %334 = arith.addf %333, %332 : vector<32x32xf32>
    %cst_44 = arith.constant 1.000000e+00 : f32
    %335 = vector.broadcast %cst_44 : f32 to vector<32x32xf32>
    %336 = arith.divf %335, %334 : vector<32x32xf32>
    %cst_45 = arith.constant 1.06140542 : f32
    %337 = vector.broadcast %cst_45 : f32 to vector<32x32xf32>
    %338 = arith.mulf %336, %337 : vector<32x32xf32>
    %cst_46 = arith.constant -1.45315206 : f32
    %339 = vector.broadcast %cst_46 : f32 to vector<32x32xf32>
    %340 = arith.addf %339, %338 : vector<32x32xf32>
    %341 = arith.mulf %336, %340 : vector<32x32xf32>
    %cst_47 = arith.constant 1.42141378 : f32
    %342 = vector.broadcast %cst_47 : f32 to vector<32x32xf32>
    %343 = arith.addf %342, %341 : vector<32x32xf32>
    %344 = arith.mulf %336, %343 : vector<32x32xf32>
    %cst_48 = arith.constant -0.284496725 : f32
    %345 = vector.broadcast %cst_48 : f32 to vector<32x32xf32>
    %346 = arith.addf %345, %344 : vector<32x32xf32>
    %347 = arith.mulf %336, %346 : vector<32x32xf32>
    %cst_49 = arith.constant 0.254829586 : f32
    %348 = vector.broadcast %cst_49 : f32 to vector<32x32xf32>
    %349 = arith.addf %348, %347 : vector<32x32xf32>
    %350 = arith.mulf %336, %349 : vector<32x32xf32>
    %cst_50 = arith.constant 0.000000e+00 : f32
    %351 = vector.broadcast %cst_50 : f32 to vector<32x32xf32>
    %352 = arith.subf %351, %329 : vector<32x32xf32>
    %353 = arith.mulf %352, %329 : vector<32x32xf32>
    %354 = math.exp %353 : vector<32x32xf32>
    %355 = arith.mulf %350, %354 : vector<32x32xf32>
    %cst_51 = arith.constant 1.000000e+00 : f32
    %356 = vector.broadcast %cst_51 : f32 to vector<32x32xf32>
    %357 = arith.subf %356, %355 : vector<32x32xf32>
    %cst_52 = arith.constant 0.000000e+00 : f32
    %358 = vector.broadcast %cst_52 : f32 to vector<32x32xf32>
    %359 = arith.cmpf oge, %329, %358 : vector<32x32xf32>
    %cst_53 = arith.constant 0.000000e+00 : f32
    %360 = vector.broadcast %cst_53 : f32 to vector<32x32xf32>
    %361 = arith.subf %360, %357 : vector<32x32xf32>
    %362 = arith.select %359, %357, %361 : vector<32x32xi1>, vector<32x32xf32>
    %cst_54 = arith.constant 1.000000e+00 : f32
    %363 = vector.broadcast %cst_54 : f32 to vector<32x32xf32>
    %364 = arith.addf %363, %362 : vector<32x32xf32>
    %365 = arith.mulf %327, %364 : vector<32x32xf32>
    %c0_55 = arith.constant 0 : index
    %c0_56 = arith.constant 0 : index
    %c0_57 = arith.constant 0 : index
    %366 = vector.load %arg12[%c0_55, %c0_56, %c0_57] : memref<1x32x64xf32, #tpu.memory_space<vmem>>, vector<1x32x64xf32>
    %367 = vector.shape_cast %366 : vector<1x32x64xf32> to vector<32x64xf32>
    %cst_58 = arith.constant dense<0.000000e+00> : vector<32x64xf32>
    %368 = tpu.matmul %365, %367, %cst_58 {dimension_numbers = #tpu.dot_dimension_numbers<[1], [0], [0], [1], [0, 0, 1, 1], [], []>} : vector<32x32xf32>, vector<32x64xf32>, vector<32x64xf32> -> vector<32x64xf32>
    %c0_59 = arith.constant 0 : index
    %c0_60 = arith.constant 0 : index
    %c0_61 = arith.constant 0 : index
    %369 = vector.load %arg13[%c0_59, %c0_60, %c0_61] : memref<1x1x64xf32, #tpu.memory_space<vmem>>, vector<1x1x64xf32>
    %370 = vector.shape_cast %369 : vector<1x1x64xf32> to vector<1x64xf32>
    %371 = vector.broadcast %370 : vector<1x64xf32> to vector<32x64xf32>
    %372 = arith.addf %368, %371 : vector<32x64xf32>
    %373 = vector.extract_strided_slice %372 {offsets = [0, 0], sizes = [32, 32], strides = [1, 1]} : vector<32x64xf32> to vector<32x32xf32>
    %374 = vector.extract_strided_slice %372 {offsets = [0, 32], sizes = [32, 32], strides = [1, 1]} : vector<32x64xf32> to vector<32x32xf32>
    %cst_62 = arith.constant 0.000000e+00 : f32
    %375 = vector.broadcast %cst_62 : f32 to vector<32x32xf32>
    %376 = arith.subf %375, %374 : vector<32x32xf32>
    %377 = math.exp %376 : vector<32x32xf32>
    %cst_63 = arith.constant 1.000000e+00 : f32
    %378 = vector.broadcast %cst_63 : f32 to vector<32x32xf32>
    %379 = arith.addf %378, %377 : vector<32x32xf32>
    %cst_64 = arith.constant 1.000000e+00 : f32
    %380 = vector.broadcast %cst_64 : f32 to vector<32x32xf32>
    %381 = arith.divf %380, %379 : vector<32x32xf32>
    %382 = arith.mulf %373, %381 : vector<32x32xf32>
    %383 = arith.addf %194, %382 : vector<32x32xf32>
    %c0_65 = arith.constant 0 : index
    %c0_66 = arith.constant 0 : index
    %384 = vector.load %arg19[%c0_65, %c0_66] : memref<32x32xf32, #tpu.memory_space<vmem>>, vector<32x32xf32>
    tpu.vector_store %arg19[%c0_65, %c0_66], %383 {strides = array<i32>} : memref<32x32xf32, #tpu.memory_space<vmem>>, vector<32x32xf32>,
    %c1_i32 = arith.constant 1 : i32
    %385 = arith.cmpi eq, %arg0, %c1_i32 : i32
    %386 = arith.extui %385 : i1 to i32
    %c0_i32_67 = arith.constant 0 : i32
    %387 = arith.cmpi ne, %386, %c0_i32_67 : i32
    scf.if %387 {
      %388 = vector.shape_cast %383 : vector<32x32xf32> to vector<2x16x32xf32>
      %c0_68 = arith.constant 0 : index
      %c0_69 = arith.constant 0 : index
      %389 = vector.load %arg14[%c0_68, %c0_69] : memref<1x32xf32, #tpu.memory_space<vmem>>, vector<1x32xf32>
      %390 = vector.shape_cast %389 : vector<1x32xf32> to vector<1x1x32xf32>
      %391 = vector.broadcast %390 : vector<1x1x32xf32> to vector<2x16x32xf32>
      %392 = arith.mulf %388, %391 : vector<2x16x32xf32>
      %cst_70 = arith.constant dense<0.000000e+00> : vector<2x16xf32>
      %393 = vector.multi_reduction <add>, %392, %cst_70 [2] : vector<2x16x32xf32> to vector<2x16xf32>
      %c0_71 = arith.constant 0 : index
      %c0_72 = arith.constant 0 : index
      %394 = vector.load %arg15[%c0_71, %c0_72] : memref<1x1xf32, #tpu.memory_space<vmem>>, vector<1x1xf32>
      %395 = vector.broadcast %394 : vector<1x1xf32> to vector<2x16xf32>
      %396 = arith.addf %393, %395 : vector<2x16xf32>
      %c0_73 = arith.constant 0 : index
      %c0_74 = arith.constant 0 : index
      %397 = vector.load %arg16[%c0_73, %c0_74] : memref<16x4xf32, #tpu.memory_space<vmem>>, vector<16x4xf32>
      %cst_75 = arith.constant dense<0.000000e+00> : vector<2x4xf32>
      %398 = tpu.matmul %396, %397, %cst_75 {dimension_numbers = #tpu.dot_dimension_numbers<[1], [0], [0], [1], [0, 0, 1, 1], [], []>} : vector<2x16xf32>, vector<16x4xf32>, vector<2x4xf32> -> vector<2x4xf32>
      %c0_76 = arith.constant 0 : index
      %c0_77 = arith.constant 0 : index
      %399 = vector.load %arg17[%c0_76, %c0_77] : memref<1x4xf32, #tpu.memory_space<vmem>>, vector<1x4xf32>
      %400 = vector.broadcast %399 : vector<1x4xf32> to vector<2x4xf32>
      %401 = arith.addf %398, %400 : vector<2x4xf32>
      %c0_78 = arith.constant 0 : index
      %c0_79 = arith.constant 0 : index
      %402 = vector.load %arg18[%c0_78, %c0_79] : memref<2x4xf32, #tpu.memory_space<vmem>>, vector<2x4xf32>
      tpu.vector_store %arg18[%c0_78, %c0_79], %401 {strides = array<i32>} : memref<2x4xf32, #tpu.memory_space<vmem>>, vector<2x4xf32>,
    } else {
    }
    return
  }
  func.func @transform_0(%arg0: i32) -> (i32, i32) {
    %c0_i32 = arith.constant 0 : i32
    %c0_i32_0 = arith.constant 0 : i32
    %c0_i32_1 = arith.constant 0 : i32
    return %c0_i32, %c0_i32_0 : i32, i32
  }
  func.func @transform_1(%arg0: i32) -> (i32, i32) {
    %c0_i32 = arith.constant 0 : i32
    %c0_i32_0 = arith.constant 0 : i32
    %c0_i32_1 = arith.constant 0 : i32
    return %c0_i32, %c0_i32_0 : i32, i32
  }
  func.func @transform_2(%arg0: i32) -> (i32, i32) {
    %c0_i32 = arith.constant 0 : i32
    %c0_i32_0 = arith.constant 0 : i32
    %c0_i32_1 = arith.constant 0 : i32
    return %c0_i32, %c0_i32_0 : i32, i32
  }
  func.func @transform_3(%arg0: i32) -> (i32, i32, i32) {
    %c0_i32 = arith.constant 0 : i32
    %c0_i32_0 = arith.constant 0 : i32
    %c0_i32_1 = arith.constant 0 : i32
    return %arg0, %c0_i32, %c0_i32_0 : i32, i32, i32
  }
  func.func @transform_4(%arg0: i32) -> (i32, i32, i32) {
    %c0_i32 = arith.constant 0 : i32
    %c0_i32_0 = arith.constant 0 : i32
    %c0_i32_1 = arith.constant 0 : i32
    return %arg0, %c0_i32, %c0_i32_0 : i32, i32, i32
  }
  func.func @transform_5(%arg0: i32) -> (i32, i32, i32) {
    %c0_i32 = arith.constant 0 : i32
    %c0_i32_0 = arith.constant 0 : i32
    %c0_i32_1 = arith.constant 0 : i32
    return %arg0, %c0_i32, %c0_i32_0 : i32, i32, i32
  }
  func.func @transform_6(%arg0: i32) -> (i32, i32, i32) {
    %c0_i32 = arith.constant 0 : i32
    %c0_i32_0 = arith.constant 0 : i32
    %c0_i32_1 = arith.constant 0 : i32
    return %arg0, %c0_i32, %c0_i32_0 : i32, i32, i32
  }
  func.func @transform_7(%arg0: i32) -> (i32, i32, i32) {
    %c0_i32 = arith.constant 0 : i32
    %c0_i32_0 = arith.constant 0 : i32
    %c0_i32_1 = arith.constant 0 : i32
    return %arg0, %c0_i32, %c0_i32_0 : i32, i32, i32
  }
  func.func @transform_8(%arg0: i32) -> (i32, i32, i32) {
    %c0_i32 = arith.constant 0 : i32
    %c0_i32_0 = arith.constant 0 : i32
    %c0_i32_1 = arith.constant 0 : i32
    return %arg0, %c0_i32, %c0_i32_0 : i32, i32, i32
  }
  func.func @transform_9(%arg0: i32) -> (i32, i32, i32) {
    %c0_i32 = arith.constant 0 : i32
    %c0_i32_0 = arith.constant 0 : i32
    %c0_i32_1 = arith.constant 0 : i32
    return %arg0, %c0_i32, %c0_i32_0 : i32, i32, i32
  }
  func.func @transform_10(%arg0: i32) -> (i32, i32, i32) {
    %c0_i32 = arith.constant 0 : i32
    %c0_i32_0 = arith.constant 0 : i32
    %c0_i32_1 = arith.constant 0 : i32
    return %arg0, %c0_i32, %c0_i32_0 : i32, i32, i32
  }
  func.func @transform_11(%arg0: i32) -> (i32, i32, i32) {
    %c0_i32 = arith.constant 0 : i32
    %c0_i32_0 = arith.constant 0 : i32
    %c0_i32_1 = arith.constant 0 : i32
    return %arg0, %c0_i32, %c0_i32_0 : i32, i32, i32
  }
  func.func @transform_12(%arg0: i32) -> (i32, i32, i32) {
    %c0_i32 = arith.constant 0 : i32
    %c0_i32_0 = arith.constant 0 : i32
    %c0_i32_1 = arith.constant 0 : i32
    return %arg0, %c0_i32, %c0_i32_0 : i32, i32, i32
  }
  func.func @transform_13(%arg0: i32) -> (i32, i32) {
    %c0_i32 = arith.constant 0 : i32
    %c0_i32_0 = arith.constant 0 : i32
    %c0_i32_1 = arith.constant 0 : i32
    return %c0_i32, %c0_i32_0 : i32, i32
  }
  func.func @transform_14(%arg0: i32) -> (i32, i32) {
    %c0_i32 = arith.constant 0 : i32
    %c0_i32_0 = arith.constant 0 : i32
    %c0_i32_1 = arith.constant 0 : i32
    return %c0_i32, %c0_i32_0 : i32, i32
  }
  func.func @transform_15(%arg0: i32) -> (i32, i32) {
    %c0_i32 = arith.constant 0 : i32
    %c0_i32_0 = arith.constant 0 : i32
    %c0_i32_1 = arith.constant 0 : i32
    return %c0_i32, %c0_i32_0 : i32, i32
  }
  func.func @transform_16(%arg0: i32) -> (i32, i32) {
    %c0_i32 = arith.constant 0 : i32
    %c0_i32_0 = arith.constant 0 : i32
    %c0_i32_1 = arith.constant 0 : i32
    return %c0_i32, %c0_i32_0 : i32, i32
  }
  func.func @transform_17(%arg0: i32) -> (i32, i32) {
    %c0_i32 = arith.constant 0 : i32
    %c0_i32_0 = arith.constant 0 : i32
    %c0_i32_1 = arith.constant 0 : i32
    return %c0_i32, %c0_i32_0 : i32, i32
  }
}

</mosaic_0001>

<llo_original>
// kernel: s4_backbone_forward.1
$region0: #{s4_backbone_forward.1}
  #allocation0 [shape = 'u32[]', space=smem, size = 0x4, offset = 0x4, fixed_abs, tag = 'smem constant byte address 0x4 - core index']
  #allocation1 [shape = 'u32[144,128]{1,0:T(1,128)}', space=vmem, size = 0x12000, scoped, tag = 'internal scratch']
  #allocation2 [shape = 'f32[32,32]{1,0:T(8,128)}', space=vmem, size = 0x4000, scoped, tag = 'scratch operand']
  #allocation3 [shape = 'f32[1,1]{1,0:T(1,128)S(1)}', space=vmem, size = 0x200, scoped, tag = 'scoped memory for s4_backbone_forward.1']
  %s0 = inlined_call_operand.vmem [shape: f32[32,1], index: 0, kind: input, shape index: {}]
  %s1 = inlined_call_operand.vmem [shape: f32[1,32], index: 1, kind: input, shape index: {}]
  %s2 = inlined_call_operand.hbm [shape: f32[1,32], index: 2, kind: input, shape index: {}]
  %s3 = inlined_call_operand.vmem [shape: f32[2,8,32], index: 3, kind: input, shape index: {}]
  %s4 = inlined_call_operand.vmem [shape: f32[2,8,32], index: 4, kind: input, shape index: {}]
  %s5 = inlined_call_operand.vmem [shape: f32[2,8,32], index: 5, kind: input, shape index: {}]
  %s6 = inlined_call_operand.hbm [shape: f32[2,8,32], index: 6, kind: input, shape index: {}]
  %s7 = inlined_call_operand.vmem [shape: f32[2,1,32], index: 7, kind: input, shape index: {}]
  %s8 = inlined_call_operand.vmem [shape: f32[2,1,32], index: 8, kind: input, shape index: {}]
  %s9 = inlined_call_operand.vmem [shape: f32[2,1,32], index: 9, kind: input, shape index: {}]
  %s10 = inlined_call_operand.hbm [shape: f32[2,1,32], index: 10, kind: input, shape index: {}]
  %s11 = inlined_call_operand.vmem [shape: f32[2,32,64], index: 11, kind: input, shape index: {}]
  %s12 = inlined_call_operand.hbm [shape: f32[2,1,64], index: 12, kind: input, shape index: {}]
  %s13 = inlined_call_operand.hbm [shape: f32[1,32], index: 13, kind: input, shape index: {}]
  %s14 = inlined_call_operand.<no memory space> [shape: f32[1,1], index: 14, kind: input, shape index: {}]
  %s15 = inlined_call_operand.vmem [shape: f32[16,4], index: 15, kind: input, shape index: {}]
  %s16 = inlined_call_operand.hbm [shape: f32[1,4], index: 16, kind: input, shape index: {}]
  %s17 = inlined_call_operand.hbm [shape: f32[2,4], index: 17, kind: output, shape index: {}]
  %s18 = sld [smem:[#allocation0]]
  $region133: #{s4_backbone_forward.1} parent=0
    _
  %s20 = ssub.s32 1, %s18
  %s21 = scalar_select 0, %s20, %s18
  %v22 = vstv %s14
  %23 = vst [vmem:[#allocation3] sm:$0x1] %v22
  $region1: #{s4_backbone_forward.1} parent=0
    #allocation4 [shape = 'u8[512]{0}', space=vmem, size = 0x400, scoped, tag = 'input window, operand 2, single buffered']
    #allocation5 [shape = 's32[2]{0}', space=sflag, size = 0x8, scoped, tag = 'scoped memory for s4_backbone_forward.1']
    #allocation6 [shape = 's32[2]{0}', space=sflag, size = 0x8, scoped, tag = 'scoped memory for s4_backbone_forward.1']
    #allocation7 [shape = 'u8[8192]{0}', space=vmem, size = 0x2000, scoped, tag = 'input window, operand 6']
    #allocation8 [shape = 's32[2]{0}', space=sflag, size = 0x8, scoped, tag = 'scoped memory for s4_backbone_forward.1']
    #allocation9 [shape = 'u8[1024]{0}', space=vmem, size = 0x400, scoped, tag = 'input window, operand 10']
    #allocation10 [shape = 'u8[1024]{0}', space=vmem, size = 0x400, scoped, tag = 'input window, operand 12']
    #allocation11 [shape = 's32[2]{0}', space=sflag, size = 0x8, scoped, tag = 'scoped memory for s4_backbone_forward.1']
    #allocation12 [shape = 'u8[512]{0}', space=vmem, size = 0x400, scoped, tag = 'input window, operand 13, single buffered']
    #allocation13 [shape = 'u8[512]{0}', space=vmem, size = 0x400, scoped, tag = 'input window, operand 16, single buffered']
    #allocation14 [shape = 's32[1]{0}', space=sflag, size = 0x4, scoped, tag = 'scoped memory for s4_backbone_forward.1']
    #allocation15 [shape = 'u8[1024]{0}', space=vmem, size = 0x400, scoped, tag = 'output window, operand 0, single buffered']
    %24 = vsyncpa [#allocation5], 0
    %25 = vsyncpa [#allocation8], 0
    %s26 = scalar_lea.sflag [#allocation8], 1
    %27 = vsyncpa %s26, 0
    %28 = vsyncpa [#allocation11], 0
    %s29 = scalar_lea.sflag [#allocation11], 1
    %30 = vsyncpa %s29, 0
    %31 = vsyncpa [#allocation14], 0
    %32 = vsyncpa [#allocation6], 0
    loop: start=0, step=1, limit=4
    $region2: #{s4_backbone_forward.1} parent=1 // loop_pre_header
      _
    $region3: #{s4_backbone_forward.1} parent=1 // loop_header
      %s34 = sphi 0, %s38
      %p35 = scmp.ge.s32.totalorder %s34, 4
      %s42 = sphi 0, %s42
      %s44 = sphi 0, %s42
      %s45 = sphi 0, %s44
      %s59 = sphi 0, %s45
      %s63 = sphi 0, %s63
      %s65 = sphi 0, %s63
      %s66 = sphi 0, %s65
      %s80 = sphi 0, %s66
      %s84 = sphi 0, %s84
      %s86 = sphi 0, %s84
      %s87 = sphi 0, %s86
      %s101 = sphi 0, %s87
      %s107 = sphi 0, %s109
      %s110 = sphi 0, %s107
      %s111 = sphi 0, %s110
      %s127 = sphi 0, %s111
      %s133 = sphi 0, %s135
      %s136 = sphi 0, %s133
      %s137 = sphi 0, %s136
      %s153 = sphi 0, %s137
      %s159 = sphi 0, %s161
      %s162 = sphi 0, %s159
      %s163 = sphi 0, %s162
      %s179 = sphi 0, %s163
      %s185 = sphi 0, %s187
      %s188 = sphi 0, %s185
      %s189 = sphi 0, %s188
      %s205 = sphi 0, %s189
      %s211 = sphi 0, %s213
      %s214 = sphi 0, %s211
      %s215 = sphi 0, %s214
      %s231 = sphi 0, %s215
      %s237 = sphi 0, %s239
      %s240 = sphi 0, %s237
      %s241 = sphi 0, %s240
      %s257 = sphi 0, %s241
      %s263 = sphi 0, %s265
      %s266 = sphi 0, %s263
      %s267 = sphi 0, %s266
      %s283 = sphi 0, %s267
      %s289 = sphi 0, %s291
      %s292 = sphi 0, %s289
      %s293 = sphi 0, %s292
      %s309 = sphi 0, %s293
      %s315 = sphi 0, %s317
      %s318 = sphi 0, %s315
      %s319 = sphi 0, %s318
      %s335 = sphi 0, %s319
      %s341 = sphi 0, %s343
      %s344 = sphi 0, %s341
      %s345 = sphi 0, %s344
      %s361 = sphi 0, %s345
      %s365 = sphi 0, %s365
      %s367 = sphi 0, %s365
      %s368 = sphi 0, %s367
      %s382 = sphi 0, %s368
      %s386 = sphi 0, %s386
      %s388 = sphi 0, %s386
      %s389 = sphi 0, %s388
      %s403 = sphi 0, %s389
      %s407 = sphi 0, %s407
      %s409 = sphi 0, %s407
      %s410 = sphi 0, %s409
      %s424 = sphi 0, %s410
      %s428 = sphi 0, %s428
      %s430 = sphi 0, %s428
      %s431 = sphi 0, %s430
      %s445 = sphi 0, %s431
      %s449 = sphi 0, %s449
      %s451 = sphi 0, %s449
      %s452 = sphi 0, %s451
      %s466 = sphi 0, %s452
    $region4: #{s4_backbone_forward.1} parent=1 // loop_header_branch
      %37 = sbr.rel (%p35) target = $region8
    $region5: #{s4_backbone_forward.1} parent=1 // loop_body
      %s39 = ssub.s32 %s34, 1
      %s40 = ssub.s32 %s34, 2
      %s41 = sadd.s32 %s34, 1
      %s43 = sadd.s32 %s42, 1
      %p46 = scmp.eq.s32.totalorder %s34, 1
      %p47 = scmp.ne.s32.totalorder %s42, %s44
      %p48 = scmp.eq.s32.totalorder %s34, 0
      %p49 = por %p47, %p48
      %p50 = scmp.ne.s32.totalorder %s42, %s44
      %p51 = scmp.eq.s32.totalorder %s39, 1
      %p52 = por %p50, %p51
      %p53 = scmp.ne.s32.totalorder %s44, %s45
      %p54 = scmp.eq.s32.totalorder %s39, 0
      %p55 = por %p53, %p54
      %p56 = scmp.ne.s32.totalorder %s44, %s45
      %p57 = scmp.eq.s32.totalorder %s40, 1
      %p58 = por %p56, %p57
      %p60 = scmp.ne.s32.totalorder %s45, %s59
      %p61 = scmp.eq.s32.totalorder %s40, 0
      %p62 = por %p60, %p61
      %s64 = sadd.s32 %s63, 1
      %p67 = scmp.eq.s32.totalorder %s34, 1
      %p68 = scmp.ne.s32.totalorder %s63, %s65
      %p69 = scmp.eq.s32.totalorder %s34, 0
      %p70 = por %p68, %p69
      %p71 = scmp.ne.s32.totalorder %s63, %s65
      %p72 = scmp.eq.s32.totalorder %s39, 1
      %p73 = por %p71, %p72
      %p74 = scmp.ne.s32.totalorder %s65, %s66
      %p75 = scmp.eq.s32.totalorder %s39, 0
      %p76 = por %p74, %p75
      %p77 = scmp.ne.s32.totalorder %s65, %s66
      %p78 = scmp.eq.s32.totalorder %s40, 1
      %p79 = por %p77, %p78
      %p81 = scmp.ne.s32.totalorder %s66, %s80
      %p82 = scmp.eq.s32.totalorder %s40, 0
      %p83 = por %p81, %p82
      %s85 = sadd.s32 %s84, 1
      %p88 = scmp.eq.s32.totalorder %s34, 1
      %p89 = scmp.ne.s32.totalorder %s84, %s86
      %p90 = scmp.eq.s32.totalorder %s34, 0
      %p91 = por %p89, %p90
      %p92 = scmp.ne.s32.totalorder %s84, %s86
      %p93 = scmp.eq.s32.totalorder %s39, 1
      %p94 = por %p92, %p93
      %p95 = scmp.ne.s32.totalorder %s86, %s87
      %p96 = scmp.eq.s32.totalorder %s39, 0
      %p97 = por %p95, %p96
      %p98 = scmp.ne.s32.totalorder %s86, %s87
      %p99 = scmp.eq.s32.totalorder %s40, 1
      %p100 = por %p98, %p99
      %p102 = scmp.ne.s32.totalorder %s87, %s101
      %p103 = scmp.eq.s32.totalorder %s40, 0
      %p104 = por %p102, %p103
      %s105 = ssub.s32 %s34, %s41
      %p106 = scmp.eq.s32.totalorder %s105, 0
      %s108 = sadd.s32 %s107, 1
      %s109 = scalar_select %p106, %s107, %s108
      %p112 = pneg %p106
      %p113 = scmp.eq.s32.totalorder %s34, 1
      %p114 = por %p112, %p113
      %p115 = scmp.ne.s32.totalorder %s107, %s110
      %p116 = scmp.eq.s32.totalorder %s34, 0
      %p117 = por %p115, %p116
      %p118 = scmp.ne.s32.totalorder %s107, %s110
      %p119 = scmp.eq.s32.totalorder %s39, 1
      %p120 = por %p118, %p119
      %p121 = scmp.ne.s32.totalorder %s110, %s111
      %p122 = scmp.eq.s32.totalorder %s39, 0
      %p123 = por %p121, %p122
      %p124 = scmp.ne.s32.totalorder %s110, %s111
      %p125 = scmp.eq.s32.totalorder %s40, 1
      %p126 = por %p124, %p125
      %p128 = scmp.ne.s32.totalorder %s111, %s127
      %p129 = scmp.eq.s32.totalorder %s40, 0
      %p130 = por %p128, %p129
      %s131 = ssub.s32 %s34, %s41
      %p132 = scmp.eq.s32.totalorder %s131, 0
      %s134 = sadd.s32 %s133, 1
      %s135 = scalar_select %p132, %s133, %s134
      %p138 = pneg %p132
      %p139 = scmp.eq.s32.totalorder %s34, 1
      %p140 = por %p138, %p139
      %p141 = scmp.ne.s32.totalorder %s133, %s136
      %p142 = scmp.eq.s32.totalorder %s34, 0
      %p143 = por %p141, %p142
      %p144 = scmp.ne.s32.totalorder %s133, %s136
      %p145 = scmp.eq.s32.totalorder %s39, 1
      %p146 = por %p144, %p145
      %p147 = scmp.ne.s32.totalorder %s136, %s137
      %p148 = scmp.eq.s32.totalorder %s39, 0
      %p149 = por %p147, %p148
      %p150 = scmp.ne.s32.totalorder %s136, %s137
      %p151 = scmp.eq.s32.totalorder %s40, 1
      %p152 = por %p150, %p151
      %p154 = scmp.ne.s32.totalorder %s137, %s153
      %p155 = scmp.eq.s32.totalorder %s40, 0
      %p156 = por %p154, %p155
      %s157 = ssub.s32 %s34, %s41
      %p158 = scmp.eq.s32.totalorder %s157, 0
      %s160 = sadd.s32 %s159, 1
      %s161 = scalar_select %p158, %s159, %s160
      %p164 = pneg %p158
      %p165 = scmp.eq.s32.totalorder %s34, 1
      %p166 = por %p164, %p165
      %p167 = scmp.ne.s32.totalorder %s159, %s162
      %p168 = scmp.eq.s32.totalorder %s34, 0
      %p169 = por %p167, %p168
      %p170 = scmp.ne.s32.totalorder %s159, %s162
      %p171 = scmp.eq.s32.totalorder %s39, 1
      %p172 = por %p170, %p171
      %p173 = scmp.ne.s32.totalorder %s162, %s163
      %p174 = scmp.eq.s32.totalorder %s39, 0
      %p175 = por %p173, %p174
      %p176 = scmp.ne.s32.totalorder %s162, %s163
      %p177 = scmp.eq.s32.totalorder %s40, 1
      %p178 = por %p176, %p177
      %p180 = scmp.ne.s32.totalorder %s163, %s179
      %p181 = scmp.eq.s32.totalorder %s40, 0
      %p182 = por %p180, %p181
      %s183 = ssub.s32 %s34, %s41
      %p184 = scmp.eq.s32.totalorder %s183, 0
      %s186 = sadd.s32 %s185, 1
      %s187 = scalar_select %p184, %s185, %s186
      %p190 = pneg %p184
      %p191 = scmp.eq.s32.totalorder %s34, 1
      %p192 = por %p190, %p191
      %p193 = scmp.ne.s32.totalorder %s185, %s188
      %p194 = scmp.eq.s32.totalorder %s34, 0
      %p195 = por %p193, %p194
      %p196 = scmp.ne.s32.totalorder %s185, %s188
      %p197 = scmp.eq.s32.totalorder %s39, 1
      %p198 = por %p196, %p197
      %p199 = scmp.ne.s32.totalorder %s188, %s189
      %p200 = scmp.eq.s32.totalorder %s39, 0
      %p201 = por %p199, %p200
      %p202 = scmp.ne.s32.totalorder %s188, %s189
      %p203 = scmp.eq.s32.totalorder %s40, 1
      %p204 = por %p202, %p203
      %p206 = scmp.ne.s32.totalorder %s189, %s205
      %p207 = scmp.eq.s32.totalorder %s40, 0
      %p208 = por %p206, %p207
      %s209 = ssub.s32 %s34, %s41
      %p210 = scmp.eq.s32.totalorder %s209, 0
      %s212 = sadd.s32 %s211, 1
      %s213 = scalar_select %p210, %s211, %s212
      %p216 = pneg %p210
      %p217 = scmp.eq.s32.totalorder %s34, 1
      %p218 = por %p216, %p217
      %p219 = scmp.ne.s32.totalorder %s211, %s214
      %p220 = scmp.eq.s32.totalorder %s34, 0
      %p221 = por %p219, %p220
      %p222 = scmp.ne.s32.totalorder %s211, %s214
      %p223 = scmp.eq.s32.totalorder %s39, 1
      %p224 = por %p222, %p223
      %p225 = scmp.ne.s32.totalorder %s214, %s215
      %p226 = scmp.eq.s32.totalorder %s39, 0
      %p227 = por %p225, %p226
      %p228 = scmp.ne.s32.totalorder %s214, %s215
      %p229 = scmp.eq.s32.totalorder %s40, 1
      %p230 = por %p228, %p229
      %p232 = scmp.ne.s32.totalorder %s215, %s231
      %p233 = scmp.eq.s32.totalorder %s40, 0
      %p234 = por %p232, %p233
      %s235 = ssub.s32 %s34, %s41
      %p236 = scmp.eq.s32.totalorder %s235, 0
      %s238 = sadd.s32 %s237, 1
      %s239 = scalar_select %p236, %s237, %s238
      %p242 = pneg %p236
      %p243 = scmp.eq.s32.totalorder %s34, 1
      %p244 = por %p242, %p243
      %p245 = scmp.ne.s32.totalorder %s237, %s240
      %p246 = scmp.eq.s32.totalorder %s34, 0
      %p247 = por %p245, %p246
      %p248 = scmp.ne.s32.totalorder %s237, %s240
      %p249 = scmp.eq.s32.totalorder %s39, 1
      %p250 = por %p248, %p249
      %p251 = scmp.ne.s32.totalorder %s240, %s241
      %p252 = scmp.eq.s32.totalorder %s39, 0
      %p253 = por %p251, %p252
      %p254 = scmp.ne.s32.totalorder %s240, %s241
      %p255 = scmp.eq.s32.totalorder %s40, 1
      %p256 = por %p254, %p255
      %p258 = scmp.ne.s32.totalorder %s241, %s257
      %p259 = scmp.eq.s32.totalorder %s40, 0
      %p260 = por %p258, %p259
      %s261 = ssub.s32 %s34, %s41
      %p262 = scmp.eq.s32.totalorder %s261, 0
      %s264 = sadd.s32 %s263, 1
      %s265 = scalar_select %p262, %s263, %s264
      %p268 = pneg %p262
      %p269 = scmp.eq.s32.totalorder %s34, 1
      %p270 = por %p268, %p269
      %p271 = scmp.ne.s32.totalorder %s263, %s266
      %p272 = scmp.eq.s32.totalorder %s34, 0
      %p273 = por %p271, %p272
      %p274 = scmp.ne.s32.totalorder %s263, %s266
      %p275 = scmp.eq.s32.totalorder %s39, 1
      %p276 = por %p274, %p275
      %p277 = scmp.ne.s32.totalorder %s266, %s267
      %p278 = scmp.eq.s32.totalorder %s39, 0
      %p279 = por %p277, %p278
      %p280 = scmp.ne.s32.totalorder %s266, %s267
      %p281 = scmp.eq.s32.totalorder %s40, 1
      %p282 = por %p280, %p281
      %p284 = scmp.ne.s32.totalorder %s267, %s283
      %p285 = scmp.eq.s32.totalorder %s40, 0
      %p286 = por %p284, %p285
      %s287 = ssub.s32 %s34, %s41
      %p288 = scmp.eq.s32.totalorder %s287, 0
      %s290 = sadd.s32 %s289, 1
      %s291 = scalar_select %p288, %s289, %s290
      %p294 = pneg %p288
      %p295 = scmp.eq.s32.totalorder %s34, 1
      %p296 = por %p294, %p295
      %p297 = scmp.ne.s32.totalorder %s289, %s292
      %p298 = scmp.eq.s32.totalorder %s34, 0
      %p299 = por %p297, %p298
      %p300 = scmp.ne.s32.totalorder %s289, %s292
      %p301 = scmp.eq.s32.totalorder %s39, 1
      %p302 = por %p300, %p301
      %p303 = scmp.ne.s32.totalorder %s292, %s293
      %p304 = scmp.eq.s32.totalorder %s39, 0
      %p305 = por %p303, %p304
      %p306 = scmp.ne.s32.totalorder %s292, %s293
      %p307 = scmp.eq.s32.totalorder %s40, 1
      %p308 = por %p306, %p307
      %p310 = scmp.ne.s32.totalorder %s293, %s309
      %p311 = scmp.eq.s32.totalorder %s40, 0
      %p312 = por %p310, %p311
      %s313 = ssub.s32 %s34, %s41
      %p314 = scmp.eq.s32.totalorder %s313, 0
      %s316 = sadd.s32 %s315, 1
      %s317 = scalar_select %p314, %s315, %s316
      %p320 = pneg %p314
      %p321 = scmp.eq.s32.totalorder %s34, 1
      %p322 = por %p320, %p321
      %p323 = scmp.ne.s32.totalorder %s315, %s318
      %p324 = scmp.eq.s32.totalorder %s34, 0
      %p325 = por %p323, %p324
      %p326 = scmp.ne.s32.totalorder %s315, %s318
      %p327 = scmp.eq.s32.totalorder %s39, 1
      %p328 = por %p326, %p327
      %p329 = scmp.ne.s32.totalorder %s318, %s319
      %p330 = scmp.eq.s32.totalorder %s39, 0
      %p331 = por %p329, %p330
      %p332 = scmp.ne.s32.totalorder %s318, %s319
      %p333 = scmp.eq.s32.totalorder %s40, 1
      %p334 = por %p332, %p333
      %p336 = scmp.ne.s32.totalorder %s319, %s335
      %p337 = scmp.eq.s32.totalorder %s40, 0
      %p338 = por %p336, %p337
      %s339 = ssub.s32 %s34, %s41
      %p340 = scmp.eq.s32.totalorder %s339, 0
      %s342 = sadd.s32 %s341, 1
      %s343 = scalar_select %p340, %s341, %s342
      %p346 = pneg %p340
      %p347 = scmp.eq.s32.totalorder %s34, 1
      %p348 = por %p346, %p347
      %p349 = scmp.ne.s32.totalorder %s341, %s344
      %p350 = scmp.eq.s32.totalorder %s34, 0
      %p351 = por %p349, %p350
      %p352 = scmp.ne.s32.totalorder %s341, %s344
      %p353 = scmp.eq.s32.totalorder %s39, 1
      %p354 = por %p352, %p353
      %p355 = scmp.ne.s32.totalorder %s344, %s345
      %p356 = scmp.eq.s32.totalorder %s39, 0
      %p357 = por %p355, %p356
      %p358 = scmp.ne.s32.totalorder %s344, %s345
      %p359 = scmp.eq.s32.totalorder %s40, 1
      %p360 = por %p358, %p359
      %p362 = scmp.ne.s32.totalorder %s345, %s361
      %p363 = scmp.eq.s32.totalorder %s40, 0
      %p364 = por %p362, %p363
      %s366 = sadd.s32 %s365, 1
      %p369 = scmp.eq.s32.totalorder %s34, 1
      %p370 = scmp.ne.s32.totalorder %s365, %s367
      %p371 = scmp.eq.s32.totalorder %s34, 0
      %p372 = por %p370, %p371
      %p373 = scmp.ne.s32.totalorder %s365, %s367
      %p374 = scmp.eq.s32.totalorder %s39, 1
      %p375 = por %p373, %p374
      %p376 = scmp.ne.s32.totalorder %s367, %s368
      %p377 = scmp.eq.s32.totalorder %s39, 0
      %p378 = por %p376, %p377
      %p379 = scmp.ne.s32.totalorder %s367, %s368
      %p380 = scmp.eq.s32.totalorder %s40, 1
      %p381 = por %p379, %p380
      %p383 = scmp.ne.s32.totalorder %s368, %s382
      %p384 = scmp.eq.s32.totalorder %s40, 0
      %p385 = por %p383, %p384
      %s387 = sadd.s32 %s386, 1
      %p390 = scmp.eq.s32.totalorder %s34, 1
      %p391 = scmp.ne.s32.totalorder %s386, %s388
      %p392 = scmp.eq.s32.totalorder %s34, 0
      %p393 = por %p391, %p392
      %p394 = scmp.ne.s32.totalorder %s386, %s388
      %p395 = scmp.eq.s32.totalorder %s39, 1
      %p396 = por %p394, %p395
      %p397 = scmp.ne.s32.totalorder %s388, %s389
      %p398 = scmp.eq.s32.totalorder %s39, 0
      %p399 = por %p397, %p398
      %p400 = scmp.ne.s32.totalorder %s388, %s389
      %p401 = scmp.eq.s32.totalorder %s40, 1
      %p402 = por %p400, %p401
      %p404 = scmp.ne.s32.totalorder %s389, %s403
      %p405 = scmp.eq.s32.totalorder %s40, 0
      %p406 = por %p404, %p405
      %s408 = sadd.s32 %s407, 1
      %p411 = scmp.eq.s32.totalorder %s34, 1
      %p412 = scmp.ne.s32.totalorder %s407, %s409
      %p413 = scmp.eq.s32.totalorder %s34, 0
      %p414 = por %p412, %p413
      %p415 = scmp.ne.s32.totalorder %s407, %s409
      %p416 = scmp.eq.s32.totalorder %s39, 1
      %p417 = por %p415, %p416
      %p418 = scmp.ne.s32.totalorder %s409, %s410
      %p419 = scmp.eq.s32.totalorder %s39, 0
      %p420 = por %p418, %p419
      %p421 = scmp.ne.s32.totalorder %s409, %s410
      %p422 = scmp.eq.s32.totalorder %s40, 1
      %p423 = por %p421, %p422
      %p425 = scmp.ne.s32.totalorder %s410, %s424
      %p426 = scmp.eq.s32.totalorder %s40, 0
      %p427 = por %p425, %p426
      %s429 = sadd.s32 %s428, 1
      %p432 = scmp.eq.s32.totalorder %s34, 1
      %p433 = scmp.ne.s32.totalorder %s428, %s430
      %p434 = scmp.eq.s32.totalorder %s34, 0
      %p435 = por %p433, %p434
      %p436 = scmp.ne.s32.totalorder %s428, %s430
      %p437 = scmp.eq.s32.totalorder %s39, 1
      %p438 = por %p436, %p437
      %p439 = scmp.ne.s32.totalorder %s430, %s431
      %p440 = scmp.eq.s32.totalorder %s39, 0
      %p441 = por %p439, %p440
      %p442 = scmp.ne.s32.totalorder %s430, %s431
      %p443 = scmp.eq.s32.totalorder %s40, 1
      %p444 = por %p442, %p443
      %p446 = scmp.ne.s32.totalorder %s431, %s445
      %p447 = scmp.eq.s32.totalorder %s40, 0
      %p448 = por %p446, %p447
      %s450 = sadd.s32 %s449, 1
      %p453 = scmp.eq.s32.totalorder %s34, 1
      %p454 = scmp.ne.s32.totalorder %s449, %s451
      %p455 = scmp.eq.s32.totalorder %s34, 0
      %p456 = por %p454, %p455
      %p457 = scmp.ne.s32.totalorder %s449, %s451
      %p458 = scmp.eq.s32.totalorder %s39, 1
      %p459 = por %p457, %p458
      %p460 = scmp.ne.s32.totalorder %s451, %s452
      %p461 = scmp.eq.s32.totalorder %s39, 0
      %p462 = por %p460, %p461
      %p463 = scmp.ne.s32.totalorder %s451, %s452
      %p464 = scmp.eq.s32.totalorder %s40, 1
      %p465 = por %p463, %p464
      %p467 = scmp.ne.s32.totalorder %s452, %s466
      %p468 = scmp.eq.s32.totalorder %s40, 0
      %p469 = por %p467, %p468
      %p470 = scmp.le.s32.totalorder 1, %s34
      %p471 = scmp.lt.s32.totalorder %s34, 3
      %p472 = pnand %p470, %p471
      %p473 = pneg %p472
      // Predicated region
      $region9: #{s4_backbone_forward.1} parent=5 // pred_check
        _
      $region10: #{s4_backbone_forward.1} parent=5 // pred_check_branch
        %475 = sbr.rel (%p472) target = $region12
      $region11: #{s4_backbone_forward.1} parent=5 // pred_region
        %s476 = ssub.s32 %s34, 1
        // Predicated region
        $region13: #{s4_backbone_forward.1} parent=11 // pred_check
          %p477 = pneg %p55
        $region14: #{s4_backbone_forward.1} parent=11 // pred_check_branch
          %479 = sbr.rel (%p477) target = $region16
        $region15: #{s4_backbone_forward.1} parent=11 // pred_region
          _
        $region16: #{s4_backbone_forward.1} parent=11 // pred_fallthru
          _
        // Predicated region
        $region17: #{s4_backbone_forward.1} parent=11 // pred_check
          %p480 = pneg %p76
        $region18: #{s4_backbone_forward.1} parent=11 // pred_check_branch
          %482 = sbr.rel (%p480) target = $region20
        $region19: #{s4_backbone_forward.1} parent=11 // pred_region
          _
        $region20: #{s4_backbone_forward.1} parent=11 // pred_fallthru
          _
        // Predicated region
        $region21: #{s4_backbone_forward.1} parent=11 // pred_check
          %p483 = pneg %p97
        $region22: #{s4_backbone_forward.1} parent=11 // pred_check_branch
          %485 = sbr.rel (%p483) target = $region24
        $region23: #{s4_backbone_forward.1} parent=11 // pred_region
          %s487 = ssub.s32 16, 16
          %488 = vsyncadd [#allocation5], %s487
          %s490 = sshll.u32 [#allocation4], 4
          %s491 = int_to_ptr.vmem [resolvable:$true] %s490
          %493 = dma.hbm_to_vmem [thread:$0]  %s2, 16, %s491, [#allocation5]
        $region24: #{s4_backbone_forward.1} parent=11 // pred_fallthru
          _
        // Predicated region
        $region25: #{s4_backbone_forward.1} parent=11 // pred_check
          %p494 = pneg %p378
        $region26: #{s4_backbone_forward.1} parent=11 // pred_check_branch
          %496 = sbr.rel (%p494) target = $region28
        $region27: #{s4_backbone_forward.1} parent=11 // pred_region
          %s498 = ssub.s32 16, 16
          %499 = vsyncadd [#allocation11], %s498
          %s501 = sshll.u32 [#allocation12], 4
          %s502 = int_to_ptr.vmem [resolvable:$true] %s501
          %504 = dma.hbm_to_vmem [thread:$0]  %s13, 16, %s502, [#allocation11]
        $region28: #{s4_backbone_forward.1} parent=11 // pred_fallthru
          _
        // Predicated region
        $region29: #{s4_backbone_forward.1} parent=11 // pred_check
          %p505 = pneg %p399
        $region30: #{s4_backbone_forward.1} parent=11 // pred_check_branch
          %507 = sbr.rel (%p505) target = $region32
        $region31: #{s4_backbone_forward.1} parent=11 // pred_region
          _
        $region32: #{s4_backbone_forward.1} parent=11 // pred_fallthru
          _
        // Predicated region
        $region33: #{s4_backbone_forward.1} parent=11 // pred_check
          %p508 = pneg %p420
        $region34: #{s4_backbone_forward.1} parent=11 // pred_check_branch
          %510 = sbr.rel (%p508) target = $region36
        $region35: #{s4_backbone_forward.1} parent=11 // pred_region
          _
        $region36: #{s4_backbone_forward.1} parent=11 // pred_fallthru
          _
        // Predicated region
        $region37: #{s4_backbone_forward.1} parent=11 // pred_check
          %p511 = pneg %p441
        $region38: #{s4_backbone_forward.1} parent=11 // pred_check_branch
          %513 = sbr.rel (%p511) target = $region40
        $region39: #{s4_backbone_forward.1} parent=11 // pred_region
          %s515 = ssub.s32 16, 16
          %516 = vsyncadd [#allocation14], %s515
          %s518 = sshll.u32 [#allocation13], 4
          %s519 = int_to_ptr.vmem [resolvable:$true] %s518
          %521 = dma.hbm_to_vmem [thread:$0]  %s16, 16, %s519, [#allocation14]
        $region40: #{s4_backbone_forward.1} parent=11 // pred_fallthru
          _
      $region12: #{s4_backbone_forward.1} parent=5 // pred_fallthru
        _
      %p522 = scmp.lt.s32.totalorder %s34, 2
      // Predicated region
      $region41: #{s4_backbone_forward.1} parent=5 // pred_check
        %p523 = pneg %p522
      $region42: #{s4_backbone_forward.1} parent=5 // pred_check_branch
        %525 = sbr.rel (%p523) target = $region44
      $region43: #{s4_backbone_forward.1} parent=5 // pred_region
        // Predicated region
        $region45: #{s4_backbone_forward.1} parent=43 // pred_check
          %p526 = pneg %p117
        $region46: #{s4_backbone_forward.1} parent=43 // pred_check_branch
          %528 = sbr.rel (%p526) target = $region48
        $region47: #{s4_backbone_forward.1} parent=43 // pred_region
          %p529 = scmp.lt.s32.totalorder %s34, 1
          %s530 = scalar_select %p529, %s34, 1
          %s531 = smul.addr %s530, 8
          %s532 = scalar_lea.vmem %s3, %s531
        $region48: #{s4_backbone_forward.1} parent=43 // pred_fallthru
          _
        // Predicated region
        $region49: #{s4_backbone_forward.1} parent=43 // pred_check
          %p533 = pneg %p143
        $region50: #{s4_backbone_forward.1} parent=43 // pred_check_branch
          %535 = sbr.rel (%p533) target = $region52
        $region51: #{s4_backbone_forward.1} parent=43 // pred_region
          %p536 = scmp.lt.s32.totalorder %s34, 1
          %s537 = scalar_select %p536, %s34, 1
          %s538 = smul.addr %s537, 8
          %s539 = scalar_lea.vmem %s4, %s538
        $region52: #{s4_backbone_forward.1} parent=43 // pred_fallthru
          _
        // Predicated region
        $region53: #{s4_backbone_forward.1} parent=43 // pred_check
          %p540 = pneg %p169
        $region54: #{s4_backbone_forward.1} parent=43 // pred_check_branch
          %542 = sbr.rel (%p540) target = $region56
        $region55: #{s4_backbone_forward.1} parent=43 // pred_region
          %p543 = scmp.lt.s32.totalorder %s34, 1
          %s544 = scalar_select %p543, %s34, 1
          %s545 = smul.addr %s544, 8
          %s546 = scalar_lea.vmem %s5, %s545
        $region56: #{s4_backbone_forward.1} parent=43 // pred_fallthru
          _
        // Predicated region
        $region57: #{s4_backbone_forward.1} parent=43 // pred_check
          %p547 = pneg %p195
        $region58: #{s4_backbone_forward.1} parent=43 // pred_check_branch
          %549 = sbr.rel (%p547) target = $region60
        $region59: #{s4_backbone_forward.1} parent=43 // pred_region
          %s550 = sand.u32 %s34, 1
          %s551 = scalar_lea.sflag [#allocation8], %s550
          %s552 = sand.u32 %s185, 1
          %s553 = smul.addr %s552, 8
          %s554 = scalar_lea.vmem [#allocation7], %s553
          %s556 = ssub.s32 128, 128
          %557 = vsyncadd %s551, %s556
          %s558 = smul.addr %s34, 128
          %s559 = scalar_lea.hbm %s6, %s558
          %s561 = sshll.u32 %s554, 4
          %s562 = int_to_ptr.vmem [resolvable:$true] %s561
          %564 = dma.hbm_to_vmem [thread:$0]  %s559, 128, %s562, %s551
        $region60: #{s4_backbone_forward.1} parent=43 // pred_fallthru
          _
        // Predicated region
        $region61: #{s4_backbone_forward.1} parent=43 // pred_check
          %p565 = pneg %p221
        $region62: #{s4_backbone_forward.1} parent=43 // pred_check_branch
          %567 = sbr.rel (%p565) target = $region64
        $region63: #{s4_backbone_forward.1} parent=43 // pred_region
          %p568 = scmp.lt.s32.totalorder %s34, 1
          %s569 = scalar_select %p568, %s34, 1
          %s570 = scalar_lea.vmem %s7, %s569
        $region64: #{s4_backbone_forward.1} parent=43 // pred_fallthru
          _
        // Predicated region
        $region65: #{s4_backbone_forward.1} parent=43 // pred_check
          %p571 = pneg %p247
        $region66: #{s4_backbone_forward.1} parent=43 // pred_check_branch
          %573 = sbr.rel (%p571) target = $region68
        $region67: #{s4_backbone_forward.1} parent=43 // pred_region
          %p574 = scmp.lt.s32.totalorder %s34, 1
          %s575 = scalar_select %p574, %s34, 1
          %s576 = scalar_lea.vmem %s8, %s575
        $region68: #{s4_backbone_forward.1} parent=43 // pred_fallthru
          _
        // Predicated region
        $region69: #{s4_backbone_forward.1} parent=43 // pred_check
          %p577 = pneg %p273
        $region70: #{s4_backbone_forward.1} parent=43 // pred_check_branch
          %579 = sbr.rel (%p577) target = $region72
        $region71: #{s4_backbone_forward.1} parent=43 // pred_region
          %p580 = scmp.lt.s32.totalorder %s34, 1
          %s581 = scalar_select %p580, %s34, 1
          %s582 = scalar_lea.vmem %s9, %s581
        $region72: #{s4_backbone_forward.1} parent=43 // pred_fallthru
          _
        // Predicated region
        $region73: #{s4_backbone_forward.1} parent=43 // pred_check
          %p583 = pneg %p299
        $region74: #{s4_backbone_forward.1} parent=43 // pred_check_branch
          %585 = sbr.rel (%p583) target = $region76
        $region75: #{s4_backbone_forward.1} parent=43 // pred_region
          %s586 = sand.u32 %s34, 1
          %s587 = scalar_lea.sflag [#allocation8], %s586
          %s588 = sand.u32 %s289, 1
          %s589 = scalar_lea.vmem [#allocation9], %s588
          %s591 = ssub.s32 16, 16
          %592 = vsyncadd %s587, %s591
          %s593 = smul.addr %s34, 16
          %s594 = scalar_lea.hbm %s10, %s593
          %s596 = sshll.u32 %s589, 4
          %s597 = int_to_ptr.vmem [resolvable:$true] %s596
          %599 = dma.hbm_to_vmem [thread:$0]  %s594, 16, %s597, %s587
        $region76: #{s4_backbone_forward.1} parent=43 // pred_fallthru
          _
        // Predicated region
        $region77: #{s4_backbone_forward.1} parent=43 // pred_check
          %p600 = pneg %p325
        $region78: #{s4_backbone_forward.1} parent=43 // pred_check_branch
          %602 = sbr.rel (%p600) target = $region80
        $region79: #{s4_backbone_forward.1} parent=43 // pred_region
          %p603 = scmp.lt.s32.totalorder %s34, 1
          %s604 = scalar_select %p603, %s34, 1
          %s605 = smul.addr %s604, 4
          %s606 = smul.addr %s605, 8
          %s607 = scalar_lea.vmem %s11, %s606
        $region80: #{s4_backbone_forward.1} parent=43 // pred_fallthru
          _
        // Predicated region
        $region81: #{s4_backbone_forward.1} parent=43 // pred_check
          %p608 = pneg %p351
        $region82: #{s4_backbone_forward.1} parent=43 // pred_check_branch
          %610 = sbr.rel (%p608) target = $region84
        $region83: #{s4_backbone_forward.1} parent=43 // pred_region
          %s611 = sand.u32 %s34, 1
          %s612 = scalar_lea.sflag [#allocation11], %s611
          %s613 = sand.u32 %s341, 1
          %s614 = scalar_lea.vmem [#allocation10], %s613
          %s616 = ssub.s32 16, 16
          %617 = vsyncadd %s612, %s616
          %s618 = smul.addr %s34, 16
          %s619 = scalar_lea.hbm %s12, %s618
          %s621 = sshll.u32 %s614, 4
          %s622 = int_to_ptr.vmem [resolvable:$true] %s621
          %624 = dma.hbm_to_vmem [thread:$0]  %s619, 16, %s622, %s612
        $region84: #{s4_backbone_forward.1} parent=43 // pred_fallthru
          _
      $region44: #{s4_backbone_forward.1} parent=5 // pred_fallthru
        _
      %p625 = scmp.le.s32.totalorder 1, %s34
      %p626 = scmp.lt.s32.totalorder %s34, 3
      %p627 = pnand %p625, %p626
      %p628 = pneg %p627
      // Predicated region
      $region85: #{s4_backbone_forward.1} parent=5 // pred_check
        _
      $region86: #{s4_backbone_forward.1} parent=5 // pred_check_branch
        %630 = sbr.rel (%p627) target = $region88
      $region87: #{s4_backbone_forward.1} parent=5 // pred_region
        %s631 = ssub.s32 %s34, 1
        // Predicated region
        $region89: #{s4_backbone_forward.1} parent=87 // pred_check
          %p632 = pneg %p97
        $region90: #{s4_backbone_forward.1} parent=87 // pred_check_branch
          %634 = sbr.rel (%p632) target = $region92
        $region91: #{s4_backbone_forward.1} parent=87 // pred_region
          %635 = dma.done [#allocation5], 16
        $region92: #{s4_backbone_forward.1} parent=87 // pred_fallthru
          _
        %s636 = sand.u32 %s39, 1
        %s637 = scalar_lea.sflag [#allocation8], %s636
        %s638 = sand.u32 %s188, 1
        %s639 = smul.addr %s638, 8
        %s640 = scalar_lea.vmem [#allocation7], %s639
        // Predicated region
        $region93: #{s4_backbone_forward.1} parent=87 // pred_check
          %p641 = pneg %p201
        $region94: #{s4_backbone_forward.1} parent=87 // pred_check_branch
          %643 = sbr.rel (%p641) target = $region96
        $region95: #{s4_backbone_forward.1} parent=87 // pred_region
          %644 = dma.done %s637, 128
        $region96: #{s4_backbone_forward.1} parent=87 // pred_fallthru
          _
        %s645 = sand.u32 %s39, 1
        %s646 = scalar_lea.sflag [#allocation8], %s645
        %s647 = sand.u32 %s292, 1
        %s648 = scalar_lea.vmem [#allocation9], %s647
        // Predicated region
        $region97: #{s4_backbone_forward.1} parent=87 // pred_check
          %p649 = pneg %p305
        $region98: #{s4_backbone_forward.1} parent=87 // pred_check_branch
          %651 = sbr.rel (%p649) target = $region100
        $region99: #{s4_backbone_forward.1} parent=87 // pred_region
          %652 = dma.done %s646, 16
        $region100: #{s4_backbone_forward.1} parent=87 // pred_fallthru
          _
        %s653 = sand.u32 %s39, 1
        %s654 = scalar_lea.sflag [#allocation11], %s653
        %s655 = sand.u32 %s344, 1
        %s656 = scalar_lea.vmem [#allocation10], %s655
        // Predicated region
        $region101: #{s4_backbone_forward.1} parent=87 // pred_check
          %p657 = pneg %p357
        $region102: #{s4_backbone_forward.1} parent=87 // pred_check_branch
          %659 = sbr.rel (%p657) target = $region104
        $region103: #{s4_backbone_forward.1} parent=87 // pred_region
          %660 = dma.done %s654, 16
        $region104: #{s4_backbone_forward.1} parent=87 // pred_fallthru
          _
        // Predicated region
        $region105: #{s4_backbone_forward.1} parent=87 // pred_check
          %p661 = pneg %p378
        $region106: #{s4_backbone_forward.1} parent=87 // pred_check_branch
          %663 = sbr.rel (%p661) target = $region108
        $region107: #{s4_backbone_forward.1} parent=87 // pred_region
          %664 = dma.done [#allocation11], 16
        $region108: #{s4_backbone_forward.1} parent=87 // pred_fallthru
          _
        // Predicated region
        $region109: #{s4_backbone_forward.1} parent=87 // pred_check
          %p665 = pneg %p441
        $region110: #{s4_backbone_forward.1} parent=87 // pred_check_branch
          %667 = sbr.rel (%p665) target = $region112
        $region111: #{s4_backbone_forward.1} parent=87 // pred_region
          %668 = dma.done [#allocation14], 16
        $region112: #{s4_backbone_forward.1} parent=87 // pred_fallthru
          _
        %p669 = pneg %p55
        %p670 = pneg %p52
        %p671 = pneg %p76
        %p672 = pneg %p73
        %p673 = pneg %p97
        %p674 = pneg %p94
        %p675 = scmp.lt.s32.totalorder %s39, 1
        %s676 = scalar_select %p675, %s39, 1
        %s677 = smul.addr %s676, 8
        %s678 = scalar_lea.vmem %s3, %s677
        %p679 = pneg %p123
        %p680 = pneg %p120
        %p681 = scmp.lt.s32.totalorder %s39, 1
        %s682 = scalar_select %p681, %s39, 1
        %s683 = smul.addr %s682, 8
        %s684 = scalar_lea.vmem %s4, %s683
        %p685 = pneg %p149
        %p686 = pneg %p146
        %p687 = scmp.lt.s32.totalorder %s39, 1
        %s688 = scalar_select %p687, %s39, 1
        %s689 = smul.addr %s688, 8
        %s690 = scalar_lea.vmem %s5, %s689
        %p691 = pneg %p175
        %p692 = pneg %p172
        %s693 = sand.u32 %s39, 1
        %s694 = scalar_lea.sflag [#allocation8], %s693
        %s695 = sand.u32 %s188, 1
        %s696 = smul.addr %s695, 8
        %s697 = scalar_lea.vmem [#allocation7], %s696
        %p698 = pneg %p201
        %p699 = pneg %p198
        %p700 = scmp.lt.s32.totalorder %s39, 1
        %s701 = scalar_select %p700, %s39, 1
        %s702 = scalar_lea.vmem %s7, %s701
        %p703 = pneg %p227
        %p704 = pneg %p224
        %p705 = scmp.lt.s32.totalorder %s39, 1
        %s706 = scalar_select %p705, %s39, 1
        %s707 = scalar_lea.vmem %s8, %s706
        %p708 = pneg %p253
        %p709 = pneg %p250
        %p710 = scmp.lt.s32.totalorder %s39, 1
        %s711 = scalar_select %p710, %s39, 1
        %s712 = scalar_lea.vmem %s9, %s711
        %p713 = pneg %p279
        %p714 = pneg %p276
        %s715 = sand.u32 %s39, 1
        %s716 = scalar_lea.sflag [#allocation8], %s715
        %s717 = sand.u32 %s292, 1
        %s718 = scalar_lea.vmem [#allocation9], %s717
        %p719 = pneg %p305
        %p720 = pneg %p302
        %p721 = scmp.lt.s32.totalorder %s39, 1
        %s722 = scalar_select %p721, %s39, 1
        %s723 = smul.addr %s722, 4
        %s724 = smul.addr %s723, 8
        %s725 = scalar_lea.vmem %s11, %s724
        %p726 = pneg %p331
        %p727 = pneg %p328
        %s728 = sand.u32 %s39, 1
        %s729 = scalar_lea.sflag [#allocation11], %s728
        %s730 = sand.u32 %s344, 1
        %s731 = scalar_lea.vmem [#allocation10], %s730
        %p732 = pneg %p357
        %p733 = pneg %p354
        %p734 = pneg %p378
        %p735 = pneg %p375
        %p736 = pneg %p399
        %p737 = pneg %p396
        %p738 = pneg %p420
        %p739 = pneg %p417
        %p740 = pneg %p441
        %p741 = pneg %p438
        %p742 = pneg %p462
        %p743 = pneg %p459
        %p744 = scmp.lt.s32.totalorder %s39, 1
        %s745 = scalar_select %p744, %s39, 1
        %s746 = smul.addr %s745, 8
        %s747 = scalar_lea.vmem %s3, %s746
        %p748 = scmp.lt.s32.totalorder %s39, 1
        %s749 = scalar_select %p748, %s39, 1
        %s750 = smul.addr %s749, 8
        %s751 = scalar_lea.vmem %s4, %s750
        %p752 = scmp.lt.s32.totalorder %s39, 1
        %s753 = scalar_select %p752, %s39, 1
        %s754 = smul.addr %s753, 8
        %s755 = scalar_lea.vmem %s5, %s754
        %p756 = scmp.lt.s32.totalorder %s39, 1
        %s757 = scalar_select %p756, %s39, 1
        %s758 = scalar_lea.vmem %s7, %s757
        %p759 = scmp.lt.s32.totalorder %s39, 1
        %s760 = scalar_select %p759, %s39, 1
        %s761 = scalar_lea.vmem %s8, %s760
        %p762 = scmp.lt.s32.totalorder %s39, 1
        %s763 = scalar_select %p762, %s39, 1
        %s764 = scalar_lea.vmem %s9, %s763
        %p765 = scmp.lt.s32.totalorder %s39, 1
        %s766 = scalar_select %p765, %s39, 1
        %s767 = smul.addr %s766, 4
        %s768 = smul.addr %s767, 8
        %s769 = scalar_lea.vmem %s11, %s768
        %p770 = scmp.eq.s32.totalorder %s39, 0
        // Predicated region
        $region113: #{s4_backbone_forward.1} parent=87 // pred_check
          %p771 = pneg %p770
        $region114: #{s4_backbone_forward.1} parent=87 // pred_check_branch
          %773 = sbr.rel (%p771) target = $region116
        $region115: #{s4_backbone_forward.1} parent=87 // pred_region
          %v774 = vld [vmem:[%s0] sm:$0xff]
          %v775 = vld [vmem:[%s0 + $0x8] sm:$0xff]
          %v776 = vld [vmem:[%s0 + $0x10] sm:$0xff]
          %v777 = vld [vmem:[%s0 + $0x18] sm:$0xff]
          %v778 = vld [vmem:[%s1] sm:$0x1]
          %780 = vset.pattern.permute.xlu0 0
          %781 = vperm.xlu0 %780, %v774
          %v782 = vpop.permute.xlu0 %781
          %785 = vset.pattern.permute.xlu0 0
          %786 = vperm.xlu0 %785, %v775
          %v787 = vpop.permute.xlu0 %786
          %790 = vset.pattern.permute.xlu0 0
          %791 = vperm.xlu0 %790, %v776
          %v792 = vpop.permute.xlu0 %791
          %795 = vset.pattern.permute.xlu0 0
          %796 = vperm.xlu0 %795, %v777
          %v797 = vpop.permute.xlu0 %796
          %v800 = vlaneseq
          %v801 = vshrl.u32 %v800, 7
          %v802 = vsub.s32 0, %v801
          %v803 = vrot.slane %v778, %v802
          %v805 = vmul.f32 %v782, %v803
          %v806 = vmul.f32 %v787, %v803
          %v807 = vmul.f32 %v792, %v803
          %v808 = vmul.f32 %v797, %v803
          %v809 = vld [vmem:[#allocation4] sm:$0x1]
          %v811 = vlaneseq
          %v812 = vshrl.u32 %v811, 7
          %v813 = vsub.s32 0, %v812
          %v814 = vrot.slane %v809, %v813
          %v816 = vadd.f32 %v805, %v814
          %v817 = vadd.f32 %v806, %v814
          %v818 = vadd.f32 %v807, %v814
          %v819 = vadd.f32 %v808, %v814
          %vm820 = vcmask 261120
          %821 = vst.msk [vmem:[#allocation2] sm:$0xff] %vm820, %v816
          %822 = vst.msk [vmem:[#allocation2 + $0x8] sm:$0xff] %vm820, %v817
          %823 = vst.msk [vmem:[#allocation2 + $0x10] sm:$0xff] %vm820, %v818
          %824 = vst.msk [vmem:[#allocation2 + $0x18] sm:$0xff] %vm820, %v819
        $region116: #{s4_backbone_forward.1} parent=87 // pred_fallthru
          _
        %v825 = vld [vmem:[%s747] sm:$0xff]
        %v826 = vmin.f32 %v825, -0.0001
        %v827 = vld [vmem:[%s751] sm:$0xff]
        %v828 = vld [vmem:[%s758] sm:$0x1]
        %v830 = vlaneseq
        %v831 = vshrl.u32 %v830, 7
        %v832 = vsub.s32 0, %v831
        %v833 = vrot.slane %v828, %v832
        %v835 = vmul.f32 %v833, %v826
        %v836 = vmul.f32 %v833, %v827
        %v837 = vmul.f32 %v835, 1.442695
        %v838 = vpow.pop %v837
        %v839 = vand.u32 2147483647, %v836
        %vm840 = vcmp.le.f32.partialorder %v839, 0.7853982
        %vm841 = vcmp.lt.s32.totalorder %v836, 0
        %v842 = vand.u32 %v836, 2139095040
        %v843 = vshrl.u32 %v842, 23
        %v844 = vsub.s32 %v843, 127
        %v845 = vand.u32 2147483647, %v836
        %v846 = vand.u32 %v845, 8388607
        %v847 = vor.u32 %v846, 8388608
        %v848 = vsub.s32 0, %v847
        %v849 = vadd.s32 %v844, 1
        %vm850 = vcmp.gt.s32.totalorder %v849, 0
        %v851 = vsel %vm850, %v849, 0
        %v852 = vshrl.u32 %v851, 5
        %v853 = vand.u32 %v851, 31
        %v854 = vsub.s32 32, %v853
        %v855 = vshrl.u32 683565275, %v854
        %v856 = vshll.u32 683565275, %v853
        %v857 = vshrl.u32 2475754826, %v854
        %v858 = vor.u32 %v856, %v857
        %v859 = vshll.u32 2475754826, %v853
        %v860 = vshrl.u32 2131351028, %v854
        %v861 = vor.u32 %v859, %v860
        %v862 = vshll.u32 2131351028, %v853
        %v863 = vshrl.u32 2102212464, %v854
        %v864 = vor.u32 %v862, %v863
        %v865 = vshll.u32 2102212464, %v853
        %v866 = vshrl.u32 920167782, %v854
        %v867 = vor.u32 %v865, %v866
        %v868 = vshll.u32 920167782, %v853
        %v869 = vshrl.u32 1326507024, %v854
        %v870 = vor.u32 %v868, %v869
        %vm871 = vcmp.lt.s32.totalorder %v852, 1
        %vm872 = vcmp.lt.s32.totalorder %v852, 2
        %vm873 = vcmp.lt.s32.totalorder %v852, 3
        %vm874 = vcmp.lt.s32.totalorder %v852, 4
        %v875 = vsel %vm871, %v855, %v858
        %v876 = vsel %vm874, %v864, 2102212464
        %v877 = vsel %vm873, %v861, %v876
        %v878 = vsel %vm872, %v875, %v877
        %v879 = vsel %vm871, %v858, %v861
        %v880 = vsel %vm874, %v867, 920167782
        %v881 = vsel %vm873, %v864, %v880
        %v882 = vsel %vm872, %v879, %v881
        %v883 = vsel %vm871, %v861, %v864
        %v884 = vsel %vm874, %v870, 1326507024
        %v885 = vsel %vm873, %v867, %v884
        %v886 = vsel %vm872, %v883, %v885
        %v887 = vshll.u32 %v847, 8
        %v888 = vmul.u32.u64.compose %v887, %v886
        %v889 = vextract.low.u32 %v888
        %v890 = vextract.high.u32 %v888
        %v891 = vmul.u32.u64.compose %v887, %v882
        %v892 = vextract.low.u32 %v891
        %v893 = vextract.high.u32 %v891
        %v894 = vmul.u32 %v887, %v878
        %v895 = vadd.s32 %v890, %v892
        %vm896 = vc.u32 %v890, %v892
        %v897 = vadd.s32 %v893, 1
        %v898 = vsel %vm896, %v897, %v893
        %v899 = vadd.s32 %v894, %v898
        %v900 = vadd.s32 %v899, 536870912
        %v901 = vshrl.u32 %v900, 30
        %v902 = vshll.u32 %v901, 30
        %v903 = vsub.s32 %v899, %v902
        %vm904 = vcmp.lt.s32.totalorder %v903, 0
        %v905 = vsub.s32 0, %v903
        %v906 = vsel %vm904, %v905, %v903
        %v907 = vclz %v906
        %v908 = vsub.s32 %v907, 2
        %vm909 = vcmp.gt.s32.totalorder 0, %v908
        %v910 = vsel %vm909, 0, %v908
        %v911 = vsub.s32 32, %v910
        %v912 = vshll.u32 %v903, %v910
        %v913 = vshrl.u32 %v895, %v911
        %v914 = vor.u32 %v912, %v913
        %v915 = vsub.s32 4294967266, %v910
        %v916 = vadd.s32 %v915, 127
        %v917 = vshll.u32 %v916, 23
        %v918 = vor.u32 4788187, %v917
        %v919 = vand.u32 2147483647, %v918
        %v921 = vcvt.s32.f32 %v914
        %v922 = vmul.f32 %v921, %v919
        %v923 = vxor.u32 %v922, 2147483648
        %v924 = vsel %vm841, %v923, %v922
        %v925 = vsub.s32 4, %v901
        %v926 = vsel %vm841, %v925, %v901
        %v927 = vsel %vm840, %v836, %v924
        %v928 = vsel %vm840, 0, %v926
        %v929 = vcosq.f32.pop %v927
        %v930 = vsinq.f32.pop %v927
        %vm931 = vweird.f32 %v836
        %v932 = vand.u32 %v928, 3
        %vm933 = vcmp.lt.s32.totalorder %v932, 2
        %vm934 = vcmp.eq.s32.totalorder %v932, 0
        %v935 = vxor.u32 %v930, 2147483648
        %v936 = vsel %vm934, %v929, %v935
        %vm937 = vcmp.eq.s32.totalorder %v932, 2
        %v938 = vxor.u32 %v929, 2147483648
        %v939 = vsel %vm937, %v938, %v930
        %v940 = vsel %vm933, %v936, %v939
        %v941 = vsel %vm931, nan, %v940
        %v942 = vmul.f32 %v838, %v941
        %v943 = vsub.f32 %v942, 1.0
        %v944 = vand.u32 2147483647, %v836
        %vm945 = vcmp.le.f32.partialorder %v944, 0.7853982
        %vm946 = vcmp.lt.s32.totalorder %v836, 0
        %v947 = vand.u32 %v836, 2139095040
        %v948 = vshrl.u32 %v947, 23
        %v949 = vsub.s32 %v948, 127
        %v950 = vand.u32 2147483647, %v836
        %v951 = vand.u32 %v950, 8388607
        %v952 = vor.u32 %v951, 8388608
        %v953 = vsub.s32 0, %v952
        %v954 = vadd.s32 %v949, 1
        %vm955 = vcmp.gt.s32.totalorder %v954, 0
        %v956 = vsel %vm955, %v954, 0
        %v957 = vshrl.u32 %v956, 5
        %v958 = vand.u32 %v956, 31
        %v959 = vsub.s32 32, %v958
        %v960 = vshrl.u32 683565275, %v959
        %v961 = vshll.u32 683565275, %v958
        %v962 = vshrl.u32 2475754826, %v959
        %v963 = vor.u32 %v961, %v962
        %v964 = vshll.u32 2475754826, %v958
        %v965 = vshrl.u32 2131351028, %v959
        %v966 = vor.u32 %v964, %v965
        %v967 = vshll.u32 2131351028, %v958
        %v968 = vshrl.u32 2102212464, %v959
        %v969 = vor.u32 %v967, %v968
        %v970 = vshll.u32 2102212464, %v958
        %v971 = vshrl.u32 920167782, %v959
        %v972 = vor.u32 %v970, %v971
        %v973 = vshll.u32 920167782, %v958
        %v974 = vshrl.u32 1326507024, %v959
        %v975 = vor.u32 %v973, %v974
        %vm976 = vcmp.lt.s32.totalorder %v957, 1
        %vm977 = vcmp.lt.s32.totalorder %v957, 2
        %vm978 = vcmp.lt.s32.totalorder %v957, 3
        %vm979 = vcmp.lt.s32.totalorder %v957, 4
        %v980 = vsel %vm976, %v960, %v963
        %v981 = vsel %vm979, %v969, 2102212464
        %v982 = vsel %vm978, %v966, %v981
        %v983 = vsel %vm977, %v980, %v982
        %v984 = vsel %vm976, %v963, %v966
        %v985 = vsel %vm979, %v972, 920167782
        %v986 = vsel %vm978, %v969, %v985
        %v987 = vsel %vm977, %v984, %v986
        %v988 = vsel %vm976, %v966, %v969
        %v989 = vsel %vm979, %v975, 1326507024
        %v990 = vsel %vm978, %v972, %v989
        %v991 = vsel %vm977, %v988, %v990
        %v992 = vshll.u32 %v952, 8
        %v993 = vmul.u32.u64.compose %v992, %v991
        %v994 = vextract.low.u32 %v993
        %v995 = vextract.high.u32 %v993
        %v996 = vmul.u32.u64.compose %v992, %v987
        %v997 = vextract.low.u32 %v996
        %v998 = vextract.high.u32 %v996
        %v999 = vmul.u32 %v992, %v983
        %v1000 = vadd.s32 %v995, %v997
        %vm1001 = vc.u32 %v995, %v997
        %v1002 = vadd.s32 %v998, 1
        %v1003 = vsel %vm1001, %v1002, %v998
        %v1004 = vadd.s32 %v999, %v1003
        %v1005 = vadd.s32 %v1004, 536870912
        %v1006 = vshrl.u32 %v1005, 30
        %v1007 = vshll.u32 %v1006, 30
        %v1008 = vsub.s32 %v1004, %v1007
        %vm1009 = vcmp.lt.s32.totalorder %v1008, 0
        %v1010 = vsub.s32 0, %v1008
        %v1011 = vsel %vm1009, %v1010, %v1008
        %v1012 = vclz %v1011
        %v1013 = vsub.s32 %v1012, 2
        %vm1014 = vcmp.gt.s32.totalorder 0, %v1013
        %v1015 = vsel %vm1014, 0, %v1013
        %v1016 = vsub.s32 32, %v1015
        %v1017 = vshll.u32 %v1008, %v1015
        %v1018 = vshrl.u32 %v1000, %v1016
        %v1019 = vor.u32 %v1017, %v1018
        %v1020 = vsub.s32 4294967266, %v1015
        %v1021 = vadd.s32 %v1020, 127
        %v1022 = vshll.u32 %v1021, 23
        %v1023 = vor.u32 4788187, %v1022
        %v1024 = vand.u32 2147483647, %v1023
        %v1026 = vcvt.s32.f32 %v1019
        %v1027 = vmul.f32 %v1026, %v1024
        %v1028 = vxor.u32 %v1027, 2147483648
        %v1029 = vsel %vm946, %v1028, %v1027
        %v1030 = vsub.s32 4, %v1006
        %v1031 = vsel %vm946, %v1030, %v1006
        %v1032 = vsel %vm945, %v836, %v1029
        %v1033 = vsel %vm945, 0, %v1031
        %v1034 = vcosq.f32.pop %v1032
        %v1035 = vsinq.f32.pop %v1032
        %vm1036 = vweird.f32 %v836
        %v1037 = vadd.s32 %v1033, 3
        %v1038 = vand.u32 %v1037, 3
        %vm1039 = vcmp.lt.s32.totalorder %v1038, 2
        %vm1040 = vcmp.eq.s32.totalorder %v1038, 0
        %v1041 = vxor.u32 %v1035, 2147483648
        %v1042 = vsel %vm1040, %v1034, %v1041
        %vm1043 = vcmp.eq.s32.totalorder %v1038, 2
        %v1044 = vxor.u32 %v1034, 2147483648
        %v1045 = vsel %vm1043, %v1044, %v1035
        %v1046 = vsel %vm1039, %v1042, %v1045
        %v1047 = vsel %vm1036, nan, %v1046
        %v1048 = vmul.f32 %v838, %v1047
        %v1049 = vmul.f32 %v826, %v826
        %v1050 = vmul.f32 %v827, %v827
        %v1051 = vadd.f32 %v1049, %v1050
        %v1052 = vmul.f32 %v943, %v826
        %v1053 = vmul.f32 %v1048, %v827
        %v1054 = vadd.f32 %v1052, %v1053
        %v1055 = vrcp.pop %v1051
        %v1056 = vmul.f32 %v1054, %v1055
        %v1057 = vmul.f32 %v1048, %v826
        %v1058 = vmul.f32 %v943, %v827
        %v1059 = vsub.f32 %v1057, %v1058
        %v1060 = vmul.f32 %v1059, %v1055
        %v1061 = vld [vmem:[%s755] sm:$0xff]
        %v1062 = vmul.f32 %v1061, %v1056
        %v1063 = vld [vmem:[%s640] sm:$0xff]
        %v1064 = vmul.f32 %v1063, %v1060
        %v1065 = vsub.f32 %v1062, %v1064
        %v1066 = vmul.f32 %v1061, %v1060
        %v1067 = vmul.f32 %v1063, %v1056
        %v1068 = vadd.f32 %v1066, %v1067
        %v1069 = vlaneseq
        %v1070 = vshrl.u32 %v1069, 7
        %v1071 = vadd.s32 %v1070, 8
        %v1072 = vcvt.s32.f32 %v1070
        %v1073 = vcvt.s32.f32 %v1071
        %v1074 = vlaneseq
        %v1075 = vshrl.u32 %v1074, 7
        %v1076 = vsub.s32 0, %v1075
        %v1077 = vrot.slane %v835, %v1076
        %v1078 = vmul.f32 %v1072, %v1077
        %v1079 = vmul.f32 %v1073, %v1077
        %v1080 = vmul.f32 %v1078, 1.442695
        %v1081 = vpow.pop %v1080
        %v1082 = vmul.f32 %v1079, 1.442695
        %v1083 = vpow.pop %v1082
        %v1084 = vlaneseq
        %v1085 = vshrl.u32 %v1084, 7
        %v1086 = vsub.s32 0, %v1085
        %v1087 = vrot.slane %v836, %v1086
        %v1088 = vmul.f32 %v1072, %v1087
        %v1089 = vmul.f32 %v1073, %v1087
        %v1090 = vand.u32 2147483647, %v1088
        %vm1091 = vcmp.le.f32.partialorder %v1090, 0.7853982
        %vm1092 = vcmp.lt.s32.totalorder %v1088, 0
        %v1093 = vand.u32 %v1088, 2139095040
        %v1094 = vshrl.u32 %v1093, 23
        %v1095 = vsub.s32 %v1094, 127
        %v1096 = vand.u32 2147483647, %v1088
        %v1097 = vand.u32 %v1096, 8388607
        %v1098 = vor.u32 %v1097, 8388608
        %v1099 = vsub.s32 0, %v1098
        %v1100 = vadd.s32 %v1095, 1
        %vm1101 = vcmp.gt.s32.totalorder %v1100, 0
        %v1102 = vsel %vm1101, %v1100, 0
        %v1103 = vshrl.u32 %v1102, 5
        %v1104 = vand.u32 %v1102, 31
        %v1105 = vsub.s32 32, %v1104
        %v1106 = vshrl.u32 683565275, %v1105
        %v1107 = vshll.u32 683565275, %v1104
        %v1108 = vshrl.u32 2475754826, %v1105
        %v1109 = vor.u32 %v1107, %v1108
        %v1110 = vshll.u32 2475754826, %v1104
        %v1111 = vshrl.u32 2131351028, %v1105
        %v1112 = vor.u32 %v1110, %v1111
        %v1113 = vshll.u32 2131351028, %v1104
        %v1114 = vshrl.u32 2102212464, %v1105
        %v1115 = vor.u32 %v1113, %v1114
        %v1116 = vshll.u32 2102212464, %v1104
        %v1117 = vshrl.u32 920167782, %v1105
        %v1118 = vor.u32 %v1116, %v1117
        %v1119 = vshll.u32 920167782, %v1104
        %v1120 = vshrl.u32 1326507024, %v1105
        %v1121 = vor.u32 %v1119, %v1120
        %vm1122 = vcmp.lt.s32.totalorder %v1103, 1
        %vm1123 = vcmp.lt.s32.totalorder %v1103, 2
        %vm1124 = vcmp.lt.s32.totalorder %v1103, 3
        %vm1125 = vcmp.lt.s32.totalorder %v1103, 4
        %v1126 = vsel %vm1122, %v1106, %v1109
        %v1127 = vsel %vm1125, %v1115, 2102212464
        %v1128 = vsel %vm1124, %v1112, %v1127
        %v1129 = vsel %vm1123, %v1126, %v1128
        %v1130 = vsel %vm1122, %v1109, %v1112
        %v1131 = vsel %vm1125, %v1118, 920167782
        %v1132 = vsel %vm1124, %v1115, %v1131
        %v1133 = vsel %vm1123, %v1130, %v1132
        %v1134 = vsel %vm1122, %v1112, %v1115
        %v1135 = vsel %vm1125, %v1121, 1326507024
        %v1136 = vsel %vm1124, %v1118, %v1135
        %v1137 = vsel %vm1123, %v1134, %v1136
        %v1138 = vshll.u32 %v1098, 8
        %v1139 = vmul.u32.u64.compose %v1138, %v1137
        %v1140 = vextract.low.u32 %v1139
        %v1141 = vextract.high.u32 %v1139
        %v1142 = vmul.u32.u64.compose %v1138, %v1133
        %v1143 = vextract.low.u32 %v1142
        %v1144 = vextract.high.u32 %v1142
        %v1145 = vmul.u32 %v1138, %v1129
        %v1146 = vadd.s32 %v1141, %v1143
        %vm1147 = vc.u32 %v1141, %v1143
        %v1148 = vadd.s32 %v1144, 1
        %v1149 = vsel %vm1147, %v1148, %v1144
        %v1150 = vadd.s32 %v1145, %v1149
        %v1151 = vadd.s32 %v1150, 536870912
        %v1152 = vshrl.u32 %v1151, 30
        %v1153 = vshll.u32 %v1152, 30
        %v1154 = vsub.s32 %v1150, %v1153
        %vm1155 = vcmp.lt.s32.totalorder %v1154, 0
        %v1156 = vsub.s32 0, %v1154
        %v1157 = vsel %vm1155, %v1156, %v1154
        %v1158 = vclz %v1157
        %v1159 = vsub.s32 %v1158, 2
        %vm1160 = vcmp.gt.s32.totalorder 0, %v1159
        %v1161 = vsel %vm1160, 0, %v1159
        %v1162 = vsub.s32 32, %v1161
        %v1163 = vshll.u32 %v1154, %v1161
        %v1164 = vshrl.u32 %v1146, %v1162
        %v1165 = vor.u32 %v1163, %v1164
        %v1166 = vsub.s32 4294967266, %v1161
        %v1167 = vadd.s32 %v1166, 127
        %v1168 = vshll.u32 %v1167, 23
        %v1169 = vor.u32 4788187, %v1168
        %v1170 = vand.u32 2147483647, %v1169
        %v1172 = vcvt.s32.f32 %v1165
        %v1173 = vmul.f32 %v1172, %v1170
        %v1174 = vxor.u32 %v1173, 2147483648
        %v1175 = vsel %vm1092, %v1174, %v1173
        %v1176 = vsub.s32 4, %v1152
        %v1177 = vsel %vm1092, %v1176, %v1152
        %v1178 = vsel %vm1091, %v1088, %v1175
        %v1179 = vsel %vm1091, 0, %v1177
        %v1180 = vcosq.f32.pop %v1178
        %v1181 = vsinq.f32.pop %v1178
        %vm1182 = vweird.f32 %v1088
        %v1183 = vand.u32 %v1179, 3
        %vm1184 = vcmp.lt.s32.totalorder %v1183, 2
        %vm1185 = vcmp.eq.s32.totalorder %v1183, 0
        %v1186 = vxor.u32 %v1181, 2147483648
        %v1187 = vsel %vm1185, %v1180, %v1186
        %vm1188 = vcmp.eq.s32.totalorder %v1183, 2
        %v1189 = vxor.u32 %v1180, 2147483648
        %v1190 = vsel %vm1188, %v1189, %v1181
        %v1191 = vsel %vm1184, %v1187, %v1190
        %v1192 = vsel %vm1182, nan, %v1191
        %v1193 = vand.u32 2147483647, %v1089
        %vm1194 = vcmp.le.f32.partialorder %v1193, 0.7853982
        %vm1195 = vcmp.lt.s32.totalorder %v1089, 0
        %v1196 = vand.u32 %v1089, 2139095040
        %v1197 = vshrl.u32 %v1196, 23
        %v1198 = vsub.s32 %v1197, 127
        %v1199 = vand.u32 2147483647, %v1089
        %v1200 = vand.u32 %v1199, 8388607
        %v1201 = vor.u32 %v1200, 8388608
        %v1202 = vsub.s32 0, %v1201
        %v1203 = vadd.s32 %v1198, 1
        %vm1204 = vcmp.gt.s32.totalorder %v1203, 0
        %v1205 = vsel %vm1204, %v1203, 0
        %v1206 = vshrl.u32 %v1205, 5
        %v1207 = vand.u32 %v1205, 31
        %v1208 = vsub.s32 32, %v1207
        %v1209 = vshrl.u32 683565275, %v1208
        %v1210 = vshll.u32 683565275, %v1207
        %v1211 = vshrl.u32 2475754826, %v1208
        %v1212 = vor.u32 %v1210, %v1211
        %v1213 = vshll.u32 2475754826, %v1207
        %v1214 = vshrl.u32 2131351028, %v1208
        %v1215 = vor.u32 %v1213, %v1214
        %v1216 = vshll.u32 2131351028, %v1207
        %v1217 = vshrl.u32 2102212464, %v1208
        %v1218 = vor.u32 %v1216, %v1217
        %v1219 = vshll.u32 2102212464, %v1207
        %v1220 = vshrl.u32 920167782, %v1208
        %v1221 = vor.u32 %v1219, %v1220
        %v1222 = vshll.u32 920167782, %v1207
        %v1223 = vshrl.u32 1326507024, %v1208
        %v1224 = vor.u32 %v1222, %v1223
        %vm1225 = vcmp.lt.s32.totalorder %v1206, 1
        %vm1226 = vcmp.lt.s32.totalorder %v1206, 2
        %vm1227 = vcmp.lt.s32.totalorder %v1206, 3
        %vm1228 = vcmp.lt.s32.totalorder %v1206, 4
        %v1229 = vsel %vm1225, %v1209, %v1212
        %v1230 = vsel %vm1228, %v1218, 2102212464
        %v1231 = vsel %vm1227, %v1215, %v1230
        %v1232 = vsel %vm1226, %v1229, %v1231
        %v1233 = vsel %vm1225, %v1212, %v1215
        %v1234 = vsel %vm1228, %v1221, 920167782
        %v1235 = vsel %vm1227, %v1218, %v1234
        %v1236 = vsel %vm1226, %v1233, %v1235
        %v1237 = vsel %vm1225, %v1215, %v1218
        %v1238 = vsel %vm1228, %v1224, 1326507024
        %v1239 = vsel %vm1227, %v1221, %v1238
        %v1240 = vsel %vm1226, %v1237, %v1239
        %v1241 = vshll.u32 %v1201, 8
        %v1242 = vmul.u32.u64.compose %v1241, %v1240
        %v1243 = vextract.low.u32 %v1242
        %v1244 = vextract.high.u32 %v1242
        %v1245 = vmul.u32.u64.compose %v1241, %v1236
        %v1246 = vextract.low.u32 %v1245
        %v1247 = vextract.high.u32 %v1245
        %v1248 = vmul.u32 %v1241, %v1232
        %v1249 = vadd.s32 %v1244, %v1246
        %vm1250 = vc.u32 %v1244, %v1246
        %v1251 = vadd.s32 %v1247, 1
        %v1252 = vsel %vm1250, %v1251, %v1247
        %v1253 = vadd.s32 %v1248, %v1252
        %v1254 = vadd.s32 %v1253, 536870912
        %v1255 = vshrl.u32 %v1254, 30
        %v1256 = vshll.u32 %v1255, 30
        %v1257 = vsub.s32 %v1253, %v1256
        %vm1258 = vcmp.lt.s32.totalorder %v1257, 0
        %v1259 = vsub.s32 0, %v1257
        %v1260 = vsel %vm1258, %v1259, %v1257
        %v1261 = vclz %v1260
        %v1262 = vsub.s32 %v1261, 2
        %vm1263 = vcmp.gt.s32.totalorder 0, %v1262
        %v1264 = vsel %vm1263, 0, %v1262
        %v1265 = vsub.s32 32, %v1264
        %v1266 = vshll.u32 %v1257, %v1264
        %v1267 = vshrl.u32 %v1249, %v1265
        %v1268 = vor.u32 %v1266, %v1267
        %v1269 = vsub.s32 4294967266, %v1264
        %v1270 = vadd.s32 %v1269, 127
        %v1271 = vshll.u32 %v1270, 23
        %v1272 = vor.u32 4788187, %v1271
        %v1273 = vand.u32 2147483647, %v1272
        %v1275 = vcvt.s32.f32 %v1268
        %v1276 = vmul.f32 %v1275, %v1273
        %v1277 = vxor.u32 %v1276, 2147483648
        %v1278 = vsel %vm1195, %v1277, %v1276
        %v1279 = vsub.s32 4, %v1255
        %v1280 = vsel %vm1195, %v1279, %v1255
        %v1281 = vsel %vm1194, %v1089, %v1278
        %v1282 = vsel %vm1194, 0, %v1280
        %v1283 = vcosq.f32.pop %v1281
        %v1284 = vsinq.f32.pop %v1281
        %vm1285 = vweird.f32 %v1089
        %v1286 = vand.u32 %v1282, 3
        %vm1287 = vcmp.lt.s32.totalorder %v1286, 2
        %vm1288 = vcmp.eq.s32.totalorder %v1286, 0
        %v1289 = vxor.u32 %v1284, 2147483648
        %v1290 = vsel %vm1288, %v1283, %v1289
        %vm1291 = vcmp.eq.s32.totalorder %v1286, 2
        %v1292 = vxor.u32 %v1283, 2147483648
        %v1293 = vsel %vm1291, %v1292, %v1284
        %v1294 = vsel %vm1287, %v1290, %v1293
        %v1295 = vsel %vm1285, nan, %v1294
        %v1296 = vlaneseq
        %v1297 = vshrl.u32 %v1296, 7
        %v1298 = vsub.s32 0, %v1297
        %v1299 = vrot.slane %v1065, %v1298
        %v1300 = vmul.f32 %v1299, %v1192
        %v1301 = vmul.f32 %v1299, %v1295
        %v1302 = vand.u32 2147483647, %v1088
        %vm1303 = vcmp.le.f32.partialorder %v1302, 0.7853982
        %vm1304 = vcmp.lt.s32.totalorder %v1088, 0
        %v1305 = vand.u32 %v1088, 2139095040
        %v1306 = vshrl.u32 %v1305, 23
        %v1307 = vsub.s32 %v1306, 127
        %v1308 = vand.u32 2147483647, %v1088
        %v1309 = vand.u32 %v1308, 8388607
        %v1310 = vor.u32 %v1309, 8388608
        %v1311 = vsub.s32 0, %v1310
        %v1312 = vadd.s32 %v1307, 1
        %vm1313 = vcmp.gt.s32.totalorder %v1312, 0
        %v1314 = vsel %vm1313, %v1312, 0
        %v1315 = vshrl.u32 %v1314, 5
        %v1316 = vand.u32 %v1314, 31
        %v1317 = vsub.s32 32, %v1316
        %v1318 = vshrl.u32 683565275, %v1317
        %v1319 = vshll.u32 683565275, %v1316
        %v1320 = vshrl.u32 2475754826, %v1317
        %v1321 = vor.u32 %v1319, %v1320
        %v1322 = vshll.u32 2475754826, %v1316
        %v1323 = vshrl.u32 2131351028, %v1317
        %v1324 = vor.u32 %v1322, %v1323
        %v1325 = vshll.u32 2131351028, %v1316
        %v1326 = vshrl.u32 2102212464, %v1317
        %v1327 = vor.u32 %v1325, %v1326
        %v1328 = vshll.u32 2102212464, %v1316
        %v1329 = vshrl.u32 920167782, %v1317
        %v1330 = vor.u32 %v1328, %v1329
        %v1331 = vshll.u32 920167782, %v1316
        %v1332 = vshrl.u32 1326507024, %v1317
        %v1333 = vor.u32 %v1331, %v1332
        %vm1334 = vcmp.lt.s32.totalorder %v1315, 1
        %vm1335 = vcmp.lt.s32.totalorder %v1315, 2
        %vm1336 = vcmp.lt.s32.totalorder %v1315, 3
        %vm1337 = vcmp.lt.s32.totalorder %v1315, 4
        %v1338 = vsel %vm1334, %v1318, %v1321
        %v1339 = vsel %vm1337, %v1327, 2102212464
        %v1340 = vsel %vm1336, %v1324, %v1339
        %v1341 = vsel %vm1335, %v1338, %v1340
        %v1342 = vsel %vm1334, %v1321, %v1324
        %v1343 = vsel %vm1337, %v1330, 920167782
        %v1344 = vsel %vm1336, %v1327, %v1343
        %v1345 = vsel %vm1335, %v1342, %v1344
        %v1346 = vsel %vm1334, %v1324, %v1327
        %v1347 = vsel %vm1337, %v1333, 1326507024
        %v1348 = vsel %vm1336, %v1330, %v1347
        %v1349 = vsel %vm1335, %v1346, %v1348
        %v1350 = vshll.u32 %v1310, 8
        %v1351 = vmul.u32.u64.compose %v1350, %v1349
        %v1352 = vextract.low.u32 %v1351
        %v1353 = vextract.high.u32 %v1351
        %v1354 = vmul.u32.u64.compose %v1350, %v1345
        %v1355 = vextract.low.u32 %v1354
        %v1356 = vextract.high.u32 %v1354
        %v1357 = vmul.u32 %v1350, %v1341
        %v1358 = vadd.s32 %v1353, %v1355
        %vm1359 = vc.u32 %v1353, %v1355
        %v1360 = vadd.s32 %v1356, 1
        %v1361 = vsel %vm1359, %v1360, %v1356
        %v1362 = vadd.s32 %v1357, %v1361
        %v1363 = vadd.s32 %v1362, 536870912
        %v1364 = vshrl.u32 %v1363, 30
        %v1365 = vshll.u32 %v1364, 30
        %v1366 = vsub.s32 %v1362, %v1365
        %vm1367 = vcmp.lt.s32.totalorder %v1366, 0
        %v1368 = vsub.s32 0, %v1366
        %v1369 = vsel %vm1367, %v1368, %v1366
        %v1370 = vclz %v1369
        %v1371 = vsub.s32 %v1370, 2
        %vm1372 = vcmp.gt.s32.totalorder 0, %v1371
        %v1373 = vsel %vm1372, 0, %v1371
        %v1374 = vsub.s32 32, %v1373
        %v1375 = vshll.u32 %v1366, %v1373
        %v1376 = vshrl.u32 %v1358, %v1374
        %v1377 = vor.u32 %v1375, %v1376
        %v1378 = vsub.s32 4294967266, %v1373
        %v1379 = vadd.s32 %v1378, 127
        %v1380 = vshll.u32 %v1379, 23
        %v1381 = vor.u32 4788187, %v1380
        %v1382 = vand.u32 2147483647, %v1381
        %v1384 = vcvt.s32.f32 %v1377
        %v1385 = vmul.f32 %v1384, %v1382
        %v1386 = vxor.u32 %v1385, 2147483648
        %v1387 = vsel %vm1304, %v1386, %v1385
        %v1388 = vsub.s32 4, %v1364
        %v1389 = vsel %vm1304, %v1388, %v1364
        %v1390 = vsel %vm1303, %v1088, %v1387
        %v1391 = vsel %vm1303, 0, %v1389
        %v1392 = vcosq.f32.pop %v1390
        %v1393 = vsinq.f32.pop %v1390
        %vm1394 = vweird.f32 %v1088
        %v1395 = vadd.s32 %v1391, 3
        %v1396 = vand.u32 %v1395, 3
        %vm1397 = vcmp.lt.s32.totalorder %v1396, 2
        %vm1398 = vcmp.eq.s32.totalorder %v1396, 0
        %v1399 = vxor.u32 %v1393, 2147483648
        %v1400 = vsel %vm1398, %v1392, %v1399
        %vm1401 = vcmp.eq.s32.totalorder %v1396, 2
        %v1402 = vxor.u32 %v1392, 2147483648
        %v1403 = vsel %vm1401, %v1402, %v1393
        %v1404 = vsel %vm1397, %v1400, %v1403
        %v1405 = vsel %vm1394, nan, %v1404
        %v1406 = vand.u32 2147483647, %v1089
        %vm1407 = vcmp.le.f32.partialorder %v1406, 0.7853982
        %vm1408 = vcmp.lt.s32.totalorder %v1089, 0
        %v1409 = vand.u32 %v1089, 2139095040
        %v1410 = vshrl.u32 %v1409, 23
        %v1411 = vsub.s32 %v1410, 127
        %v1412 = vand.u32 2147483647, %v1089
        %v1413 = vand.u32 %v1412, 8388607
        %v1414 = vor.u32 %v1413, 8388608
        %v1415 = vsub.s32 0, %v1414
        %v1416 = vadd.s32 %v1411, 1
        %vm1417 = vcmp.gt.s32.totalorder %v1416, 0
        %v1418 = vsel %vm1417, %v1416, 0
        %v1419 = vshrl.u32 %v1418, 5
        %v1420 = vand.u32 %v1418, 31
        %v1421 = vsub.s32 32, %v1420
        %v1422 = vshrl.u32 683565275, %v1421
        %v1423 = vshll.u32 683565275, %v1420
        %v1424 = vshrl.u32 2475754826, %v1421
        %v1425 = vor.u32 %v1423, %v1424
        %v1426 = vshll.u32 2475754826, %v1420
        %v1427 = vshrl.u32 2131351028, %v1421
        %v1428 = vor.u32 %v1426, %v1427
        %v1429 = vshll.u32 2131351028, %v1420
        %v1430 = vshrl.u32 2102212464, %v1421
        %v1431 = vor.u32 %v1429, %v1430
        %v1432 = vshll.u32 2102212464, %v1420
        %v1433 = vshrl.u32 920167782, %v1421
        %v1434 = vor.u32 %v1432, %v1433
        %v1435 = vshll.u32 920167782, %v1420
        %v1436 = vshrl.u32 1326507024, %v1421
        %v1437 = vor.u32 %v1435, %v1436
        %vm1438 = vcmp.lt.s32.totalorder %v1419, 1
        %vm1439 = vcmp.lt.s32.totalorder %v1419, 2
        %vm1440 = vcmp.lt.s32.totalorder %v1419, 3
        %vm1441 = vcmp.lt.s32.totalorder %v1419, 4
        %v1442 = vsel %vm1438, %v1422, %v1425
        %v1443 = vsel %vm1441, %v1431, 2102212464
        %v1444 = vsel %vm1440, %v1428, %v1443
        %v1445 = vsel %vm1439, %v1442, %v1444
        %v1446 = vsel %vm1438, %v1425, %v1428
        %v1447 = vsel %vm1441, %v1434, 920167782
        %v1448 = vsel %vm1440, %v1431, %v1447
        %v1449 = vsel %vm1439, %v1446, %v1448
        %v1450 = vsel %vm1438, %v1428, %v1431
        %v1451 = vsel %vm1441, %v1437, 1326507024
        %v1452 = vsel %vm1440, %v1434, %v1451
        %v1453 = vsel %vm1439, %v1450, %v1452
        %v1454 = vshll.u32 %v1414, 8
        %v1455 = vmul.u32.u64.compose %v1454, %v1453
        %v1456 = vextract.low.u32 %v1455
        %v1457 = vextract.high.u32 %v1455
        %v1458 = vmul.u32.u64.compose %v1454, %v1449
        %v1459 = vextract.low.u32 %v1458
        %v1460 = vextract.high.u32 %v1458
        %v1461 = vmul.u32 %v1454, %v1445
        %v1462 = vadd.s32 %v1457, %v1459
        %vm1463 = vc.u32 %v1457, %v1459
        %v1464 = vadd.s32 %v1460, 1
        %v1465 = vsel %vm1463, %v1464, %v1460
        %v1466 = vadd.s32 %v1461, %v1465
        %v1467 = vadd.s32 %v1466, 536870912
        %v1468 = vshrl.u32 %v1467, 30
        %v1469 = vshll.u32 %v1468, 30
        %v1470 = vsub.s32 %v1466, %v1469
        %vm1471 = vcmp.lt.s32.totalorder %v1470, 0
        %v1472 = vsub.s32 0, %v1470
        %v1473 = vsel %vm1471, %v1472, %v1470
        %v1474 = vclz %v1473
        %v1475 = vsub.s32 %v1474, 2
        %vm1476 = vcmp.gt.s32.totalorder 0, %v1475
        %v1477 = vsel %vm1476, 0, %v1475
        %v1478 = vsub.s32 32, %v1477
        %v1479 = vshll.u32 %v1470, %v1477
        %v1480 = vshrl.u32 %v1462, %v1478
        %v1481 = vor.u32 %v1479, %v1480
        %v1482 = vsub.s32 4294967266, %v1477
        %v1483 = vadd.s32 %v1482, 127
        %v1484 = vshll.u32 %v1483, 23
        %v1485 = vor.u32 4788187, %v1484
        %v1486 = vand.u32 2147483647, %v1485
        %v1488 = vcvt.s32.f32 %v1481
        %v1489 = vmul.f32 %v1488, %v1486
        %v1490 = vxor.u32 %v1489, 2147483648
        %v1491 = vsel %vm1408, %v1490, %v1489
        %v1492 = vsub.s32 4, %v1468
        %v1493 = vsel %vm1408, %v1492, %v1468
        %v1494 = vsel %vm1407, %v1089, %v1491
        %v1495 = vsel %vm1407, 0, %v1493
        %v1496 = vcosq.f32.pop %v1494
        %v1497 = vsinq.f32.pop %v1494
        %vm1498 = vweird.f32 %v1089
        %v1499 = vadd.s32 %v1495, 3
        %v1500 = vand.u32 %v1499, 3
        %vm1501 = vcmp.lt.s32.totalorder %v1500, 2
        %vm1502 = vcmp.eq.s32.totalorder %v1500, 0
        %v1503 = vxor.u32 %v1497, 2147483648
        %v1504 = vsel %vm1502, %v1496, %v1503
        %vm1505 = vcmp.eq.s32.totalorder %v1500, 2
        %v1506 = vxor.u32 %v1496, 2147483648
        %v1507 = vsel %vm1505, %v1506, %v1497
        %v1508 = vsel %vm1501, %v1504, %v1507
        %v1509 = vsel %vm1498, nan, %v1508
        %v1510 = vlaneseq
        %v1511 = vshrl.u32 %v1510, 7
        %v1512 = vsub.s32 0, %v1511
        %v1513 = vrot.slane %v1068, %v1512
        %v1514 = vmul.f32 %v1513, %v1405
        %v1515 = vmul.f32 %v1513, %v1509
        %v1516 = vsub.f32 %v1300, %v1514
        %v1517 = vsub.f32 %v1301, %v1515
        %v1518 = vmul.f32 %v1081, %v1516
        %v1519 = vmul.f32 %v1083, %v1517
        %v1520 = vadd.f32 %v1518, 0.0
        %v1521 = vadd.f32 %v1519, 0.0
        %v1522 = vlaneseq
        %v1523 = vshrl.u32 %v1522, 7
        %v1524 = vsub.s32 1, %v1523
        %v1525 = vrot.slane %v835, %v1524
        %v1526 = vmul.f32 %v1072, %v1525
        %v1527 = vmul.f32 %v1073, %v1525
        %v1528 = vmul.f32 %v1526, 1.442695
        %v1529 = vpow.pop %v1528
        %v1530 = vmul.f32 %v1527, 1.442695
        %v1531 = vpow.pop %v1530
        %v1532 = vlaneseq
        %v1533 = vshrl.u32 %v1532, 7
        %v1534 = vsub.s32 1, %v1533
        %v1535 = vrot.slane %v836, %v1534
        %v1536 = vmul.f32 %v1072, %v1535
        %v1537 = vmul.f32 %v1073, %v1535
        %v1538 = vand.u32 2147483647, %v1536
        %vm1539 = vcmp.le.f32.partialorder %v1538, 0.7853982
        %vm1540 = vcmp.lt.s32.totalorder %v1536, 0
        %v1541 = vand.u32 %v1536, 2139095040
        %v1542 = vshrl.u32 %v1541, 23
        %v1543 = vsub.s32 %v1542, 127
        %v1544 = vand.u32 2147483647, %v1536
        %v1545 = vand.u32 %v1544, 8388607
        %v1546 = vor.u32 %v1545, 8388608
        %v1547 = vsub.s32 0, %v1546
        %v1548 = vadd.s32 %v1543, 1
        %vm1549 = vcmp.gt.s32.totalorder %v1548, 0
        %v1550 = vsel %vm1549, %v1548, 0
        %v1551 = vshrl.u32 %v1550, 5
        %v1552 = vand.u32 %v1550, 31
        %v1553 = vsub.s32 32, %v1552
        %v1554 = vshrl.u32 683565275, %v1553
        %v1555 = vshll.u32 683565275, %v1552
        %v1556 = vshrl.u32 2475754826, %v1553
        %v1557 = vor.u32 %v1555, %v1556
        %v1558 = vshll.u32 2475754826, %v1552
        %v1559 = vshrl.u32 2131351028, %v1553
        %v1560 = vor.u32 %v1558, %v1559
        %v1561 = vshll.u32 2131351028, %v1552
        %v1562 = vshrl.u32 2102212464, %v1553
        %v1563 = vor.u32 %v1561, %v1562
        %v1564 = vshll.u32 2102212464, %v1552
        %v1565 = vshrl.u32 920167782, %v1553
        %v1566 = vor.u32 %v1564, %v1565
        %v1567 = vshll.u32 920167782, %v1552
        %v1568 = vshrl.u32 1326507024, %v1553
        %v1569 = vor.u32 %v1567, %v1568
        %vm1570 = vcmp.lt.s32.totalorder %v1551, 1
        %vm1571 = vcmp.lt.s32.totalorder %v1551, 2
        %vm1572 = vcmp.lt.s32.totalorder %v1551, 3
        %vm1573 = vcmp.lt.s32.totalorder %v1551, 4
        %v1574 = vsel %vm1570, %v1554, %v1557
        %v1575 = vsel %vm1573, %v1563, 2102212464
        %v1576 = vsel %vm1572, %v1560, %v1575
        %v1577 = vsel %vm1571, %v1574, %v1576
        %v1578 = vsel %vm1570, %v1557, %v1560
        %v1579 = vsel %vm1573, %v1566, 920167782
        %v1580 = vsel %vm1572, %v1563, %v1579
        %v1581 = vsel %vm1571, %v1578, %v1580
        %v1582 = vsel %vm1570, %v1560, %v1563
        %v1583 = vsel %vm1573, %v1569, 1326507024
        %v1584 = vsel %vm1572, %v1566, %v1583
        %v1585 = vsel %vm1571, %v1582, %v1584
        %v1586 = vshll.u32 %v1546, 8
        %v1587 = vmul.u32.u64.compose %v1586, %v1585
        %v1588 = vextract.low.u32 %v1587
        %v1589 = vextract.high.u32 %v1587
        %v1590 = vmul.u32.u64.compose %v1586, %v1581
        %v1591 = vextract.low.u32 %v1590
        %v1592 = vextract.high.u32 %v1590
        %v1593 = vmul.u32 %v1586, %v1577
        %v1594 = vadd.s32 %v1589, %v1591
        %vm1595 = vc.u32 %v1589, %v1591
        %v1596 = vadd.s32 %v1592, 1
        %v1597 = vsel %vm1595, %v1596, %v1592
        %v1598 = vadd.s32 %v1593, %v1597
        %v1599 = vadd.s32 %v1598, 536870912
        %v1600 = vshrl.u32 %v1599, 30
        %v1601 = vshll.u32 %v1600, 30
        %v1602 = vsub.s32 %v1598, %v1601
        %vm1603 = vcmp.lt.s32.totalorder %v1602, 0
        %v1604 = vsub.s32 0, %v1602
        %v1605 = vsel %vm1603, %v1604, %v1602
        %v1606 = vclz %v1605
        %v1607 = vsub.s32 %v1606, 2
        %vm1608 = vcmp.gt.s32.totalorder 0, %v1607
        %v1609 = vsel %vm1608, 0, %v1607
        %v1610 = vsub.s32 32, %v1609
        %v1611 = vshll.u32 %v1602, %v1609
        %v1612 = vshrl.u32 %v1594, %v1610
        %v1613 = vor.u32 %v1611, %v1612
        %v1614 = vsub.s32 4294967266, %v1609
        %v1615 = vadd.s32 %v1614, 127
        %v1616 = vshll.u32 %v1615, 23
        %v1617 = vor.u32 4788187, %v1616
        %v1618 = vand.u32 2147483647, %v1617
        %v1620 = vcvt.s32.f32 %v1613
        %v1621 = vmul.f32 %v1620, %v1618
        %v1622 = vxor.u32 %v1621, 2147483648
        %v1623 = vsel %vm1540, %v1622, %v1621
        %v1624 = vsub.s32 4, %v1600
        %v1625 = vsel %vm1540, %v1624, %v1600
        %v1626 = vsel %vm1539, %v1536, %v1623
        %v1627 = vsel %vm1539, 0, %v1625
        %v1628 = vcosq.f32.pop %v1626
        %v1629 = vsinq.f32.pop %v1626
        %vm1630 = vweird.f32 %v1536
        %v1631 = vand.u32 %v1627, 3
        %vm1632 = vcmp.lt.s32.totalorder %v1631, 2
        %vm1633 = vcmp.eq.s32.totalorder %v1631, 0
        %v1634 = vxor.u32 %v1629, 2147483648
        %v1635 = vsel %vm1633, %v1628, %v1634
        %vm1636 = vcmp.eq.s32.totalorder %v1631, 2
        %v1637 = vxor.u32 %v1628, 2147483648
        %v1638 = vsel %vm1636, %v1637, %v1629
        %v1639 = vsel %vm1632, %v1635, %v1638
        %v1640 = vsel %vm1630, nan, %v1639
        %v1641 = vand.u32 2147483647, %v1537
        %vm1642 = vcmp.le.f32.partialorder %v1641, 0.7853982
        %vm1643 = vcmp.lt.s32.totalorder %v1537, 0
        %v1644 = vand.u32 %v1537, 2139095040
        %v1645 = vshrl.u32 %v1644, 23
        %v1646 = vsub.s32 %v1645, 127
        %v1647 = vand.u32 2147483647, %v1537
        %v1648 = vand.u32 %v1647, 8388607
        %v1649 = vor.u32 %v1648, 8388608
        %v1650 = vsub.s32 0, %v1649
        %v1651 = vadd.s32 %v1646, 1
        %vm1652 = vcmp.gt.s32.totalorder %v1651, 0
        %v1653 = vsel %vm1652, %v1651, 0
        %v1654 = vshrl.u32 %v1653, 5
        %v1655 = vand.u32 %v1653, 31
        %v1656 = vsub.s32 32, %v1655
        %v1657 = vshrl.u32 683565275, %v1656
        %v1658 = vshll.u32 683565275, %v1655
        %v1659 = vshrl.u32 2475754826, %v1656
        %v1660 = vor.u32 %v1658, %v1659
        %v1661 = vshll.u32 2475754826, %v1655
        %v1662 = vshrl.u32 2131351028, %v1656
        %v1663 = vor.u32 %v1661, %v1662
        %v1664 = vshll.u32 2131351028, %v1655
        %v1665 = vshrl.u32 2102212464, %v1656
        %v1666 = vor.u32 %v1664, %v1665
        %v1667 = vshll.u32 2102212464, %v1655
        %v1668 = vshrl.u32 920167782, %v1656
        %v1669 = vor.u32 %v1667, %v1668
        %v1670 = vshll.u32 920167782, %v1655
        %v1671 = vshrl.u32 1326507024, %v1656
        %v1672 = vor.u32 %v1670, %v1671
        %vm1673 = vcmp.lt.s32.totalorder %v1654, 1
        %vm1674 = vcmp.lt.s32.totalorder %v1654, 2
        %vm1675 = vcmp.lt.s32.totalorder %v1654, 3
        %vm1676 = vcmp.lt.s32.totalorder %v1654, 4
        %v1677 = vsel %vm1673, %v1657, %v1660
        %v1678 = vsel %vm1676, %v1666, 2102212464
        %v1679 = vsel %vm1675, %v1663, %v1678
        %v1680 = vsel %vm1674, %v1677, %v1679
        %v1681 = vsel %vm1673, %v1660, %v1663
        %v1682 = vsel %vm1676, %v1669, 920167782
        %v1683 = vsel %vm1675, %v1666, %v1682
        %v1684 = vsel %vm1674, %v1681, %v1683
        %v1685 = vsel %vm1673, %v1663, %v1666
        %v1686 = vsel %vm1676, %v1672, 1326507024
        %v1687 = vsel %vm1675, %v1669, %v1686
        %v1688 = vsel %vm1674, %v1685, %v1687
        %v1689 = vshll.u32 %v1649, 8
        %v1690 = vmul.u32.u64.compose %v1689, %v1688
        %v1691 = vextract.low.u32 %v1690
        %v1692 = vextract.high.u32 %v1690
        %v1693 = vmul.u32.u64.compose %v1689, %v1684
        %v1694 = vextract.low.u32 %v1693
        %v1695 = vextract.high.u32 %v1693
        %v1696 = vmul.u32 %v1689, %v1680
        %v1697 = vadd.s32 %v1692, %v1694
        %vm1698 = vc.u32 %v1692, %v1694
        %v1699 = vadd.s32 %v1695, 1
        %v1700 = vsel %vm1698, %v1699, %v1695
        %v1701 = vadd.s32 %v1696, %v1700
        %v1702 = vadd.s32 %v1701, 536870912
        %v1703 = vshrl.u32 %v1702, 30
        %v1704 = vshll.u32 %v1703, 30
        %v1705 = vsub.s32 %v1701, %v1704
        %vm1706 = vcmp.lt.s32.totalorder %v1705, 0
        %v1707 = vsub.s32 0, %v1705
        %v1708 = vsel %vm1706, %v1707, %v1705
        %v1709 = vclz %v1708
        %v1710 = vsub.s32 %v1709, 2
        %vm1711 = vcmp.gt.s32.totalorder 0, %v1710
        %v1712 = vsel %vm1711, 0, %v1710
        %v1713 = vsub.s32 32, %v1712
        %v1714 = vshll.u32 %v1705, %v1712
        %v1715 = vshrl.u32 %v1697, %v1713
        %v1716 = vor.u32 %v1714, %v1715
        %v1717 = vsub.s32 4294967266, %v1712
        %v1718 = vadd.s32 %v1717, 127
        %v1719 = vshll.u32 %v1718, 23
        %v1720 = vor.u32 4788187, %v1719
        %v1721 = vand.u32 2147483647, %v1720
        %v1723 = vcvt.s32.f32 %v1716
        %v1724 = vmul.f32 %v1723, %v1721
        %v1725 = vxor.u32 %v1724, 2147483648
        %v1726 = vsel %vm1643, %v1725, %v1724
        %v1727 = vsub.s32 4, %v1703
        %v1728 = vsel %vm1643, %v1727, %v1703
        %v1729 = vsel %vm1642, %v1537, %v1726
        %v1730 = vsel %vm1642, 0, %v1728
        %v1731 = vcosq.f32.pop %v1729
        %v1732 = vsinq.f32.pop %v1729
        %vm1733 = vweird.f32 %v1537
        %v1734 = vand.u32 %v1730, 3
        %vm1735 = vcmp.lt.s32.totalorder %v1734, 2
        %vm1736 = vcmp.eq.s32.totalorder %v1734, 0
        %v1737 = vxor.u32 %v1732, 2147483648
        %v1738 = vsel %vm1736, %v1731, %v1737
        %vm1739 = vcmp.eq.s32.totalorder %v1734, 2
        %v1740 = vxor.u32 %v1731, 2147483648
        %v1741 = vsel %vm1739, %v1740, %v1732
        %v1742 = vsel %vm1735, %v1738, %v1741
        %v1743 = vsel %vm1733, nan, %v1742
        %v1744 = vlaneseq
        %v1745 = vshrl.u32 %v1744, 7
        %v1746 = vsub.s32 1, %v1745
        %v1747 = vrot.slane %v1065, %v1746
        %v1748 = vmul.f32 %v1747, %v1640
        %v1749 = vmul.f32 %v1747, %v1743
        %v1750 = vand.u32 2147483647, %v1536
        %vm1751 = vcmp.le.f32.partialorder %v1750, 0.7853982
        %vm1752 = vcmp.lt.s32.totalorder %v1536, 0
        %v1753 = vand.u32 %v1536, 2139095040
        %v1754 = vshrl.u32 %v1753, 23
        %v1755 = vsub.s32 %v1754, 127
        %v1756 = vand.u32 2147483647, %v1536
        %v1757 = vand.u32 %v1756, 8388607
        %v1758 = vor.u32 %v1757, 8388608
        %v1759 = vsub.s32 0, %v1758
        %v1760 = vadd.s32 %v1755, 1
        %vm1761 = vcmp.gt.s32.totalorder %v1760, 0
        %v1762 = vsel %vm1761, %v1760, 0
        %v1763 = vshrl.u32 %v1762, 5
        %v1764 = vand.u32 %v1762, 31
        %v1765 = vsub.s32 32, %v1764
        %v1766 = vshrl.u32 683565275, %v1765
        %v1767 = vshll.u32 683565275, %v1764
        %v1768 = vshrl.u32 2475754826, %v1765
        %v1769 = vor.u32 %v1767, %v1768
        %v1770 = vshll.u32 2475754826, %v1764
        %v1771 = vshrl.u32 2131351028, %v1765
        %v1772 = vor.u32 %v1770, %v1771
        %v1773 = vshll.u32 2131351028, %v1764
        %v1774 = vshrl.u32 2102212464, %v1765
        %v1775 = vor.u32 %v1773, %v1774
        %v1776 = vshll.u32 2102212464, %v1764
        %v1777 = vshrl.u32 920167782, %v1765
        %v1778 = vor.u32 %v1776, %v1777
        %v1779 = vshll.u32 920167782, %v1764
        %v1780 = vshrl.u32 1326507024, %v1765
        %v1781 = vor.u32 %v1779, %v1780
        %vm1782 = vcmp.lt.s32.totalorder %v1763, 1
        %vm1783 = vcmp.lt.s32.totalorder %v1763, 2
        %vm1784 = vcmp.lt.s32.totalorder %v1763, 3
        %vm1785 = vcmp.lt.s32.totalorder %v1763, 4
        %v1786 = vsel %vm1782, %v1766, %v1769
        %v1787 = vsel %vm1785, %v1775, 2102212464
        %v1788 = vsel %vm1784, %v1772, %v1787
        %v1789 = vsel %vm1783, %v1786, %v1788
        %v1790 = vsel %vm1782, %v1769, %v1772
        %v1791 = vsel %vm1785, %v1778, 920167782
        %v1792 = vsel %vm1784, %v1775, %v1791
        %v1793 = vsel %vm1783, %v1790, %v1792
        %v1794 = vsel %vm1782, %v1772, %v1775
        %v1795 = vsel %vm1785, %v1781, 1326507024
        %v1796 = vsel %vm1784, %v1778, %v1795
        %v1797 = vsel %vm1783, %v1794, %v1796
        %v1798 = vshll.u32 %v1758, 8
        %v1799 = vmul.u32.u64.compose %v1798, %v1797
        %v1800 = vextract.low.u32 %v1799
        %v1801 = vextract.high.u32 %v1799
        %v1802 = vmul.u32.u64.compose %v1798, %v1793
        %v1803 = vextract.low.u32 %v1802
        %v1804 = vextract.high.u32 %v1802
        %v1805 = vmul.u32 %v1798, %v1789
        %v1806 = vadd.s32 %v1801, %v1803
        %vm1807 = vc.u32 %v1801, %v1803
        %v1808 = vadd.s32 %v1804, 1
        %v1809 = vsel %vm1807, %v1808, %v1804
        %v1810 = vadd.s32 %v1805, %v1809
        %v1811 = vadd.s32 %v1810, 536870912
        %v1812 = vshrl.u32 %v1811, 30
        %v1813 = vshll.u32 %v1812, 30
        %v1814 = vsub.s32 %v1810, %v1813
        %vm1815 = vcmp.lt.s32.totalorder %v1814, 0
        %v1816 = vsub.s32 0, %v1814
        %v1817 = vsel %vm1815, %v1816, %v1814
        %v1818 = vclz %v1817
        %v1819 = vsub.s32 %v1818, 2
        %vm1820 = vcmp.gt.s32.totalorder 0, %v1819
        %v1821 = vsel %vm1820, 0, %v1819
        %v1822 = vsub.s32 32, %v1821
        %v1823 = vshll.u32 %v1814, %v1821
        %v1824 = vshrl.u32 %v1806, %v1822
        %v1825 = vor.u32 %v1823, %v1824
        %v1826 = vsub.s32 4294967266, %v1821
        %v1827 = vadd.s32 %v1826, 127
        %v1828 = vshll.u32 %v1827, 23
        %v1829 = vor.u32 4788187, %v1828
        %v1830 = vand.u32 2147483647, %v1829
        %v1832 = vcvt.s32.f32 %v1825
        %v1833 = vmul.f32 %v1832, %v1830
        %v1834 = vxor.u32 %v1833, 2147483648
        %v1835 = vsel %vm1752, %v1834, %v1833
        %v1836 = vsub.s32 4, %v1812
        %v1837 = vsel %vm1752, %v1836, %v1812
        %v1838 = vsel %vm1751, %v1536, %v1835
        %v1839 = vsel %vm1751, 0, %v1837
        %v1840 = vcosq.f32.pop %v1838
        %v1841 = vsinq.f32.pop %v1838
        %vm1842 = vweird.f32 %v1536
        %v1843 = vadd.s32 %v1839, 3
        %v1844 = vand.u32 %v1843, 3
        %vm1845 = vcmp.lt.s32.totalorder %v1844, 2
        %vm1846 = vcmp.eq.s32.totalorder %v1844, 0
        %v1847 = vxor.u32 %v1841, 2147483648
        %v1848 = vsel %vm1846, %v1840, %v1847
        %vm1849 = vcmp.eq.s32.totalorder %v1844, 2
        %v1850 = vxor.u32 %v1840, 2147483648
        %v1851 = vsel %vm1849, %v1850, %v1841
        %v1852 = vsel %vm1845, %v1848, %v1851
        %v1853 = vsel %vm1842, nan, %v1852
        %v1854 = vand.u32 2147483647, %v1537
        %vm1855 = vcmp.le.f32.partialorder %v1854, 0.7853982
        %vm1856 = vcmp.lt.s32.totalorder %v1537, 0
        %v1857 = vand.u32 %v1537, 2139095040
        %v1858 = vshrl.u32 %v1857, 23
        %v1859 = vsub.s32 %v1858, 127
        %v1860 = vand.u32 2147483647, %v1537
        %v1861 = vand.u32 %v1860, 8388607
        %v1862 = vor.u32 %v1861, 8388608
        %v1863 = vsub.s32 0, %v1862
        %v1864 = vadd.s32 %v1859, 1
        %vm1865 = vcmp.gt.s32.totalorder %v1864, 0
        %v1866 = vsel %vm1865, %v1864, 0
        %v1867 = vshrl.u32 %v1866, 5
        %v1868 = vand.u32 %v1866, 31
        %v1869 = vsub.s32 32, %v1868
        %v1870 = vshrl.u32 683565275, %v1869
        %v1871 = vshll.u32 683565275, %v1868
        %v1872 = vshrl.u32 2475754826, %v1869
        %v1873 = vor.u32 %v1871, %v1872
        %v1874 = vshll.u32 2475754826, %v1868
        %v1875 = vshrl.u32 2131351028, %v1869
        %v1876 = vor.u32 %v1874, %v1875
        %v1877 = vshll.u32 2131351028, %v1868
        %v1878 = vshrl.u32 2102212464, %v1869
        %v1879 = vor.u32 %v1877, %v1878
        %v1880 = vshll.u32 2102212464, %v1868
        %v1881 = vshrl.u32 920167782, %v1869
        %v1882 = vor.u32 %v1880, %v1881
        %v1883 = vshll.u32 920167782, %v1868
        %v1884 = vshrl.u32 1326507024, %v1869
        %v1885 = vor.u32 %v1883, %v1884
        %vm1886 = vcmp.lt.s32.totalorder %v1867, 1
        %vm1887 = vcmp.lt.s32.totalorder %v1867, 2
        %vm1888 = vcmp.lt.s32.totalorder %v1867, 3
        %vm1889 = vcmp.lt.s32.totalorder %v1867, 4
        %v1890 = vsel %vm1886, %v1870, %v1873
        %v1891 = vsel %vm1889, %v1879, 2102212464
        %v1892 = vsel %vm1888, %v1876, %v1891
        %v1893 = vsel %vm1887, %v1890, %v1892
        %v1894 = vsel %vm1886, %v1873, %v1876
        %v1895 = vsel %vm1889, %v1882, 920167782
        %v1896 = vsel %vm1888, %v1879, %v1895
        %v1897 = vsel %vm1887, %v1894, %v1896
        %v1898 = vsel %vm1886, %v1876, %v1879
        %v1899 = vsel %vm1889, %v1885, 1326507024
        %v1900 = vsel %vm1888, %v1882, %v1899
        %v1901 = vsel %vm1887, %v1898, %v1900
        %v1902 = vshll.u32 %v1862, 8
        %v1903 = vmul.u32.u64.compose %v1902, %v1901
        %v1904 = vextract.low.u32 %v1903
        %v1905 = vextract.high.u32 %v1903
        %v1906 = vmul.u32.u64.compose %v1902, %v1897
        %v1907 = vextract.low.u32 %v1906
        %v1908 = vextract.high.u32 %v1906
        %v1909 = vmul.u32 %v1902, %v1893
        %v1910 = vadd.s32 %v1905, %v1907
        %vm1911 = vc.u32 %v1905, %v1907
        %v1912 = vadd.s32 %v1908, 1
        %v1913 = vsel %vm1911, %v1912, %v1908
        %v1914 = vadd.s32 %v1909, %v1913
        %v1915 = vadd.s32 %v1914, 536870912
        %v1916 = vshrl.u32 %v1915, 30
        %v1917 = vshll.u32 %v1916, 30
        %v1918 = vsub.s32 %v1914, %v1917
        %vm1919 = vcmp.lt.s32.totalorder %v1918, 0
        %v1920 = vsub.s32 0, %v1918
        %v1921 = vsel %vm1919, %v1920, %v1918
        %v1922 = vclz %v1921
        %v1923 = vsub.s32 %v1922, 2
        %vm1924 = vcmp.gt.s32.totalorder 0, %v1923
        %v1925 = vsel %vm1924, 0, %v1923
        %v1926 = vsub.s32 32, %v1925
        %v1927 = vshll.u32 %v1918, %v1925
        %v1928 = vshrl.u32 %v1910, %v1926
        %v1929 = vor.u32 %v1927, %v1928
        %v1930 = vsub.s32 4294967266, %v1925
        %v1931 = vadd.s32 %v1930, 127
        %v1932 = vshll.u32 %v1931, 23
        %v1933 = vor.u32 4788187, %v1932
        %v1934 = vand.u32 2147483647, %v1933
        %v1936 = vcvt.s32.f32 %v1929
        %v1937 = vmul.f32 %v1936, %v1934
        %v1938 = vxor.u32 %v1937, 2147483648
        %v1939 = vsel %vm1856, %v1938, %v1937
        %v1940 = vsub.s32 4, %v1916
        %v1941 = vsel %vm1856, %v1940, %v1916
        %v1942 = vsel %vm1855, %v1537, %v1939
        %v1943 = vsel %vm1855, 0, %v1941
        %v1944 = vcosq.f32.pop %v1942
        %v1945 = vsinq.f32.pop %v1942
        %vm1946 = vweird.f32 %v1537
        %v1947 = vadd.s32 %v1943, 3
        %v1948 = vand.u32 %v1947, 3
        %vm1949 = vcmp.lt.s32.totalorder %v1948, 2
        %vm1950 = vcmp.eq.s32.totalorder %v1948, 0
        %v1951 = vxor.u32 %v1945, 2147483648
        %v1952 = vsel %vm1950, %v1944, %v1951
        %vm1953 = vcmp.eq.s32.totalorder %v1948, 2
        %v1954 = vxor.u32 %v1944, 2147483648
        %v1955 = vsel %vm1953, %v1954, %v1945
        %v1956 = vsel %vm1949, %v1952, %v1955
        %v1957 = vsel %vm1946, nan, %v1956
        %v1958 = vlaneseq
        %v1959 = vshrl.u32 %v1958, 7
        %v1960 = vsub.s32 1, %v1959
        %v1961 = vrot.slane %v1068, %v1960
        %v1962 = vmul.f32 %v1961, %v1853
        %v1963 = vmul.f32 %v1961, %v1957
        %v1964 = vsub.f32 %v1748, %v1962
        %v1965 = vsub.f32 %v1749, %v1963
        %v1966 = vmul.f32 %v1529, %v1964
        %v1967 = vmul.f32 %v1531, %v1965
        %v1968 = vadd.f32 %v1520, %v1966
        %v1969 = vadd.f32 %v1521, %v1967
        %v1970 = vlaneseq
        %v1971 = vshrl.u32 %v1970, 7
        %v1972 = vsub.s32 2, %v1971
        %v1973 = vrot.slane %v835, %v1972
        %v1974 = vmul.f32 %v1072, %v1973
        %v1975 = vmul.f32 %v1073, %v1973
        %v1976 = vmul.f32 %v1974, 1.442695
        %v1977 = vpow.pop %v1976
        %v1978 = vmul.f32 %v1975, 1.442695
        %v1979 = vpow.pop %v1978
        %v1980 = vlaneseq
        %v1981 = vshrl.u32 %v1980, 7
        %v1982 = vsub.s32 2, %v1981
        %v1983 = vrot.slane %v836, %v1982
        %v1984 = vmul.f32 %v1072, %v1983
        %v1985 = vmul.f32 %v1073, %v1983
        %v1986 = vand.u32 2147483647, %v1984
        %vm1987 = vcmp.le.f32.partialorder %v1986, 0.7853982
        %vm1988 = vcmp.lt.s32.totalorder %v1984, 0
        %v1989 = vand.u32 %v1984, 2139095040
        %v1990 = vshrl.u32 %v1989, 23
        %v1991 = vsub.s32 %v1990, 127
        %v1992 = vand.u32 2147483647, %v1984
        %v1993 = vand.u32 %v1992, 8388607
        %v1994 = vor.u32 %v1993, 8388608
        %v1995 = vsub.s32 0, %v1994
        %v1996 = vadd.s32 %v1991, 1
        %vm1997 = vcmp.gt.s32.totalorder %v1996, 0
        %v1998 = vsel %vm1997, %v1996, 0
        %v1999 = vshrl.u32 %v1998, 5
        %v2000 = vand.u32 %v1998, 31
        %v2001 = vsub.s32 32, %v2000
        %v2002 = vshrl.u32 683565275, %v2001
        %v2003 = vshll.u32 683565275, %v2000
        %v2004 = vshrl.u32 2475754826, %v2001
        %v2005 = vor.u32 %v2003, %v2004
        %v2006 = vshll.u32 2475754826, %v2000
        %v2007 = vshrl.u32 2131351028, %v2001
        %v2008 = vor.u32 %v2006, %v2007
        %v2009 = vshll.u32 2131351028, %v2000
        %v2010 = vshrl.u32 2102212464, %v2001
        %v2011 = vor.u32 %v2009, %v2010
        %v2012 = vshll.u32 2102212464, %v2000
        %v2013 = vshrl.u32 920167782, %v2001
        %v2014 = vor.u32 %v2012, %v2013
        %v2015 = vshll.u32 920167782, %v2000
        %v2016 = vshrl.u32 1326507024, %v2001
        %v2017 = vor.u32 %v2015, %v2016
        %vm2018 = vcmp.lt.s32.totalorder %v1999, 1
        %vm2019 = vcmp.lt.s32.totalorder %v1999, 2
        %vm2020 = vcmp.lt.s32.totalorder %v1999, 3
        %vm2021 = vcmp.lt.s32.totalorder %v1999, 4
        %v2022 = vsel %vm2018, %v2002, %v2005
        %v2023 = vsel %vm2021, %v2011, 2102212464
        %v2024 = vsel %vm2020, %v2008, %v2023
        %v2025 = vsel %vm2019, %v2022, %v2024
        %v2026 = vsel %vm2018, %v2005, %v2008
        %v2027 = vsel %vm2021, %v2014, 920167782
        %v2028 = vsel %vm2020, %v2011, %v2027
        %v2029 = vsel %vm2019, %v2026, %v2028
        %v2030 = vsel %vm2018, %v2008, %v2011
        %v2031 = vsel %vm2021, %v2017, 1326507024
        %v2032 = vsel %vm2020, %v2014, %v2031
        %v2033 = vsel %vm2019, %v2030, %v2032
        %v2034 = vshll.u32 %v1994, 8
        %v2035 = vmul.u32.u64.compose %v2034, %v2033
        %v2036 = vextract.low.u32 %v2035
        %v2037 = vextract.high.u32 %v2035
        %v2038 = vmul.u32.u64.compose %v2034, %v2029
        %v2039 = vextract.low.u32 %v2038
        %v2040 = vextract.high.u32 %v2038
        %v2041 = vmul.u32 %v2034, %v2025
        %v2042 = vadd.s32 %v2037, %v2039
        %vm2043 = vc.u32 %v2037, %v2039
        %v2044 = vadd.s32 %v2040, 1
        %v2045 = vsel %vm2043, %v2044, %v2040
        %v2046 = vadd.s32 %v2041, %v2045
        %v2047 = vadd.s32 %v2046, 536870912
        %v2048 = vshrl.u32 %v2047, 30
        %v2049 = vshll.u32 %v2048, 30
        %v2050 = vsub.s32 %v2046, %v2049
        %vm2051 = vcmp.lt.s32.totalorder %v2050, 0
        %v2052 = vsub.s32 0, %v2050
        %v2053 = vsel %vm2051, %v2052, %v2050
        %v2054 = vclz %v2053
        %v2055 = vsub.s32 %v2054, 2
        %vm2056 = vcmp.gt.s32.totalorder 0, %v2055
        %v2057 = vsel %vm2056, 0, %v2055
        %v2058 = vsub.s32 32, %v2057
        %v2059 = vshll.u32 %v2050, %v2057
        %v2060 = vshrl.u32 %v2042, %v2058
        %v2061 = vor.u32 %v2059, %v2060
        %v2062 = vsub.s32 4294967266, %v2057
        %v2063 = vadd.s32 %v2062, 127
        %v2064 = vshll.u32 %v2063, 23
        %v2065 = vor.u32 4788187, %v2064
        %v2066 = vand.u32 2147483647, %v2065
        %v2068 = vcvt.s32.f32 %v2061
        %v2069 = vmul.f32 %v2068, %v2066
        %v2070 = vxor.u32 %v2069, 2147483648
        %v2071 = vsel %vm1988, %v2070, %v2069
        %v2072 = vsub.s32 4, %v2048
        %v2073 = vsel %vm1988, %v2072, %v2048
        %v2074 = vsel %vm1987, %v1984, %v2071
        %v2075 = vsel %vm1987, 0, %v2073
        %v2076 = vcosq.f32.pop %v2074
        %v2077 = vsinq.f32.pop %v2074
        %vm2078 = vweird.f32 %v1984
        %v2079 = vand.u32 %v2075, 3
        %vm2080 = vcmp.lt.s32.totalorder %v2079, 2
        %vm2081 = vcmp.eq.s32.totalorder %v2079, 0
        %v2082 = vxor.u32 %v2077, 2147483648
        %v2083 = vsel %vm2081, %v2076, %v2082
        %vm2084 = vcmp.eq.s32.totalorder %v2079, 2
        %v2085 = vxor.u32 %v2076, 2147483648
        %v2086 = vsel %vm2084, %v2085, %v2077
        %v2087 = vsel %vm2080, %v2083, %v2086
        %v2088 = vsel %vm2078, nan, %v2087
        %v2089 = vand.u32 2147483647, %v1985
        %vm2090 = vcmp.le.f32.partialorder %v2089, 0.7853982
        %vm2091 = vcmp.lt.s32.totalorder %v1985, 0
        %v2092 = vand.u32 %v1985, 2139095040
        %v2093 = vshrl.u32 %v2092, 23
        %v2094 = vsub.s32 %v2093, 127
        %v2095 = vand.u32 2147483647, %v1985
        %v2096 = vand.u32 %v2095, 8388607
        %v2097 = vor.u32 %v2096, 8388608
        %v2098 = vsub.s32 0, %v2097
        %v2099 = vadd.s32 %v2094, 1
        %vm2100 = vcmp.gt.s32.totalorder %v2099, 0
        %v2101 = vsel %vm2100, %v2099, 0
        %v2102 = vshrl.u32 %v2101, 5
        %v2103 = vand.u32 %v2101, 31
        %v2104 = vsub.s32 32, %v2103
        %v2105 = vshrl.u32 683565275, %v2104
        %v2106 = vshll.u32 683565275, %v2103
        %v2107 = vshrl.u32 2475754826, %v2104
        %v2108 = vor.u32 %v2106, %v2107
        %v2109 = vshll.u32 2475754826, %v2103
        %v2110 = vshrl.u32 2131351028, %v2104
        %v2111 = vor.u32 %v2109, %v2110
        %v2112 = vshll.u32 2131351028, %v2103
        %v2113 = vshrl.u32 2102212464, %v2104
        %v2114 = vor.u32 %v2112, %v2113
        %v2115 = vshll.u32 2102212464, %v2103
        %v2116 = vshrl.u32 920167782, %v2104
        %v2117 = vor.u32 %v2115, %v2116
        %v2118 = vshll.u32 920167782, %v2103
        %v2119 = vshrl.u32 1326507024, %v2104
        %v2120 = vor.u32 %v2118, %v2119
        %vm2121 = vcmp.lt.s32.totalorder %v2102, 1
        %vm2122 = vcmp.lt.s32.totalorder %v2102, 2
        %vm2123 = vcmp.lt.s32.totalorder %v2102, 3
        %vm2124 = vcmp.lt.s32.totalorder %v2102, 4
        %v2125 = vsel %vm2121, %v2105, %v2108
        %v2126 = vsel %vm2124, %v2114, 2102212464
        %v2127 = vsel %vm2123, %v2111, %v2126
        %v2128 = vsel %vm2122, %v2125, %v2127
        %v2129 = vsel %vm2121, %v2108, %v2111
        %v2130 = vsel %vm2124, %v2117, 920167782
        %v2131 = vsel %vm2123, %v2114, %v2130
        %v2132 = vsel %vm2122, %v2129, %v2131
        %v2133 = vsel %vm2121, %v2111, %v2114
        %v2134 = vsel %vm2124, %v2120, 1326507024
        %v2135 = vsel %vm2123, %v2117, %v2134
        %v2136 = vsel %vm2122, %v2133, %v2135
        %v2137 = vshll.u32 %v2097, 8
        %v2138 = vmul.u32.u64.compose %v2137, %v2136
        %v2139 = vextract.low.u32 %v2138
        %v2140 = vextract.high.u32 %v2138
        %v2141 = vmul.u32.u64.compose %v2137, %v2132
        %v2142 = vextract.low.u32 %v2141
        %v2143 = vextract.high.u32 %v2141
        %v2144 = vmul.u32 %v2137, %v2128
        %v2145 = vadd.s32 %v2140, %v2142
        %vm2146 = vc.u32 %v2140, %v2142
        %v2147 = vadd.s32 %v2143, 1
        %v2148 = vsel %vm2146, %v2147, %v2143
        %v2149 = vadd.s32 %v2144, %v2148
        %v2150 = vadd.s32 %v2149, 536870912
        %v2151 = vshrl.u32 %v2150, 30
        %v2152 = vshll.u32 %v2151, 30
        %v2153 = vsub.s32 %v2149, %v2152
        %vm2154 = vcmp.lt.s32.totalorder %v2153, 0
        %v2155 = vsub.s32 0, %v2153
        %v2156 = vsel %vm2154, %v2155, %v2153
        %v2157 = vclz %v2156
        %v2158 = vsub.s32 %v2157, 2
        %vm2159 = vcmp.gt.s32.totalorder 0, %v2158
        %v2160 = vsel %vm2159, 0, %v2158
        %v2161 = vsub.s32 32, %v2160
        %v2162 = vshll.u32 %v2153, %v2160
        %v2163 = vshrl.u32 %v2145, %v2161
        %v2164 = vor.u32 %v2162, %v2163
        %v2165 = vsub.s32 4294967266, %v2160
        %v2166 = vadd.s32 %v2165, 127
        %v2167 = vshll.u32 %v2166, 23
        %v2168 = vor.u32 4788187, %v2167
        %v2169 = vand.u32 2147483647, %v2168
        %v2171 = vcvt.s32.f32 %v2164
        %v2172 = vmul.f32 %v2171, %v2169
        %v2173 = vxor.u32 %v2172, 2147483648
        %v2174 = vsel %vm2091, %v2173, %v2172
        %v2175 = vsub.s32 4, %v2151
        %v2176 = vsel %vm2091, %v2175, %v2151
        %v2177 = vsel %vm2090, %v1985, %v2174
        %v2178 = vsel %vm2090, 0, %v2176
        %v2179 = vcosq.f32.pop %v2177
        %v2180 = vsinq.f32.pop %v2177
        %vm2181 = vweird.f32 %v1985
        %v2182 = vand.u32 %v2178, 3
        %vm2183 = vcmp.lt.s32.totalorder %v2182, 2
        %vm2184 = vcmp.eq.s32.totalorder %v2182, 0
        %v2185 = vxor.u32 %v2180, 2147483648
        %v2186 = vsel %vm2184, %v2179, %v2185
        %vm2187 = vcmp.eq.s32.totalorder %v2182, 2
        %v2188 = vxor.u32 %v2179, 2147483648
        %v2189 = vsel %vm2187, %v2188, %v2180
        %v2190 = vsel %vm2183, %v2186, %v2189
        %v2191 = vsel %vm2181, nan, %v2190
        %v2192 = vlaneseq
        %v2193 = vshrl.u32 %v2192, 7
        %v2194 = vsub.s32 2, %v2193
        %v2195 = vrot.slane %v1065, %v2194
        %v2196 = vmul.f32 %v2195, %v2088
        %v2197 = vmul.f32 %v2195, %v2191
        %v2198 = vand.u32 2147483647, %v1984
        %vm2199 = vcmp.le.f32.partialorder %v2198, 0.7853982
        %vm2200 = vcmp.lt.s32.totalorder %v1984, 0
        %v2201 = vand.u32 %v1984, 2139095040
        %v2202 = vshrl.u32 %v2201, 23
        %v2203 = vsub.s32 %v2202, 127
        %v2204 = vand.u32 2147483647, %v1984
        %v2205 = vand.u32 %v2204, 8388607
        %v2206 = vor.u32 %v2205, 8388608
        %v2207 = vsub.s32 0, %v2206
        %v2208 = vadd.s32 %v2203, 1
        %vm2209 = vcmp.gt.s32.totalorder %v2208, 0
        %v2210 = vsel %vm2209, %v2208, 0
        %v2211 = vshrl.u32 %v2210, 5
        %v2212 = vand.u32 %v2210, 31
        %v2213 = vsub.s32 32, %v2212
        %v2214 = vshrl.u32 683565275, %v2213
        %v2215 = vshll.u32 683565275, %v2212
        %v2216 = vshrl.u32 2475754826, %v2213
        %v2217 = vor.u32 %v2215, %v2216
        %v2218 = vshll.u32 2475754826, %v2212
        %v2219 = vshrl.u32 2131351028, %v2213
        %v2220 = vor.u32 %v2218, %v2219
        %v2221 = vshll.u32 2131351028, %v2212
        %v2222 = vshrl.u32 2102212464, %v2213
        %v2223 = vor.u32 %v2221, %v2222
        %v2224 = vshll.u32 2102212464, %v2212
        %v2225 = vshrl.u32 920167782, %v2213
        %v2226 = vor.u32 %v2224, %v2225
        %v2227 = vshll.u32 920167782, %v2212
        %v2228 = vshrl.u32 1326507024, %v2213
        %v2229 = vor.u32 %v2227, %v2228
        %vm2230 = vcmp.lt.s32.totalorder %v2211, 1
        %vm2231 = vcmp.lt.s32.totalorder %v2211, 2
        %vm2232 = vcmp.lt.s32.totalorder %v2211, 3
        %vm2233 = vcmp.lt.s32.totalorder %v2211, 4
        %v2234 = vsel %vm2230, %v2214, %v2217
        %v2235 = vsel %vm2233, %v2223, 2102212464
        %v2236 = vsel %vm2232, %v2220, %v2235
        %v2237 = vsel %vm2231, %v2234, %v2236
        %v2238 = vsel %vm2230, %v2217, %v2220
        %v2239 = vsel %vm2233, %v2226, 920167782
        %v2240 = vsel %vm2232, %v2223, %v2239
        %v2241 = vsel %vm2231, %v2238, %v2240
        %v2242 = vsel %vm2230, %v2220, %v2223
        %v2243 = vsel %vm2233, %v2229, 1326507024
        %v2244 = vsel %vm2232, %v2226, %v2243
        %v2245 = vsel %vm2231, %v2242, %v2244
        %v2246 = vshll.u32 %v2206, 8
        %v2247 = vmul.u32.u64.compose %v2246, %v2245
        %v2248 = vextract.low.u32 %v2247
        %v2249 = vextract.high.u32 %v2247
        %v2250 = vmul.u32.u64.compose %v2246, %v2241
        %v2251 = vextract.low.u32 %v2250
        %v2252 = vextract.high.u32 %v2250
        %v2253 = vmul.u32 %v2246, %v2237
        %v2254 = vadd.s32 %v2249, %v2251
        %vm2255 = vc.u32 %v2249, %v2251
        %v2256 = vadd.s32 %v2252, 1
        %v2257 = vsel %vm2255, %v2256, %v2252
        %v2258 = vadd.s32 %v2253, %v2257
        %v2259 = vadd.s32 %v2258, 536870912
        %v2260 = vshrl.u32 %v2259, 30
        %v2261 = vshll.u32 %v2260, 30
        %v2262 = vsub.s32 %v2258, %v2261
        %vm2263 = vcmp.lt.s32.totalorder %v2262, 0
        %v2264 = vsub.s32 0, %v2262
        %v2265 = vsel %vm2263, %v2264, %v2262
        %v2266 = vclz %v2265
        %v2267 = vsub.s32 %v2266, 2
        %vm2268 = vcmp.gt.s32.totalorder 0, %v2267
        %v2269 = vsel %vm2268, 0, %v2267
        %v2270 = vsub.s32 32, %v2269
        %v2271 = vshll.u32 %v2262, %v2269
        %v2272 = vshrl.u32 %v2254, %v2270
        %v2273 = vor.u32 %v2271, %v2272
        %v2274 = vsub.s32 4294967266, %v2269
        %v2275 = vadd.s32 %v2274, 127
        %v2276 = vshll.u32 %v2275, 23
        %v2277 = vor.u32 4788187, %v2276
        %v2278 = vand.u32 2147483647, %v2277
        %v2280 = vcvt.s32.f32 %v2273
        %v2281 = vmul.f32 %v2280, %v2278
        %v2282 = vxor.u32 %v2281, 2147483648
        %v2283 = vsel %vm2200, %v2282, %v2281
        %v2284 = vsub.s32 4, %v2260
        %v2285 = vsel %vm2200, %v2284, %v2260
        %v2286 = vsel %vm2199, %v1984, %v2283
        %v2287 = vsel %vm2199, 0, %v2285
        %v2288 = vcosq.f32.pop %v2286
        %v2289 = vsinq.f32.pop %v2286
        %vm2290 = vweird.f32 %v1984
        %v2291 = vadd.s32 %v2287, 3
        %v2292 = vand.u32 %v2291, 3
        %vm2293 = vcmp.lt.s32.totalorder %v2292, 2
        %vm2294 = vcmp.eq.s32.totalorder %v2292, 0
        %v2295 = vxor.u32 %v2289, 2147483648
        %v2296 = vsel %vm2294, %v2288, %v2295
        %vm2297 = vcmp.eq.s32.totalorder %v2292, 2
        %v2298 = vxor.u32 %v2288, 2147483648
        %v2299 = vsel %vm2297, %v2298, %v2289
        %v2300 = vsel %vm2293, %v2296, %v2299
        %v2301 = vsel %vm2290, nan, %v2300
        %v2302 = vand.u32 2147483647, %v1985
        %vm2303 = vcmp.le.f32.partialorder %v2302, 0.7853982
        %vm2304 = vcmp.lt.s32.totalorder %v1985, 0
        %v2305 = vand.u32 %v1985, 2139095040
        %v2306 = vshrl.u32 %v2305, 23
        %v2307 = vsub.s32 %v2306, 127
        %v2308 = vand.u32 2147483647, %v1985
        %v2309 = vand.u32 %v2308, 8388607
        %v2310 = vor.u32 %v2309, 8388608
        %v2311 = vsub.s32 0, %v2310
        %v2312 = vadd.s32 %v2307, 1
        %vm2313 = vcmp.gt.s32.totalorder %v2312, 0
        %v2314 = vsel %vm2313, %v2312, 0
        %v2315 = vshrl.u32 %v2314, 5
        %v2316 = vand.u32 %v2314, 31
        %v2317 = vsub.s32 32, %v2316
        %v2318 = vshrl.u32 683565275, %v2317
        %v2319 = vshll.u32 683565275, %v2316
        %v2320 = vshrl.u32 2475754826, %v2317
        %v2321 = vor.u32 %v2319, %v2320
        %v2322 = vshll.u32 2475754826, %v2316
        %v2323 = vshrl.u32 2131351028, %v2317
        %v2324 = vor.u32 %v2322, %v2323
        %v2325 = vshll.u32 2131351028, %v2316
        %v2326 = vshrl.u32 2102212464, %v2317
        %v2327 = vor.u32 %v2325, %v2326
        %v2328 = vshll.u32 2102212464, %v2316
        %v2329 = vshrl.u32 920167782, %v2317
        %v2330 = vor.u32 %v2328, %v2329
        %v2331 = vshll.u32 920167782, %v2316
        %v2332 = vshrl.u32 1326507024, %v2317
        %v2333 = vor.u32 %v2331, %v2332
        %vm2334 = vcmp.lt.s32.totalorder %v2315, 1
        %vm2335 = vcmp.lt.s32.totalorder %v2315, 2
        %vm2336 = vcmp.lt.s32.totalorder %v2315, 3
        %vm2337 = vcmp.lt.s32.totalorder %v2315, 4
        %v2338 = vsel %vm2334, %v2318, %v2321
        %v2339 = vsel %vm2337, %v2327, 2102212464
        %v2340 = vsel %vm2336, %v2324, %v2339
        %v2341 = vsel %vm2335, %v2338, %v2340
        %v2342 = vsel %vm2334, %v2321, %v2324
        %v2343 = vsel %vm2337, %v2330, 920167782
        %v2344 = vsel %vm2336, %v2327, %v2343
        %v2345 = vsel %vm2335, %v2342, %v2344
        %v2346 = vsel %vm2334, %v2324, %v2327
        %v2347 = vsel %vm2337, %v2333, 1326507024
        %v2348 = vsel %vm2336, %v2330, %v2347
        %v2349 = vsel %vm2335, %v2346, %v2348
        %v2350 = vshll.u32 %v2310, 8
        %v2351 = vmul.u32.u64.compose %v2350, %v2349
        %v2352 = vextract.low.u32 %v2351
        %v2353 = vextract.high.u32 %v2351
        %v2354 = vmul.u32.u64.compose %v2350, %v2345
        %v2355 = vextract.low.u32 %v2354
        %v2356 = vextract.high.u32 %v2354
        %v2357 = vmul.u32 %v2350, %v2341
        %v2358 = vadd.s32 %v2353, %v2355
        %vm2359 = vc.u32 %v2353, %v2355
        %v2360 = vadd.s32 %v2356, 1
        %v2361 = vsel %vm2359, %v2360, %v2356
        %v2362 = vadd.s32 %v2357, %v2361
        %v2363 = vadd.s32 %v2362, 536870912
        %v2364 = vshrl.u32 %v2363, 30
        %v2365 = vshll.u32 %v2364, 30
        %v2366 = vsub.s32 %v2362, %v2365
        %vm2367 = vcmp.lt.s32.totalorder %v2366, 0
        %v2368 = vsub.s32 0, %v2366
        %v2369 = vsel %vm2367, %v2368, %v2366
        %v2370 = vclz %v2369
        %v2371 = vsub.s32 %v2370, 2
        %vm2372 = vcmp.gt.s32.totalorder 0, %v2371
        %v2373 = vsel %vm2372, 0, %v2371
        %v2374 = vsub.s32 32, %v2373
        %v2375 = vshll.u32 %v2366, %v2373
        %v2376 = vshrl.u32 %v2358, %v2374
        %v2377 = vor.u32 %v2375, %v2376
        %v2378 = vsub.s32 4294967266, %v2373
        %v2379 = vadd.s32 %v2378, 127
        %v2380 = vshll.u32 %v2379, 23
        %v2381 = vor.u32 4788187, %v2380
        %v2382 = vand.u32 2147483647, %v2381
        %v2384 = vcvt.s32.f32 %v2377
        %v2385 = vmul.f32 %v2384, %v2382
        %v2386 = vxor.u32 %v2385, 2147483648
        %v2387 = vsel %vm2304, %v2386, %v2385
        %v2388 = vsub.s32 4, %v2364
        %v2389 = vsel %vm2304, %v2388, %v2364
        %v2390 = vsel %vm2303, %v1985, %v2387
        %v2391 = vsel %vm2303, 0, %v2389
        %v2392 = vcosq.f32.pop %v2390
        %v2393 = vsinq.f32.pop %v2390
        %vm2394 = vweird.f32 %v1985
        %v2395 = vadd.s32 %v2391, 3
        %v2396 = vand.u32 %v2395, 3
        %vm2397 = vcmp.lt.s32.totalorder %v2396, 2
        %vm2398 = vcmp.eq.s32.totalorder %v2396, 0
        %v2399 = vxor.u32 %v2393, 2147483648
        %v2400 = vsel %vm2398, %v2392, %v2399
        %vm2401 = vcmp.eq.s32.totalorder %v2396, 2
        %v2402 = vxor.u32 %v2392, 2147483648
        %v2403 = vsel %vm2401, %v2402, %v2393
        %v2404 = vsel %vm2397, %v2400, %v2403
        %v2405 = vsel %vm2394, nan, %v2404
        %v2406 = vlaneseq
        %v2407 = vshrl.u32 %v2406, 7
        %v2408 = vsub.s32 2, %v2407
        %v2409 = vrot.slane %v1068, %v2408
        %v2410 = vmul.f32 %v2409, %v2301
        %v2411 = vmul.f32 %v2409, %v2405
        %v2412 = vsub.f32 %v2196, %v2410
        %v2413 = vsub.f32 %v2197, %v2411
        %v2414 = vmul.f32 %v1977, %v2412
        %v2415 = vmul.f32 %v1979, %v2413
        %v2416 = vadd.f32 %v1968, %v2414
        %v2417 = vadd.f32 %v1969, %v2415
        %v2418 = vlaneseq
        %v2419 = vshrl.u32 %v2418, 7
        %v2420 = vsub.s32 3, %v2419
        %v2421 = vrot.slane %v835, %v2420
        %v2422 = vmul.f32 %v1072, %v2421
        %v2423 = vmul.f32 %v1073, %v2421
        %v2424 = vmul.f32 %v2422, 1.442695
        %v2425 = vpow.pop %v2424
        %v2426 = vmul.f32 %v2423, 1.442695
        %v2427 = vpow.pop %v2426
        %v2428 = vlaneseq
        %v2429 = vshrl.u32 %v2428, 7
        %v2430 = vsub.s32 3, %v2429
        %v2431 = vrot.slane %v836, %v2430
        %v2432 = vmul.f32 %v1072, %v2431
        %v2433 = vmul.f32 %v1073, %v2431
        %v2434 = vand.u32 2147483647, %v2432
        %vm2435 = vcmp.le.f32.partialorder %v2434, 0.7853982
        %vm2436 = vcmp.lt.s32.totalorder %v2432, 0
        %v2437 = vand.u32 %v2432, 2139095040
        %v2438 = vshrl.u32 %v2437, 23
        %v2439 = vsub.s32 %v2438, 127
        %v2440 = vand.u32 2147483647, %v2432
        %v2441 = vand.u32 %v2440, 8388607
        %v2442 = vor.u32 %v2441, 8388608
        %v2443 = vsub.s32 0, %v2442
        %v2444 = vadd.s32 %v2439, 1
        %vm2445 = vcmp.gt.s32.totalorder %v2444, 0
        %v2446 = vsel %vm2445, %v2444, 0
        %v2447 = vshrl.u32 %v2446, 5
        %v2448 = vand.u32 %v2446, 31
        %v2449 = vsub.s32 32, %v2448
        %v2450 = vshrl.u32 683565275, %v2449
        %v2451 = vshll.u32 683565275, %v2448
        %v2452 = vshrl.u32 2475754826, %v2449
        %v2453 = vor.u32 %v2451, %v2452
        %v2454 = vshll.u32 2475754826, %v2448
        %v2455 = vshrl.u32 2131351028, %v2449
        %v2456 = vor.u32 %v2454, %v2455
        %v2457 = vshll.u32 2131351028, %v2448
        %v2458 = vshrl.u32 2102212464, %v2449
        %v2459 = vor.u32 %v2457, %v2458
        %v2460 = vshll.u32 2102212464, %v2448
        %v2461 = vshrl.u32 920167782, %v2449
        %v2462 = vor.u32 %v2460, %v2461
        %v2463 = vshll.u32 920167782, %v2448
        %v2464 = vshrl.u32 1326507024, %v2449
        %v2465 = vor.u32 %v2463, %v2464
        %vm2466 = vcmp.lt.s32.totalorder %v2447, 1
        %vm2467 = vcmp.lt.s32.totalorder %v2447, 2
        %vm2468 = vcmp.lt.s32.totalorder %v2447, 3
        %vm2469 = vcmp.lt.s32.totalorder %v2447, 4
        %v2470 = vsel %vm2466, %v2450, %v2453
        %v2471 = vsel %vm2469, %v2459, 2102212464
        %v2472 = vsel %vm2468, %v2456, %v2471
        %v2473 = vsel %vm2467, %v2470, %v2472
        %v2474 = vsel %vm2466, %v2453, %v2456
        %v2475 = vsel %vm2469, %v2462, 920167782
        %v2476 = vsel %vm2468, %v2459, %v2475
        %v2477 = vsel %vm2467, %v2474, %v2476
        %v2478 = vsel %vm2466, %v2456, %v2459
        %v2479 = vsel %vm2469, %v2465, 1326507024
        %v2480 = vsel %vm2468, %v2462, %v2479
        %v2481 = vsel %vm2467, %v2478, %v2480
        %v2482 = vshll.u32 %v2442, 8
        %v2483 = vmul.u32.u64.compose %v2482, %v2481
        %v2484 = vextract.low.u32 %v2483
        %v2485 = vextract.high.u32 %v2483
        %v2486 = vmul.u32.u64.compose %v2482, %v2477
        %v2487 = vextract.low.u32 %v2486
        %v2488 = vextract.high.u32 %v2486
        %v2489 = vmul.u32 %v2482, %v2473
        %v2490 = vadd.s32 %v2485, %v2487
        %vm2491 = vc.u32 %v2485, %v2487
        %v2492 = vadd.s32 %v2488, 1
        %v2493 = vsel %vm2491, %v2492, %v2488
        %v2494 = vadd.s32 %v2489, %v2493
        %v2495 = vadd.s32 %v2494, 536870912
        %v2496 = vshrl.u32 %v2495, 30
        %v2497 = vshll.u32 %v2496, 30
        %v2498 = vsub.s32 %v2494, %v2497
        %vm2499 = vcmp.lt.s32.totalorder %v2498, 0
        %v2500 = vsub.s32 0, %v2498
        %v2501 = vsel %vm2499, %v2500, %v2498
        %v2502 = vclz %v2501
        %v2503 = vsub.s32 %v2502, 2
        %vm2504 = vcmp.gt.s32.totalorder 0, %v2503
        %v2505 = vsel %vm2504, 0, %v2503
        %v2506 = vsub.s32 32, %v2505
        %v2507 = vshll.u32 %v2498, %v2505
        %v2508 = vshrl.u32 %v2490, %v2506
        %v2509 = vor.u32 %v2507, %v2508
        %v2510 = vsub.s32 4294967266, %v2505
        %v2511 = vadd.s32 %v2510, 127
        %v2512 = vshll.u32 %v2511, 23
        %v2513 = vor.u32 4788187, %v2512
        %v2514 = vand.u32 2147483647, %v2513
        %v2516 = vcvt.s32.f32 %v2509
        %v2517 = vmul.f32 %v2516, %v2514
        %v2518 = vxor.u32 %v2517, 2147483648
        %v2519 = vsel %vm2436, %v2518, %v2517
        %v2520 = vsub.s32 4, %v2496
        %v2521 = vsel %vm2436, %v2520, %v2496
        %v2522 = vsel %vm2435, %v2432, %v2519
        %v2523 = vsel %vm2435, 0, %v2521
        %v2524 = vcosq.f32.pop %v2522
        %v2525 = vsinq.f32.pop %v2522
        %vm2526 = vweird.f32 %v2432
        %v2527 = vand.u32 %v2523, 3
        %vm2528 = vcmp.lt.s32.totalorder %v2527, 2
        %vm2529 = vcmp.eq.s32.totalorder %v2527, 0
        %v2530 = vxor.u32 %v2525, 2147483648
        %v2531 = vsel %vm2529, %v2524, %v2530
        %vm2532 = vcmp.eq.s32.totalorder %v2527, 2
        %v2533 = vxor.u32 %v2524, 2147483648
        %v2534 = vsel %vm2532, %v2533, %v2525
        %v2535 = vsel %vm2528, %v2531, %v2534
        %v2536 = vsel %vm2526, nan, %v2535
        %v2537 = vand.u32 2147483647, %v2433
        %vm2538 = vcmp.le.f32.partialorder %v2537, 0.7853982
        %vm2539 = vcmp.lt.s32.totalorder %v2433, 0
        %v2540 = vand.u32 %v2433, 2139095040
        %v2541 = vshrl.u32 %v2540, 23
        %v2542 = vsub.s32 %v2541, 127
        %v2543 = vand.u32 2147483647, %v2433
        %v2544 = vand.u32 %v2543, 8388607
        %v2545 = vor.u32 %v2544, 8388608
        %v2546 = vsub.s32 0, %v2545
        %v2547 = vadd.s32 %v2542, 1
        %vm2548 = vcmp.gt.s32.totalorder %v2547, 0
        %v2549 = vsel %vm2548, %v2547, 0
        %v2550 = vshrl.u32 %v2549, 5
        %v2551 = vand.u32 %v2549, 31
        %v2552 = vsub.s32 32, %v2551
        %v2553 = vshrl.u32 683565275, %v2552
        %v2554 = vshll.u32 683565275, %v2551
        %v2555 = vshrl.u32 2475754826, %v2552
        %v2556 = vor.u32 %v2554, %v2555
        %v2557 = vshll.u32 2475754826, %v2551
        %v2558 = vshrl.u32 2131351028, %v2552
        %v2559 = vor.u32 %v2557, %v2558
        %v2560 = vshll.u32 2131351028, %v2551
        %v2561 = vshrl.u32 2102212464, %v2552
        %v2562 = vor.u32 %v2560, %v2561
        %v2563 = vshll.u32 2102212464, %v2551
        %v2564 = vshrl.u32 920167782, %v2552
        %v2565 = vor.u32 %v2563, %v2564
        %v2566 = vshll.u32 920167782, %v2551
        %v2567 = vshrl.u32 1326507024, %v2552
        %v2568 = vor.u32 %v2566, %v2567
        %vm2569 = vcmp.lt.s32.totalorder %v2550, 1
        %vm2570 = vcmp.lt.s32.totalorder %v2550, 2
        %vm2571 = vcmp.lt.s32.totalorder %v2550, 3
        %vm2572 = vcmp.lt.s32.totalorder %v2550, 4
        %v2573 = vsel %vm2569, %v2553, %v2556
        %v2574 = vsel %vm2572, %v2562, 2102212464
        %v2575 = vsel %vm2571, %v2559, %v2574
        %v2576 = vsel %vm2570, %v2573, %v2575
        %v2577 = vsel %vm2569, %v2556, %v2559
        %v2578 = vsel %vm2572, %v2565, 920167782
        %v2579 = vsel %vm2571, %v2562, %v2578
        %v2580 = vsel %vm2570, %v2577, %v2579
        %v2581 = vsel %vm2569, %v2559, %v2562
        %v2582 = vsel %vm2572, %v2568, 1326507024
        %v2583 = vsel %vm2571, %v2565, %v2582
        %v2584 = vsel %vm2570, %v2581, %v2583
        %v2585 = vshll.u32 %v2545, 8
        %v2586 = vmul.u32.u64.compose %v2585, %v2584
        %v2587 = vextract.low.u32 %v2586
        %v2588 = vextract.high.u32 %v2586
        %v2589 = vmul.u32.u64.compose %v2585, %v2580
        %v2590 = vextract.low.u32 %v2589
        %v2591 = vextract.high.u32 %v2589
        %v2592 = vmul.u32 %v2585, %v2576
        %v2593 = vadd.s32 %v2588, %v2590
        %vm2594 = vc.u32 %v2588, %v2590
        %v2595 = vadd.s32 %v2591, 1
        %v2596 = vsel %vm2594, %v2595, %v2591
        %v2597 = vadd.s32 %v2592, %v2596
        %v2598 = vadd.s32 %v2597, 536870912
        %v2599 = vshrl.u32 %v2598, 30
        %v2600 = vshll.u32 %v2599, 30
        %v2601 = vsub.s32 %v2597, %v2600
        %vm2602 = vcmp.lt.s32.totalorder %v2601, 0
        %v2603 = vsub.s32 0, %v2601
        %v2604 = vsel %vm2602, %v2603, %v2601
        %v2605 = vclz %v2604
        %v2606 = vsub.s32 %v2605, 2
        %vm2607 = vcmp.gt.s32.totalorder 0, %v2606
        %v2608 = vsel %vm2607, 0, %v2606
        %v2609 = vsub.s32 32, %v2608
        %v2610 = vshll.u32 %v2601, %v2608
        %v2611 = vshrl.u32 %v2593, %v2609
        %v2612 = vor.u32 %v2610, %v2611
        %v2613 = vsub.s32 4294967266, %v2608
        %v2614 = vadd.s32 %v2613, 127
        %v2615 = vshll.u32 %v2614, 23
        %v2616 = vor.u32 4788187, %v2615
        %v2617 = vand.u32 2147483647, %v2616
        %v2619 = vcvt.s32.f32 %v2612
        %v2620 = vmul.f32 %v2619, %v2617
        %v2621 = vxor.u32 %v2620, 2147483648
        %v2622 = vsel %vm2539, %v2621, %v2620
        %v2623 = vsub.s32 4, %v2599
        %v2624 = vsel %vm2539, %v2623, %v2599
        %v2625 = vsel %vm2538, %v2433, %v2622
        %v2626 = vsel %vm2538, 0, %v2624
        %v2627 = vcosq.f32.pop %v2625
        %v2628 = vsinq.f32.pop %v2625
        %vm2629 = vweird.f32 %v2433
        %v2630 = vand.u32 %v2626, 3
        %vm2631 = vcmp.lt.s32.totalorder %v2630, 2
        %vm2632 = vcmp.eq.s32.totalorder %v2630, 0
        %v2633 = vxor.u32 %v2628, 2147483648
        %v2634 = vsel %vm2632, %v2627, %v2633
        %vm2635 = vcmp.eq.s32.totalorder %v2630, 2
        %v2636 = vxor.u32 %v2627, 2147483648
        %v2637 = vsel %vm2635, %v2636, %v2628
        %v2638 = vsel %vm2631, %v2634, %v2637
        %v2639 = vsel %vm2629, nan, %v2638
        %v2640 = vlaneseq
        %v2641 = vshrl.u32 %v2640, 7
        %v2642 = vsub.s32 3, %v2641
        %v2643 = vrot.slane %v1065, %v2642
        %v2644 = vmul.f32 %v2643, %v2536
        %v2645 = vmul.f32 %v2643, %v2639
        %v2646 = vand.u32 2147483647, %v2432
        %vm2647 = vcmp.le.f32.partialorder %v2646, 0.7853982
        %vm2648 = vcmp.lt.s32.totalorder %v2432, 0
        %v2649 = vand.u32 %v2432, 2139095040
        %v2650 = vshrl.u32 %v2649, 23
        %v2651 = vsub.s32 %v2650, 127
        %v2652 = vand.u32 2147483647, %v2432
        %v2653 = vand.u32 %v2652, 8388607
        %v2654 = vor.u32 %v2653, 8388608
        %v2655 = vsub.s32 0, %v2654
        %v2656 = vadd.s32 %v2651, 1
        %vm2657 = vcmp.gt.s32.totalorder %v2656, 0
        %v2658 = vsel %vm2657, %v2656, 0
        %v2659 = vshrl.u32 %v2658, 5
        %v2660 = vand.u32 %v2658, 31
        %v2661 = vsub.s32 32, %v2660
        %v2662 = vshrl.u32 683565275, %v2661
        %v2663 = vshll.u32 683565275, %v2660
        %v2664 = vshrl.u32 2475754826, %v2661
        %v2665 = vor.u32 %v2663, %v2664
        %v2666 = vshll.u32 2475754826, %v2660
        %v2667 = vshrl.u32 2131351028, %v2661
        %v2668 = vor.u32 %v2666, %v2667
        %v2669 = vshll.u32 2131351028, %v2660
        %v2670 = vshrl.u32 2102212464, %v2661
        %v2671 = vor.u32 %v2669, %v2670
        %v2672 = vshll.u32 2102212464, %v2660
        %v2673 = vshrl.u32 920167782, %v2661
        %v2674 = vor.u32 %v2672, %v2673
        %v2675 = vshll.u32 920167782, %v2660
        %v2676 = vshrl.u32 1326507024, %v2661
        %v2677 = vor.u32 %v2675, %v2676
        %vm2678 = vcmp.lt.s32.totalorder %v2659, 1
        %vm2679 = vcmp.lt.s32.totalorder %v2659, 2
        %vm2680 = vcmp.lt.s32.totalorder %v2659, 3
        %vm2681 = vcmp.lt.s32.totalorder %v2659, 4
        %v2682 = vsel %vm2678, %v2662, %v2665
        %v2683 = vsel %vm2681, %v2671, 2102212464
        %v2684 = vsel %vm2680, %v2668, %v2683
        %v2685 = vsel %vm2679, %v2682, %v2684
        %v2686 = vsel %vm2678, %v2665, %v2668
        %v2687 = vsel %vm2681, %v2674, 920167782
        %v2688 = vsel %vm2680, %v2671, %v2687
        %v2689 = vsel %vm2679, %v2686, %v2688
        %v2690 = vsel %vm2678, %v2668, %v2671
        %v2691 = vsel %vm2681, %v2677, 1326507024
        %v2692 = vsel %vm2680, %v2674, %v2691
        %v2693 = vsel %vm2679, %v2690, %v2692
        %v2694 = vshll.u32 %v2654, 8
        %v2695 = vmul.u32.u64.compose %v2694, %v2693
        %v2696 = vextract.low.u32 %v2695
        %v2697 = vextract.high.u32 %v2695
        %v2698 = vmul.u32.u64.compose %v2694, %v2689
        %v2699 = vextract.low.u32 %v2698
        %v2700 = vextract.high.u32 %v2698
        %v2701 = vmul.u32 %v2694, %v2685
        %v2702 = vadd.s32 %v2697, %v2699
        %vm2703 = vc.u32 %v2697, %v2699
        %v2704 = vadd.s32 %v2700, 1
        %v2705 = vsel %vm2703, %v2704, %v2700
        %v2706 = vadd.s32 %v2701, %v2705
        %v2707 = vadd.s32 %v2706, 536870912
        %v2708 = vshrl.u32 %v2707, 30
        %v2709 = vshll.u32 %v2708, 30
        %v2710 = vsub.s32 %v2706, %v2709
        %vm2711 = vcmp.lt.s32.totalorder %v2710, 0
        %v2712 = vsub.s32 0, %v2710
        %v2713 = vsel %vm2711, %v2712, %v2710
        %v2714 = vclz %v2713
        %v2715 = vsub.s32 %v2714, 2
        %vm2716 = vcmp.gt.s32.totalorder 0, %v2715
        %v2717 = vsel %vm2716, 0, %v2715
        %v2718 = vsub.s32 32, %v2717
        %v2719 = vshll.u32 %v2710, %v2717
        %v2720 = vshrl.u32 %v2702, %v2718
        %v2721 = vor.u32 %v2719, %v2720
        %v2722 = vsub.s32 4294967266, %v2717
        %v2723 = vadd.s32 %v2722, 127
        %v2724 = vshll.u32 %v2723, 23
        %v2725 = vor.u32 4788187, %v2724
        %v2726 = vand.u32 2147483647, %v2725
        %v2728 = vcvt.s32.f32 %v2721
        %v2729 = vmul.f32 %v2728, %v2726
        %v2730 = vxor.u32 %v2729, 2147483648
        %v2731 = vsel %vm2648, %v2730, %v2729
        %v2732 = vsub.s32 4, %v2708
        %v2733 = vsel %vm2648, %v2732, %v2708
        %v2734 = vsel %vm2647, %v2432, %v2731
        %v2735 = vsel %vm2647, 0, %v2733
        %v2736 = vcosq.f32.pop %v2734
        %v2737 = vsinq.f32.pop %v2734
        %vm2738 = vweird.f32 %v2432
        %v2739 = vadd.s32 %v2735, 3
        %v2740 = vand.u32 %v2739, 3
        %vm2741 = vcmp.lt.s32.totalorder %v2740, 2
        %vm2742 = vcmp.eq.s32.totalorder %v2740, 0
        %v2743 = vxor.u32 %v2737, 2147483648
        %v2744 = vsel %vm2742, %v2736, %v2743
        %vm2745 = vcmp.eq.s32.totalorder %v2740, 2
        %v2746 = vxor.u32 %v2736, 2147483648
        %v2747 = vsel %vm2745, %v2746, %v2737
        %v2748 = vsel %vm2741, %v2744, %v2747
        %v2749 = vsel %vm2738, nan, %v2748
        %v2750 = vand.u32 2147483647, %v2433
        %vm2751 = vcmp.le.f32.partialorder %v2750, 0.7853982
        %vm2752 = vcmp.lt.s32.totalorder %v2433, 0
        %v2753 = vand.u32 %v2433, 2139095040
        %v2754 = vshrl.u32 %v2753, 23
        %v2755 = vsub.s32 %v2754, 127
        %v2756 = vand.u32 2147483647, %v2433
        %v2757 = vand.u32 %v2756, 8388607
        %v2758 = vor.u32 %v2757, 8388608
        %v2759 = vsub.s32 0, %v2758
        %v2760 = vadd.s32 %v2755, 1
        %vm2761 = vcmp.gt.s32.totalorder %v2760, 0
        %v2762 = vsel %vm2761, %v2760, 0
        %v2763 = vshrl.u32 %v2762, 5
        %v2764 = vand.u32 %v2762, 31
        %v2765 = vsub.s32 32, %v2764
        %v2766 = vshrl.u32 683565275, %v2765
        %v2767 = vshll.u32 683565275, %v2764
        %v2768 = vshrl.u32 2475754826, %v2765
        %v2769 = vor.u32 %v2767, %v2768
        %v2770 = vshll.u32 2475754826, %v2764
        %v2771 = vshrl.u32 2131351028, %v2765
        %v2772 = vor.u32 %v2770, %v2771
        %v2773 = vshll.u32 2131351028, %v2764
        %v2774 = vshrl.u32 2102212464, %v2765
        %v2775 = vor.u32 %v2773, %v2774
        %v2776 = vshll.u32 2102212464, %v2764
        %v2777 = vshrl.u32 920167782, %v2765
        %v2778 = vor.u32 %v2776, %v2777
        %v2779 = vshll.u32 920167782, %v2764
        %v2780 = vshrl.u32 1326507024, %v2765
        %v2781 = vor.u32 %v2779, %v2780
        %vm2782 = vcmp.lt.s32.totalorder %v2763, 1
        %vm2783 = vcmp.lt.s32.totalorder %v2763, 2
        %vm2784 = vcmp.lt.s32.totalorder %v2763, 3
        %vm2785 = vcmp.lt.s32.totalorder %v2763, 4
        %v2786 = vsel %vm2782, %v2766, %v2769
        %v2787 = vsel %vm2785, %v2775, 2102212464
        %v2788 = vsel %vm2784, %v2772, %v2787
        %v2789 = vsel %vm2783, %v2786, %v2788
        %v2790 = vsel %vm2782, %v2769, %v2772
        %v2791 = vsel %vm2785, %v2778, 920167782
        %v2792 = vsel %vm2784, %v2775, %v2791
        %v2793 = vsel %vm2783, %v2790, %v2792
        %v2794 = vsel %vm2782, %v2772, %v2775
        %v2795 = vsel %vm2785, %v2781, 1326507024
        %v2796 = vsel %vm2784, %v2778, %v2795
        %v2797 = vsel %vm2783, %v2794, %v2796
        %v2798 = vshll.u32 %v2758, 8
        %v2799 = vmul.u32.u64.compose %v2798, %v2797
        %v2800 = vextract.low.u32 %v2799
        %v2801 = vextract.high.u32 %v2799
        %v2802 = vmul.u32.u64.compose %v2798, %v2793
        %v2803 = vextract.low.u32 %v2802
        %v2804 = vextract.high.u32 %v2802
        %v2805 = vmul.u32 %v2798, %v2789
        %v2806 = vadd.s32 %v2801, %v2803
        %vm2807 = vc.u32 %v2801, %v2803
        %v2808 = vadd.s32 %v2804, 1
        %v2809 = vsel %vm2807, %v2808, %v2804
        %v2810 = vadd.s32 %v2805, %v2809
        %v2811 = vadd.s32 %v2810, 536870912
        %v2812 = vshrl.u32 %v2811, 30
        %v2813 = vshll.u32 %v2812, 30
        %v2814 = vsub.s32 %v2810, %v2813
        %vm2815 = vcmp.lt.s32.totalorder %v2814, 0
        %v2816 = vsub.s32 0, %v2814
        %v2817 = vsel %vm2815, %v2816, %v2814
        %v2818 = vclz %v2817
        %v2819 = vsub.s32 %v2818, 2
        %vm2820 = vcmp.gt.s32.totalorder 0, %v2819
        %v2821 = vsel %vm2820, 0, %v2819
        %v2822 = vsub.s32 32, %v2821
        %v2823 = vshll.u32 %v2814, %v2821
        %v2824 = vshrl.u32 %v2806, %v2822
        %v2825 = vor.u32 %v2823, %v2824
        %v2826 = vsub.s32 4294967266, %v2821
        %v2827 = vadd.s32 %v2826, 127
        %v2828 = vshll.u32 %v2827, 23
        %v2829 = vor.u32 4788187, %v2828
        %v2830 = vand.u32 2147483647, %v2829
        %v2832 = vcvt.s32.f32 %v2825
        %v2833 = vmul.f32 %v2832, %v2830
        %v2834 = vxor.u32 %v2833, 2147483648
        %v2835 = vsel %vm2752, %v2834, %v2833
        %v2836 = vsub.s32 4, %v2812
        %v2837 = vsel %vm2752, %v2836, %v2812
        %v2838 = vsel %vm2751, %v2433, %v2835
        %v2839 = vsel %vm2751, 0, %v2837
        %v2840 = vcosq.f32.pop %v2838
        %v2841 = vsinq.f32.pop %v2838
        %vm2842 = vweird.f32 %v2433
        %v2843 = vadd.s32 %v2839, 3
        %v2844 = vand.u32 %v2843, 3
        %vm2845 = vcmp.lt.s32.totalorder %v2844, 2
        %vm2846 = vcmp.eq.s32.totalorder %v2844, 0
        %v2847 = vxor.u32 %v2841, 2147483648
        %v2848 = vsel %vm2846, %v2840, %v2847
        %vm2849 = vcmp.eq.s32.totalorder %v2844, 2
        %v2850 = vxor.u32 %v2840, 2147483648
        %v2851 = vsel %vm2849, %v2850, %v2841
        %v2852 = vsel %vm2845, %v2848, %v2851
        %v2853 = vsel %vm2842, nan, %v2852
        %v2854 = vlaneseq
        %v2855 = vshrl.u32 %v2854, 7
        %v2856 = vsub.s32 3, %v2855
        %v2857 = vrot.slane %v1068, %v2856
        %v2858 = vmul.f32 %v2857, %v2749
        %v2859 = vmul.f32 %v2857, %v2853
        %v2860 = vsub.f32 %v2644, %v2858
        %v2861 = vsub.f32 %v2645, %v2859
        %v2862 = vmul.f32 %v2425, %v2860
        %v2863 = vmul.f32 %v2427, %v2861
        %v2864 = vadd.f32 %v2416, %v2862
        %v2865 = vadd.f32 %v2417, %v2863
        %v2866 = vlaneseq
        %v2867 = vshrl.u32 %v2866, 7
        %v2868 = vsub.s32 4, %v2867
        %v2869 = vrot.slane %v835, %v2868
        %v2870 = vmul.f32 %v1072, %v2869
        %v2871 = vmul.f32 %v1073, %v2869
        %v2872 = vmul.f32 %v2870, 1.442695
        %v2873 = vpow.pop %v2872
        %v2874 = vmul.f32 %v2871, 1.442695
        %v2875 = vpow.pop %v2874
        %v2876 = vlaneseq
        %v2877 = vshrl.u32 %v2876, 7
        %v2878 = vsub.s32 4, %v2877
        %v2879 = vrot.slane %v836, %v2878
        %v2880 = vmul.f32 %v1072, %v2879
        %v2881 = vmul.f32 %v1073, %v2879
        %v2882 = vand.u32 2147483647, %v2880
        %vm2883 = vcmp.le.f32.partialorder %v2882, 0.7853982
        %vm2884 = vcmp.lt.s32.totalorder %v2880, 0
        %v2885 = vand.u32 %v2880, 2139095040
        %v2886 = vshrl.u32 %v2885, 23
        %v2887 = vsub.s32 %v2886, 127
        %v2888 = vand.u32 2147483647, %v2880
        %v2889 = vand.u32 %v2888, 8388607
        %v2890 = vor.u32 %v2889, 8388608
        %v2891 = vsub.s32 0, %v2890
        %v2892 = vadd.s32 %v2887, 1
        %vm2893 = vcmp.gt.s32.totalorder %v2892, 0
        %v2894 = vsel %vm2893, %v2892, 0
        %v2895 = vshrl.u32 %v2894, 5
        %v2896 = vand.u32 %v2894, 31
        %v2897 = vsub.s32 32, %v2896
        %v2898 = vshrl.u32 683565275, %v2897
        %v2899 = vshll.u32 683565275, %v2896
        %v2900 = vshrl.u32 2475754826, %v2897
        %v2901 = vor.u32 %v2899, %v2900
        %v2902 = vshll.u32 2475754826, %v2896
        %v2903 = vshrl.u32 2131351028, %v2897
        %v2904 = vor.u32 %v2902, %v2903
        %v2905 = vshll.u32 2131351028, %v2896
        %v2906 = vshrl.u32 2102212464, %v2897
        %v2907 = vor.u32 %v2905, %v2906
        %v2908 = vshll.u32 2102212464, %v2896
        %v2909 = vshrl.u32 920167782, %v2897
        %v2910 = vor.u32 %v2908, %v2909
        %v2911 = vshll.u32 920167782, %v2896
        %v2912 = vshrl.u32 1326507024, %v2897
        %v2913 = vor.u32 %v2911, %v2912
        %vm2914 = vcmp.lt.s32.totalorder %v2895, 1
        %vm2915 = vcmp.lt.s32.totalorder %v2895, 2
        %vm2916 = vcmp.lt.s32.totalorder %v2895, 3
        %vm2917 = vcmp.lt.s32.totalorder %v2895, 4
        %v2918 = vsel %vm2914, %v2898, %v2901
        %v2919 = vsel %vm2917, %v2907, 2102212464
        %v2920 = vsel %vm2916, %v2904, %v2919
        %v2921 = vsel %vm2915, %v2918, %v2920
        %v2922 = vsel %vm2914, %v2901, %v2904
        %v2923 = vsel %vm2917, %v2910, 920167782
        %v2924 = vsel %vm2916, %v2907, %v2923
        %v2925 = vsel %vm2915, %v2922, %v2924
        %v2926 = vsel %vm2914, %v2904, %v2907
        %v2927 = vsel %vm2917, %v2913, 1326507024
        %v2928 = vsel %vm2916, %v2910, %v2927
        %v2929 = vsel %vm2915, %v2926, %v2928
        %v2930 = vshll.u32 %v2890, 8
        %v2931 = vmul.u32.u64.compose %v2930, %v2929
        %v2932 = vextract.low.u32 %v2931
        %v2933 = vextract.high.u32 %v2931
        %v2934 = vmul.u32.u64.compose %v2930, %v2925
        %v2935 = vextract.low.u32 %v2934
        %v2936 = vextract.high.u32 %v2934
        %v2937 = vmul.u32 %v2930, %v2921
        %v2938 = vadd.s32 %v2933, %v2935
        %vm2939 = vc.u32 %v2933, %v2935
        %v2940 = vadd.s32 %v2936, 1
        %v2941 = vsel %vm2939, %v2940, %v2936
        %v2942 = vadd.s32 %v2937, %v2941
        %v2943 = vadd.s32 %v2942, 536870912
        %v2944 = vshrl.u32 %v2943, 30
        %v2945 = vshll.u32 %v2944, 30
        %v2946 = vsub.s32 %v2942, %v2945
        %vm2947 = vcmp.lt.s32.totalorder %v2946, 0
        %v2948 = vsub.s32 0, %v2946
        %v2949 = vsel %vm2947, %v2948, %v2946
        %v2950 = vclz %v2949
        %v2951 = vsub.s32 %v2950, 2
        %vm2952 = vcmp.gt.s32.totalorder 0, %v2951
        %v2953 = vsel %vm2952, 0, %v2951
        %v2954 = vsub.s32 32, %v2953
        %v2955 = vshll.u32 %v2946, %v2953
        %v2956 = vshrl.u32 %v2938, %v2954
        %v2957 = vor.u32 %v2955, %v2956
        %v2958 = vsub.s32 4294967266, %v2953
        %v2959 = vadd.s32 %v2958, 127
        %v2960 = vshll.u32 %v2959, 23
        %v2961 = vor.u32 4788187, %v2960
        %v2962 = vand.u32 2147483647, %v2961
        %v2964 = vcvt.s32.f32 %v2957
        %v2965 = vmul.f32 %v2964, %v2962
        %v2966 = vxor.u32 %v2965, 2147483648
        %v2967 = vsel %vm2884, %v2966, %v2965
        %v2968 = vsub.s32 4, %v2944
        %v2969 = vsel %vm2884, %v2968, %v2944
        %v2970 = vsel %vm2883, %v2880, %v2967
        %v2971 = vsel %vm2883, 0, %v2969
        %v2972 = vcosq.f32.pop %v2970
        %v2973 = vsinq.f32.pop %v2970
        %vm2974 = vweird.f32 %v2880
        %v2975 = vand.u32 %v2971, 3
        %vm2976 = vcmp.lt.s32.totalorder %v2975, 2
        %vm2977 = vcmp.eq.s32.totalorder %v2975, 0
        %v2978 = vxor.u32 %v2973, 2147483648
        %v2979 = vsel %vm2977, %v2972, %v2978
        %vm2980 = vcmp.eq.s32.totalorder %v2975, 2
        %v2981 = vxor.u32 %v2972, 2147483648
        %v2982 = vsel %vm2980, %v2981, %v2973
        %v2983 = vsel %vm2976, %v2979, %v2982
        %v2984 = vsel %vm2974, nan, %v2983
        %v2985 = vand.u32 2147483647, %v2881
        %vm2986 = vcmp.le.f32.partialorder %v2985, 0.7853982
        %vm2987 = vcmp.lt.s32.totalorder %v2881, 0
        %v2988 = vand.u32 %v2881, 2139095040
        %v2989 = vshrl.u32 %v2988, 23
        %v2990 = vsub.s32 %v2989, 127
        %v2991 = vand.u32 2147483647, %v2881
        %v2992 = vand.u32 %v2991, 8388607
        %v2993 = vor.u32 %v2992, 8388608
        %v2994 = vsub.s32 0, %v2993
        %v2995 = vadd.s32 %v2990, 1
        %vm2996 = vcmp.gt.s32.totalorder %v2995, 0
        %v2997 = vsel %vm2996, %v2995, 0
        %v2998 = vshrl.u32 %v2997, 5
        %v2999 = vand.u32 %v2997, 31
        %v3000 = vsub.s32 32, %v2999
        %v3001 = vshrl.u32 683565275, %v3000
        %v3002 = vshll.u32 683565275, %v2999
        %v3003 = vshrl.u32 2475754826, %v3000
        %v3004 = vor.u32 %v3002, %v3003
        %v3005 = vshll.u32 2475754826, %v2999
        %v3006 = vshrl.u32 2131351028, %v3000
        %v3007 = vor.u32 %v3005, %v3006
        %v3008 = vshll.u32 2131351028, %v2999
        %v3009 = vshrl.u32 2102212464, %v3000
        %v3010 = vor.u32 %v3008, %v3009
        %v3011 = vshll.u32 2102212464, %v2999
        %v3012 = vshrl.u32 920167782, %v3000
        %v3013 = vor.u32 %v3011, %v3012
        %v3014 = vshll.u32 920167782, %v2999
        %v3015 = vshrl.u32 1326507024, %v3000
        %v3016 = vor.u32 %v3014, %v3015
        %vm3017 = vcmp.lt.s32.totalorder %v2998, 1
        %vm3018 = vcmp.lt.s32.totalorder %v2998, 2
        %vm3019 = vcmp.lt.s32.totalorder %v2998, 3
        %vm3020 = vcmp.lt.s32.totalorder %v2998, 4
        %v3021 = vsel %vm3017, %v3001, %v3004
        %v3022 = vsel %vm3020, %v3010, 2102212464
        %v3023 = vsel %vm3019, %v3007, %v3022
        %v3024 = vsel %vm3018, %v3021, %v3023
        %v3025 = vsel %vm3017, %v3004, %v3007
        %v3026 = vsel %vm3020, %v3013, 920167782
        %v3027 = vsel %vm3019, %v3010, %v3026
        %v3028 = vsel %vm3018, %v3025, %v3027
        %v3029 = vsel %vm3017, %v3007, %v3010
        %v3030 = vsel %vm3020, %v3016, 1326507024
        %v3031 = vsel %vm3019, %v3013, %v3030
        %v3032 = vsel %vm3018, %v3029, %v3031
        %v3033 = vshll.u32 %v2993, 8
        %v3034 = vmul.u32.u64.compose %v3033, %v3032
        %v3035 = vextract.low.u32 %v3034
        %v3036 = vextract.high.u32 %v3034
        %v3037 = vmul.u32.u64.compose %v3033, %v3028
        %v3038 = vextract.low.u32 %v3037
        %v3039 = vextract.high.u32 %v3037
        %v3040 = vmul.u32 %v3033, %v3024
        %v3041 = vadd.s32 %v3036, %v3038
        %vm3042 = vc.u32 %v3036, %v3038
        %v3043 = vadd.s32 %v3039, 1
        %v3044 = vsel %vm3042, %v3043, %v3039
        %v3045 = vadd.s32 %v3040, %v3044
        %v3046 = vadd.s32 %v3045, 536870912
        %v3047 = vshrl.u32 %v3046, 30
        %v3048 = vshll.u32 %v3047, 30
        %v3049 = vsub.s32 %v3045, %v3048
        %vm3050 = vcmp.lt.s32.totalorder %v3049, 0
        %v3051 = vsub.s32 0, %v3049
        %v3052 = vsel %vm3050, %v3051, %v3049
        %v3053 = vclz %v3052
        %v3054 = vsub.s32 %v3053, 2
        %vm3055 = vcmp.gt.s32.totalorder 0, %v3054
        %v3056 = vsel %vm3055, 0, %v3054
        %v3057 = vsub.s32 32, %v3056
        %v3058 = vshll.u32 %v3049, %v3056
        %v3059 = vshrl.u32 %v3041, %v3057
        %v3060 = vor.u32 %v3058, %v3059
        %v3061 = vsub.s32 4294967266, %v3056
        %v3062 = vadd.s32 %v3061, 127
        %v3063 = vshll.u32 %v3062, 23
        %v3064 = vor.u32 4788187, %v3063
        %v3065 = vand.u32 2147483647, %v3064
        %v3067 = vcvt.s32.f32 %v3060
        %v3068 = vmul.f32 %v3067, %v3065
        %v3069 = vxor.u32 %v3068, 2147483648
        %v3070 = vsel %vm2987, %v3069, %v3068
        %v3071 = vsub.s32 4, %v3047
        %v3072 = vsel %vm2987, %v3071, %v3047
        %v3073 = vsel %vm2986, %v2881, %v3070
        %v3074 = vsel %vm2986, 0, %v3072
        %v3075 = vcosq.f32.pop %v3073
        %v3076 = vsinq.f32.pop %v3073
        %vm3077 = vweird.f32 %v2881
        %v3078 = vand.u32 %v3074, 3
        %vm3079 = vcmp.lt.s32.totalorder %v3078, 2
        %vm3080 = vcmp.eq.s32.totalorder %v3078, 0
        %v3081 = vxor.u32 %v3076, 2147483648
        %v3082 = vsel %vm3080, %v3075, %v3081
        %vm3083 = vcmp.eq.s32.totalorder %v3078, 2
        %v3084 = vxor.u32 %v3075, 2147483648
        %v3085 = vsel %vm3083, %v3084, %v3076
        %v3086 = vsel %vm3079, %v3082, %v3085
        %v3087 = vsel %vm3077, nan, %v3086
        %v3088 = vlaneseq
        %v3089 = vshrl.u32 %v3088, 7
        %v3090 = vsub.s32 4, %v3089
        %v3091 = vrot.slane %v1065, %v3090
        %v3092 = vmul.f32 %v3091, %v2984
        %v3093 = vmul.f32 %v3091, %v3087
        %v3094 = vand.u32 2147483647, %v2880
        %vm3095 = vcmp.le.f32.partialorder %v3094, 0.7853982
        %vm3096 = vcmp.lt.s32.totalorder %v2880, 0
        %v3097 = vand.u32 %v2880, 2139095040
        %v3098 = vshrl.u32 %v3097, 23
        %v3099 = vsub.s32 %v3098, 127
        %v3100 = vand.u32 2147483647, %v2880
        %v3101 = vand.u32 %v3100, 8388607
        %v3102 = vor.u32 %v3101, 8388608
        %v3103 = vsub.s32 0, %v3102
        %v3104 = vadd.s32 %v3099, 1
        %vm3105 = vcmp.gt.s32.totalorder %v3104, 0
        %v3106 = vsel %vm3105, %v3104, 0
        %v3107 = vshrl.u32 %v3106, 5
        %v3108 = vand.u32 %v3106, 31
        %v3109 = vsub.s32 32, %v3108
        %v3110 = vshrl.u32 683565275, %v3109
        %v3111 = vshll.u32 683565275, %v3108
        %v3112 = vshrl.u32 2475754826, %v3109
        %v3113 = vor.u32 %v3111, %v3112
        %v3114 = vshll.u32 2475754826, %v3108
        %v3115 = vshrl.u32 2131351028, %v3109
        %v3116 = vor.u32 %v3114, %v3115
        %v3117 = vshll.u32 2131351028, %v3108
        %v3118 = vshrl.u32 2102212464, %v3109
        %v3119 = vor.u32 %v3117, %v3118
        %v3120 = vshll.u32 2102212464, %v3108
        %v3121 = vshrl.u32 920167782, %v3109
        %v3122 = vor.u32 %v3120, %v3121
        %v3123 = vshll.u32 920167782, %v3108
        %v3124 = vshrl.u32 1326507024, %v3109
        %v3125 = vor.u32 %v3123, %v3124
        %vm3126 = vcmp.lt.s32.totalorder %v3107, 1
        %vm3127 = vcmp.lt.s32.totalorder %v3107, 2
        %vm3128 = vcmp.lt.s32.totalorder %v3107, 3
        %vm3129 = vcmp.lt.s32.totalorder %v3107, 4
        %v3130 = vsel %vm3126, %v3110, %v3113
        %v3131 = vsel %vm3129, %v3119, 2102212464
        %v3132 = vsel %vm3128, %v3116, %v3131
        %v3133 = vsel %vm3127, %v3130, %v3132
        %v3134 = vsel %vm3126, %v3113, %v3116
        %v3135 = vsel %vm3129, %v3122, 920167782
        %v3136 = vsel %vm3128, %v3119, %v3135
        %v3137 = vsel %vm3127, %v3134, %v3136
        %v3138 = vsel %vm3126, %v3116, %v3119
        %v3139 = vsel %vm3129, %v3125, 1326507024
        %v3140 = vsel %vm3128, %v3122, %v3139
        %v3141 = vsel %vm3127, %v3138, %v3140
        %v3142 = vshll.u32 %v3102, 8
        %v3143 = vmul.u32.u64.compose %v3142, %v3141
        %v3144 = vextract.low.u32 %v3143
        %v3145 = vextract.high.u32 %v3143
        %v3146 = vmul.u32.u64.compose %v3142, %v3137
        %v3147 = vextract.low.u32 %v3146
        %v3148 = vextract.high.u32 %v3146
        %v3149 = vmul.u32 %v3142, %v3133
        %v3150 = vadd.s32 %v3145, %v3147
        %vm3151 = vc.u32 %v3145, %v3147
        %v3152 = vadd.s32 %v3148, 1
        %v3153 = vsel %vm3151, %v3152, %v3148
        %v3154 = vadd.s32 %v3149, %v3153
        %v3155 = vadd.s32 %v3154, 536870912
        %v3156 = vshrl.u32 %v3155, 30
        %v3157 = vshll.u32 %v3156, 30
        %v3158 = vsub.s32 %v3154, %v3157
        %vm3159 = vcmp.lt.s32.totalorder %v3158, 0
        %v3160 = vsub.s32 0, %v3158
        %v3161 = vsel %vm3159, %v3160, %v3158
        %v3162 = vclz %v3161
        %v3163 = vsub.s32 %v3162, 2
        %vm3164 = vcmp.gt.s32.totalorder 0, %v3163
        %v3165 = vsel %vm3164, 0, %v3163
        %v3166 = vsub.s32 32, %v3165
        %v3167 = vshll.u32 %v3158, %v3165
        %v3168 = vshrl.u32 %v3150, %v3166
        %v3169 = vor.u32 %v3167, %v3168
        %v3170 = vsub.s32 4294967266, %v3165
        %v3171 = vadd.s32 %v3170, 127
        %v3172 = vshll.u32 %v3171, 23
        %v3173 = vor.u32 4788187, %v3172
        %v3174 = vand.u32 2147483647, %v3173
        %v3176 = vcvt.s32.f32 %v3169
        %v3177 = vmul.f32 %v3176, %v3174
        %v3178 = vxor.u32 %v3177, 2147483648
        %v3179 = vsel %vm3096, %v3178, %v3177
        %v3180 = vsub.s32 4, %v3156
        %v3181 = vsel %vm3096, %v3180, %v3156
        %v3182 = vsel %vm3095, %v2880, %v3179
        %v3183 = vsel %vm3095, 0, %v3181
        %v3184 = vcosq.f32.pop %v3182
        %v3185 = vsinq.f32.pop %v3182
        %vm3186 = vweird.f32 %v2880
        %v3187 = vadd.s32 %v3183, 3
        %v3188 = vand.u32 %v3187, 3
        %vm3189 = vcmp.lt.s32.totalorder %v3188, 2
        %vm3190 = vcmp.eq.s32.totalorder %v3188, 0
        %v3191 = vxor.u32 %v3185, 2147483648
        %v3192 = vsel %vm3190, %v3184, %v3191
        %vm3193 = vcmp.eq.s32.totalorder %v3188, 2
        %v3194 = vxor.u32 %v3184, 2147483648
        %v3195 = vsel %vm3193, %v3194, %v3185
        %v3196 = vsel %vm3189, %v3192, %v3195
        %v3197 = vsel %vm3186, nan, %v3196
        %v3198 = vand.u32 2147483647, %v2881
        %vm3199 = vcmp.le.f32.partialorder %v3198, 0.7853982
        %vm3200 = vcmp.lt.s32.totalorder %v2881, 0
        %v3201 = vand.u32 %v2881, 2139095040
        %v3202 = vshrl.u32 %v3201, 23
        %v3203 = vsub.s32 %v3202, 127
        %v3204 = vand.u32 2147483647, %v2881
        %v3205 = vand.u32 %v3204, 8388607
        %v3206 = vor.u32 %v3205, 8388608
        %v3207 = vsub.s32 0, %v3206
        %v3208 = vadd.s32 %v3203, 1
        %vm3209 = vcmp.gt.s32.totalorder %v3208, 0
        %v3210 = vsel %vm3209, %v3208, 0
        %v3211 = vshrl.u32 %v3210, 5
        %v3212 = vand.u32 %v3210, 31
        %v3213 = vsub.s32 32, %v3212
        %v3214 = vshrl.u32 683565275, %v3213
        %v3215 = vshll.u32 683565275, %v3212
        %v3216 = vshrl.u32 2475754826, %v3213
        %v3217 = vor.u32 %v3215, %v3216
        %v3218 = vshll.u32 2475754826, %v3212
        %v3219 = vshrl.u32 2131351028, %v3213
        %v3220 = vor.u32 %v3218, %v3219
        %v3221 = vshll.u32 2131351028, %v3212
        %v3222 = vshrl.u32 2102212464, %v3213
        %v3223 = vor.u32 %v3221, %v3222
        %v3224 = vshll.u32 2102212464, %v3212
        %v3225 = vshrl.u32 920167782, %v3213
        %v3226 = vor.u32 %v3224, %v3225
        %v3227 = vshll.u32 920167782, %v3212
        %v3228 = vshrl.u32 1326507024, %v3213
        %v3229 = vor.u32 %v3227, %v3228
        %vm3230 = vcmp.lt.s32.totalorder %v3211, 1
        %vm3231 = vcmp.lt.s32.totalorder %v3211, 2
        %vm3232 = vcmp.lt.s32.totalorder %v3211, 3
        %vm3233 = vcmp.lt.s32.totalorder %v3211, 4
        %v3234 = vsel %vm3230, %v3214, %v3217
        %v3235 = vsel %vm3233, %v3223, 2102212464
        %v3236 = vsel %vm3232, %v3220, %v3235
        %v3237 = vsel %vm3231, %v3234, %v3236
        %v3238 = vsel %vm3230, %v3217, %v3220
        %v3239 = vsel %vm3233, %v3226, 920167782
        %v3240 = vsel %vm3232, %v3223, %v3239
        %v3241 = vsel %vm3231, %v3238, %v3240
        %v3242 = vsel %vm3230, %v3220, %v3223
        %v3243 = vsel %vm3233, %v3229, 1326507024
        %v3244 = vsel %vm3232, %v3226, %v3243
        %v3245 = vsel %vm3231, %v3242, %v3244
        %v3246 = vshll.u32 %v3206, 8
        %v3247 = vmul.u32.u64.compose %v3246, %v3245
        %v3248 = vextract.low.u32 %v3247
        %v3249 = vextract.high.u32 %v3247
        %v3250 = vmul.u32.u64.compose %v3246, %v3241
        %v3251 = vextract.low.u32 %v3250
        %v3252 = vextract.high.u32 %v3250
        %v3253 = vmul.u32 %v3246, %v3237
        %v3254 = vadd.s32 %v3249, %v3251
        %vm3255 = vc.u32 %v3249, %v3251
        %v3256 = vadd.s32 %v3252, 1
        %v3257 = vsel %vm3255, %v3256, %v3252
        %v3258 = vadd.s32 %v3253, %v3257
        %v3259 = vadd.s32 %v3258, 536870912
        %v3260 = vshrl.u32 %v3259, 30
        %v3261 = vshll.u32 %v3260, 30
        %v3262 = vsub.s32 %v3258, %v3261
        %vm3263 = vcmp.lt.s32.totalorder %v3262, 0
        %v3264 = vsub.s32 0, %v3262
        %v3265 = vsel %vm3263, %v3264, %v3262
        %v3266 = vclz %v3265
        %v3267 = vsub.s32 %v3266, 2
        %vm3268 = vcmp.gt.s32.totalorder 0, %v3267
        %v3269 = vsel %vm3268, 0, %v3267
        %v3270 = vsub.s32 32, %v3269
        %v3271 = vshll.u32 %v3262, %v3269
        %v3272 = vshrl.u32 %v3254, %v3270
        %v3273 = vor.u32 %v3271, %v3272
        %v3274 = vsub.s32 4294967266, %v3269
        %v3275 = vadd.s32 %v3274, 127
        %v3276 = vshll.u32 %v3275, 23
        %v3277 = vor.u32 4788187, %v3276
        %v3278 = vand.u32 2147483647, %v3277
        %v3280 = vcvt.s32.f32 %v3273
        %v3281 = vmul.f32 %v3280, %v3278
        %v3282 = vxor.u32 %v3281, 2147483648
        %v3283 = vsel %vm3200, %v3282, %v3281
        %v3284 = vsub.s32 4, %v3260
        %v3285 = vsel %vm3200, %v3284, %v3260
        %v3286 = vsel %vm3199, %v2881, %v3283
        %v3287 = vsel %vm3199, 0, %v3285
        %v3288 = vcosq.f32.pop %v3286
        %v3289 = vsinq.f32.pop %v3286
        %vm3290 = vweird.f32 %v2881
        %v3291 = vadd.s32 %v3287, 3
        %v3292 = vand.u32 %v3291, 3
        %vm3293 = vcmp.lt.s32.totalorder %v3292, 2
        %vm3294 = vcmp.eq.s32.totalorder %v3292, 0
        %v3295 = vxor.u32 %v3289, 2147483648
        %v3296 = vsel %vm3294, %v3288, %v3295
        %vm3297 = vcmp.eq.s32.totalorder %v3292, 2
        %v3298 = vxor.u32 %v3288, 2147483648
        %v3299 = vsel %vm3297, %v3298, %v3289
        %v3300 = vsel %vm3293, %v3296, %v3299
        %v3301 = vsel %vm3290, nan, %v3300
        %v3302 = vlaneseq
        %v3303 = vshrl.u32 %v3302, 7
        %v3304 = vsub.s32 4, %v3303
        %v3305 = vrot.slane %v1068, %v3304
        %v3306 = vmul.f32 %v3305, %v3197
        %v3307 = vmul.f32 %v3305, %v3301
        %v3308 = vsub.f32 %v3092, %v3306
        %v3309 = vsub.f32 %v3093, %v3307
        %v3310 = vmul.f32 %v2873, %v3308
        %v3311 = vmul.f32 %v2875, %v3309
        %v3312 = vadd.f32 %v2864, %v3310
        %v3313 = vadd.f32 %v2865, %v3311
        %v3314 = vlaneseq
        %v3315 = vshrl.u32 %v3314, 7
        %v3316 = vsub.s32 5, %v3315
        %v3317 = vrot.slane %v835, %v3316
        %v3318 = vmul.f32 %v1072, %v3317
        %v3319 = vmul.f32 %v1073, %v3317
        %v3320 = vmul.f32 %v3318, 1.442695
        %v3321 = vpow.pop %v3320
        %v3322 = vmul.f32 %v3319, 1.442695
        %v3323 = vpow.pop %v3322
        %v3324 = vlaneseq
        %v3325 = vshrl.u32 %v3324, 7
        %v3326 = vsub.s32 5, %v3325
        %v3327 = vrot.slane %v836, %v3326
        %v3328 = vmul.f32 %v1072, %v3327
        %v3329 = vmul.f32 %v1073, %v3327
        %v3330 = vand.u32 2147483647, %v3328
        %vm3331 = vcmp.le.f32.partialorder %v3330, 0.7853982
        %vm3332 = vcmp.lt.s32.totalorder %v3328, 0
        %v3333 = vand.u32 %v3328, 2139095040
        %v3334 = vshrl.u32 %v3333, 23
        %v3335 = vsub.s32 %v3334, 127
        %v3336 = vand.u32 2147483647, %v3328
        %v3337 = vand.u32 %v3336, 8388607
        %v3338 = vor.u32 %v3337, 8388608
        %v3339 = vsub.s32 0, %v3338
        %v3340 = vadd.s32 %v3335, 1
        %vm3341 = vcmp.gt.s32.totalorder %v3340, 0
        %v3342 = vsel %vm3341, %v3340, 0
        %v3343 = vshrl.u32 %v3342, 5
        %v3344 = vand.u32 %v3342, 31
        %v3345 = vsub.s32 32, %v3344
        %v3346 = vshrl.u32 683565275, %v3345
        %v3347 = vshll.u32 683565275, %v3344
        %v3348 = vshrl.u32 2475754826, %v3345
        %v3349 = vor.u32 %v3347, %v3348
        %v3350 = vshll.u32 2475754826, %v3344
        %v3351 = vshrl.u32 2131351028, %v3345
        %v3352 = vor.u32 %v3350, %v3351
        %v3353 = vshll.u32 2131351028, %v3344
        %v3354 = vshrl.u32 2102212464, %v3345
        %v3355 = vor.u32 %v3353, %v3354
        %v3356 = vshll.u32 2102212464, %v3344
        %v3357 = vshrl.u32 920167782, %v3345
        %v3358 = vor.u32 %v3356, %v3357
        %v3359 = vshll.u32 920167782, %v3344
        %v3360 = vshrl.u32 1326507024, %v3345
        %v3361 = vor.u32 %v3359, %v3360
        %vm3362 = vcmp.lt.s32.totalorder %v3343, 1
        %vm3363 = vcmp.lt.s32.totalorder %v3343, 2
        %vm3364 = vcmp.lt.s32.totalorder %v3343, 3
        %vm3365 = vcmp.lt.s32.totalorder %v3343, 4
        %v3366 = vsel %vm3362, %v3346, %v3349
        %v3367 = vsel %vm3365, %v3355, 2102212464
        %v3368 = vsel %vm3364, %v3352, %v3367
        %v3369 = vsel %vm3363, %v3366, %v3368
        %v3370 = vsel %vm3362, %v3349, %v3352
        %v3371 = vsel %vm3365, %v3358, 920167782
        %v3372 = vsel %vm3364, %v3355, %v3371
        %v3373 = vsel %vm3363, %v3370, %v3372
        %v3374 = vsel %vm3362, %v3352, %v3355
        %v3375 = vsel %vm3365, %v3361, 1326507024
        %v3376 = vsel %vm3364, %v3358, %v3375
        %v3377 = vsel %vm3363, %v3374, %v3376
        %v3378 = vshll.u32 %v3338, 8
        %v3379 = vmul.u32.u64.compose %v3378, %v3377
        %v3380 = vextract.low.u32 %v3379
        %v3381 = vextract.high.u32 %v3379
        %v3382 = vmul.u32.u64.compose %v3378, %v3373
        %v3383 = vextract.low.u32 %v3382
        %v3384 = vextract.high.u32 %v3382
        %v3385 = vmul.u32 %v3378, %v3369
        %v3386 = vadd.s32 %v3381, %v3383
        %vm3387 = vc.u32 %v3381, %v3383
        %v3388 = vadd.s32 %v3384, 1
        %v3389 = vsel %vm3387, %v3388, %v3384
        %v3390 = vadd.s32 %v3385, %v3389
        %v3391 = vadd.s32 %v3390, 536870912
        %v3392 = vshrl.u32 %v3391, 30
        %v3393 = vshll.u32 %v3392, 30
        %v3394 = vsub.s32 %v3390, %v3393
        %vm3395 = vcmp.lt.s32.totalorder %v3394, 0
        %v3396 = vsub.s32 0, %v3394
        %v3397 = vsel %vm3395, %v3396, %v3394
        %v3398 = vclz %v3397
        %v3399 = vsub.s32 %v3398, 2
        %vm3400 = vcmp.gt.s32.totalorder 0, %v3399
        %v3401 = vsel %vm3400, 0, %v3399
        %v3402 = vsub.s32 32, %v3401
        %v3403 = vshll.u32 %v3394, %v3401
        %v3404 = vshrl.u32 %v3386, %v3402
        %v3405 = vor.u32 %v3403, %v3404
        %v3406 = vsub.s32 4294967266, %v3401
        %v3407 = vadd.s32 %v3406, 127
        %v3408 = vshll.u32 %v3407, 23
        %v3409 = vor.u32 4788187, %v3408
        %v3410 = vand.u32 2147483647, %v3409
        %v3412 = vcvt.s32.f32 %v3405
        %v3413 = vmul.f32 %v3412, %v3410
        %v3414 = vxor.u32 %v3413, 2147483648
        %v3415 = vsel %vm3332, %v3414, %v3413
        %v3416 = vsub.s32 4, %v3392
        %v3417 = vsel %vm3332, %v3416, %v3392
        %v3418 = vsel %vm3331, %v3328, %v3415
        %v3419 = vsel %vm3331, 0, %v3417
        %v3420 = vcosq.f32.pop %v3418
        %v3421 = vsinq.f32.pop %v3418
        %vm3422 = vweird.f32 %v3328
        %v3423 = vand.u32 %v3419, 3
        %vm3424 = vcmp.lt.s32.totalorder %v3423, 2
        %vm3425 = vcmp.eq.s32.totalorder %v3423, 0
        %v3426 = vxor.u32 %v3421, 2147483648
        %v3427 = vsel %vm3425, %v3420, %v3426
        %vm3428 = vcmp.eq.s32.totalorder %v3423, 2
        %v3429 = vxor.u32 %v3420, 2147483648
        %v3430 = vsel %vm3428, %v3429, %v3421
        %v3431 = vsel %vm3424, %v3427, %v3430
        %v3432 = vsel %vm3422, nan, %v3431
        %v3433 = vand.u32 2147483647, %v3329
        %vm3434 = vcmp.le.f32.partialorder %v3433, 0.7853982
        %vm3435 = vcmp.lt.s32.totalorder %v3329, 0
        %v3436 = vand.u32 %v3329, 2139095040
        %v3437 = vshrl.u32 %v3436, 23
        %v3438 = vsub.s32 %v3437, 127
        %v3439 = vand.u32 2147483647, %v3329
        %v3440 = vand.u32 %v3439, 8388607
        %v3441 = vor.u32 %v3440, 8388608
        %v3442 = vsub.s32 0, %v3441
        %v3443 = vadd.s32 %v3438, 1
        %vm3444 = vcmp.gt.s32.totalorder %v3443, 0
        %v3445 = vsel %vm3444, %v3443, 0
        %v3446 = vshrl.u32 %v3445, 5
        %v3447 = vand.u32 %v3445, 31
        %v3448 = vsub.s32 32, %v3447
        %v3449 = vshrl.u32 683565275, %v3448
        %v3450 = vshll.u32 683565275, %v3447
        %v3451 = vshrl.u32 2475754826, %v3448
        %v3452 = vor.u32 %v3450, %v3451
        %v3453 = vshll.u32 2475754826, %v3447
        %v3454 = vshrl.u32 2131351028, %v3448
        %v3455 = vor.u32 %v3453, %v3454
        %v3456 = vshll.u32 2131351028, %v3447
        %v3457 = vshrl.u32 2102212464, %v3448
        %v3458 = vor.u32 %v3456, %v3457
        %v3459 = vshll.u32 2102212464, %v3447
        %v3460 = vshrl.u32 920167782, %v3448
        %v3461 = vor.u32 %v3459, %v3460
        %v3462 = vshll.u32 920167782, %v3447
        %v3463 = vshrl.u32 1326507024, %v3448
        %v3464 = vor.u32 %v3462, %v3463
        %vm3465 = vcmp.lt.s32.totalorder %v3446, 1
        %vm3466 = vcmp.lt.s32.totalorder %v3446, 2
        %vm3467 = vcmp.lt.s32.totalorder %v3446, 3
        %vm3468 = vcmp.lt.s32.totalorder %v3446, 4
        %v3469 = vsel %vm3465, %v3449, %v3452
        %v3470 = vsel %vm3468, %v3458, 2102212464
        %v3471 = vsel %vm3467, %v3455, %v3470
        %v3472 = vsel %vm3466, %v3469, %v3471
        %v3473 = vsel %vm3465, %v3452, %v3455
        %v3474 = vsel %vm3468, %v3461, 920167782
        %v3475 = vsel %vm3467, %v3458, %v3474
        %v3476 = vsel %vm3466, %v3473, %v3475
        %v3477 = vsel %vm3465, %v3455, %v3458
        %v3478 = vsel %vm3468, %v3464, 1326507024
        %v3479 = vsel %vm3467, %v3461, %v3478
        %v3480 = vsel %vm3466, %v3477, %v3479
        %v3481 = vshll.u32 %v3441, 8
        %v3482 = vmul.u32.u64.compose %v3481, %v3480
        %v3483 = vextract.low.u32 %v3482
        %v3484 = vextract.high.u32 %v3482
        %v3485 = vmul.u32.u64.compose %v3481, %v3476
        %v3486 = vextract.low.u32 %v3485
        %v3487 = vextract.high.u32 %v3485
        %v3488 = vmul.u32 %v3481, %v3472
        %v3489 = vadd.s32 %v3484, %v3486
        %vm3490 = vc.u32 %v3484, %v3486
        %v3491 = vadd.s32 %v3487, 1
        %v3492 = vsel %vm3490, %v3491, %v3487
        %v3493 = vadd.s32 %v3488, %v3492
        %v3494 = vadd.s32 %v3493, 536870912
        %v3495 = vshrl.u32 %v3494, 30
        %v3496 = vshll.u32 %v3495, 30
        %v3497 = vsub.s32 %v3493, %v3496
        %vm3498 = vcmp.lt.s32.totalorder %v3497, 0
        %v3499 = vsub.s32 0, %v3497
        %v3500 = vsel %vm3498, %v3499, %v3497
        %v3501 = vclz %v3500
        %v3502 = vsub.s32 %v3501, 2
        %vm3503 = vcmp.gt.s32.totalorder 0, %v3502
        %v3504 = vsel %vm3503, 0, %v3502
        %v3505 = vsub.s32 32, %v3504
        %v3506 = vshll.u32 %v3497, %v3504
        %v3507 = vshrl.u32 %v3489, %v3505
        %v3508 = vor.u32 %v3506, %v3507
        %v3509 = vsub.s32 4294967266, %v3504
        %v3510 = vadd.s32 %v3509, 127
        %v3511 = vshll.u32 %v3510, 23
        %v3512 = vor.u32 4788187, %v3511
        %v3513 = vand.u32 2147483647, %v3512
        %v3515 = vcvt.s32.f32 %v3508
        %v3516 = vmul.f32 %v3515, %v3513
        %v3517 = vxor.u32 %v3516, 2147483648
        %v3518 = vsel %vm3435, %v3517, %v3516
        %v3519 = vsub.s32 4, %v3495
        %v3520 = vsel %vm3435, %v3519, %v3495
        %v3521 = vsel %vm3434, %v3329, %v3518
        %v3522 = vsel %vm3434, 0, %v3520
        %v3523 = vcosq.f32.pop %v3521
        %v3524 = vsinq.f32.pop %v3521
        %vm3525 = vweird.f32 %v3329
        %v3526 = vand.u32 %v3522, 3
        %vm3527 = vcmp.lt.s32.totalorder %v3526, 2
        %vm3528 = vcmp.eq.s32.totalorder %v3526, 0
        %v3529 = vxor.u32 %v3524, 2147483648
        %v3530 = vsel %vm3528, %v3523, %v3529
        %vm3531 = vcmp.eq.s32.totalorder %v3526, 2
        %v3532 = vxor.u32 %v3523, 2147483648
        %v3533 = vsel %vm3531, %v3532, %v3524
        %v3534 = vsel %vm3527, %v3530, %v3533
        %v3535 = vsel %vm3525, nan, %v3534
        %v3536 = vlaneseq
        %v3537 = vshrl.u32 %v3536, 7
        %v3538 = vsub.s32 5, %v3537
        %v3539 = vrot.slane %v1065, %v3538
        %v3540 = vmul.f32 %v3539, %v3432
        %v3541 = vmul.f32 %v3539, %v3535
        %v3542 = vand.u32 2147483647, %v3328
        %vm3543 = vcmp.le.f32.partialorder %v3542, 0.7853982
        %vm3544 = vcmp.lt.s32.totalorder %v3328, 0
        %v3545 = vand.u32 %v3328, 2139095040
        %v3546 = vshrl.u32 %v3545, 23
        %v3547 = vsub.s32 %v3546, 127
        %v3548 = vand.u32 2147483647, %v3328
        %v3549 = vand.u32 %v3548, 8388607
        %v3550 = vor.u32 %v3549, 8388608
        %v3551 = vsub.s32 0, %v3550
        %v3552 = vadd.s32 %v3547, 1
        %vm3553 = vcmp.gt.s32.totalorder %v3552, 0
        %v3554 = vsel %vm3553, %v3552, 0
        %v3555 = vshrl.u32 %v3554, 5
        %v3556 = vand.u32 %v3554, 31
        %v3557 = vsub.s32 32, %v3556
        %v3558 = vshrl.u32 683565275, %v3557
        %v3559 = vshll.u32 683565275, %v3556
        %v3560 = vshrl.u32 2475754826, %v3557
        %v3561 = vor.u32 %v3559, %v3560
        %v3562 = vshll.u32 2475754826, %v3556
        %v3563 = vshrl.u32 2131351028, %v3557
        %v3564 = vor.u32 %v3562, %v3563
        %v3565 = vshll.u32 2131351028, %v3556
        %v3566 = vshrl.u32 2102212464, %v3557
        %v3567 = vor.u32 %v3565, %v3566
        %v3568 = vshll.u32 2102212464, %v3556
        %v3569 = vshrl.u32 920167782, %v3557
        %v3570 = vor.u32 %v3568, %v3569
        %v3571 = vshll.u32 920167782, %v3556
        %v3572 = vshrl.u32 1326507024, %v3557
        %v3573 = vor.u32 %v3571, %v3572
        %vm3574 = vcmp.lt.s32.totalorder %v3555, 1
        %vm3575 = vcmp.lt.s32.totalorder %v3555, 2
        %vm3576 = vcmp.lt.s32.totalorder %v3555, 3
        %vm3577 = vcmp.lt.s32.totalorder %v3555, 4
        %v3578 = vsel %vm3574, %v3558, %v3561
        %v3579 = vsel %vm3577, %v3567, 2102212464
        %v3580 = vsel %vm3576, %v3564, %v3579
        %v3581 = vsel %vm3575, %v3578, %v3580
        %v3582 = vsel %vm3574, %v3561, %v3564
        %v3583 = vsel %vm3577, %v3570, 920167782
        %v3584 = vsel %vm3576, %v3567, %v3583
        %v3585 = vsel %vm3575, %v3582, %v3584
        %v3586 = vsel %vm3574, %v3564, %v3567
        %v3587 = vsel %vm3577, %v3573, 1326507024
        %v3588 = vsel %vm3576, %v3570, %v3587
        %v3589 = vsel %vm3575, %v3586, %v3588
        %v3590 = vshll.u32 %v3550, 8
        %v3591 = vmul.u32.u64.compose %v3590, %v3589
        %v3592 = vextract.low.u32 %v3591
        %v3593 = vextract.high.u32 %v3591
        %v3594 = vmul.u32.u64.compose %v3590, %v3585
        %v3595 = vextract.low.u32 %v3594
        %v3596 = vextract.high.u32 %v3594
        %v3597 = vmul.u32 %v3590, %v3581
        %v3598 = vadd.s32 %v3593, %v3595
        %vm3599 = vc.u32 %v3593, %v3595
        %v3600 = vadd.s32 %v3596, 1
        %v3601 = vsel %vm3599, %v3600, %v3596
        %v3602 = vadd.s32 %v3597, %v3601
        %v3603 = vadd.s32 %v3602, 536870912
        %v3604 = vshrl.u32 %v3603, 30
        %v3605 = vshll.u32 %v3604, 30
        %v3606 = vsub.s32 %v3602, %v3605
        %vm3607 = vcmp.lt.s32.totalorder %v3606, 0
        %v3608 = vsub.s32 0, %v3606
        %v3609 = vsel %vm3607, %v3608, %v3606
        %v3610 = vclz %v3609
        %v3611 = vsub.s32 %v3610, 2
        %vm3612 = vcmp.gt.s32.totalorder 0, %v3611
        %v3613 = vsel %vm3612, 0, %v3611
        %v3614 = vsub.s32 32, %v3613
        %v3615 = vshll.u32 %v3606, %v3613
        %v3616 = vshrl.u32 %v3598, %v3614
        %v3617 = vor.u32 %v3615, %v3616
        %v3618 = vsub.s32 4294967266, %v3613
        %v3619 = vadd.s32 %v3618, 127
        %v3620 = vshll.u32 %v3619, 23
        %v3621 = vor.u32 4788187, %v3620
        %v3622 = vand.u32 2147483647, %v3621
        %v3624 = vcvt.s32.f32 %v3617
        %v3625 = vmul.f32 %v3624, %v3622
        %v3626 = vxor.u32 %v3625, 2147483648
        %v3627 = vsel %vm3544, %v3626, %v3625
        %v3628 = vsub.s32 4, %v3604
        %v3629 = vsel %vm3544, %v3628, %v3604
        %v3630 = vsel %vm3543, %v3328, %v3627
        %v3631 = vsel %vm3543, 0, %v3629
        %v3632 = vcosq.f32.pop %v3630
        %v3633 = vsinq.f32.pop %v3630
        %vm3634 = vweird.f32 %v3328
        %v3635 = vadd.s32 %v3631, 3
        %v3636 = vand.u32 %v3635, 3
        %vm3637 = vcmp.lt.s32.totalorder %v3636, 2
        %vm3638 = vcmp.eq.s32.totalorder %v3636, 0
        %v3639 = vxor.u32 %v3633, 2147483648
        %v3640 = vsel %vm3638, %v3632, %v3639
        %vm3641 = vcmp.eq.s32.totalorder %v3636, 2
        %v3642 = vxor.u32 %v3632, 2147483648
        %v3643 = vsel %vm3641, %v3642, %v3633
        %v3644 = vsel %vm3637, %v3640, %v3643
        %v3645 = vsel %vm3634, nan, %v3644
        %v3646 = vand.u32 2147483647, %v3329
        %vm3647 = vcmp.le.f32.partialorder %v3646, 0.7853982
        %vm3648 = vcmp.lt.s32.totalorder %v3329, 0
        %v3649 = vand.u32 %v3329, 2139095040
        %v3650 = vshrl.u32 %v3649, 23
        %v3651 = vsub.s32 %v3650, 127
        %v3652 = vand.u32 2147483647, %v3329
        %v3653 = vand.u32 %v3652, 8388607
        %v3654 = vor.u32 %v3653, 8388608
        %v3655 = vsub.s32 0, %v3654
        %v3656 = vadd.s32 %v3651, 1
        %vm3657 = vcmp.gt.s32.totalorder %v3656, 0
        %v3658 = vsel %vm3657, %v3656, 0
        %v3659 = vshrl.u32 %v3658, 5
        %v3660 = vand.u32 %v3658, 31
        %v3661 = vsub.s32 32, %v3660
        %v3662 = vshrl.u32 683565275, %v3661
        %v3663 = vshll.u32 683565275, %v3660
        %v3664 = vshrl.u32 2475754826, %v3661
        %v3665 = vor.u32 %v3663, %v3664
        %v3666 = vshll.u32 2475754826, %v3660
        %v3667 = vshrl.u32 2131351028, %v3661
        %v3668 = vor.u32 %v3666, %v3667
        %v3669 = vshll.u32 2131351028, %v3660
        %v3670 = vshrl.u32 2102212464, %v3661
        %v3671 = vor.u32 %v3669, %v3670
        %v3672 = vshll.u32 2102212464, %v3660
        %v3673 = vshrl.u32 920167782, %v3661
        %v3674 = vor.u32 %v3672, %v3673
        %v3675 = vshll.u32 920167782, %v3660
        %v3676 = vshrl.u32 1326507024, %v3661
        %v3677 = vor.u32 %v3675, %v3676
        %vm3678 = vcmp.lt.s32.totalorder %v3659, 1
        %vm3679 = vcmp.lt.s32.totalorder %v3659, 2
        %vm3680 = vcmp.lt.s32.totalorder %v3659, 3
        %vm3681 = vcmp.lt.s32.totalorder %v3659, 4
        %v3682 = vsel %vm3678, %v3662, %v3665
        %v3683 = vsel %vm3681, %v3671, 2102212464
        %v3684 = vsel %vm3680, %v3668, %v3683
        %v3685 = vsel %vm3679, %v3682, %v3684
        %v3686 = vsel %vm3678, %v3665, %v3668
        %v3687 = vsel %vm3681, %v3674, 920167782
        %v3688 = vsel %vm3680, %v3671, %v3687
        %v3689 = vsel %vm3679, %v3686, %v3688
        %v3690 = vsel %vm3678, %v3668, %v3671
        %v3691 = vsel %vm3681, %v3677, 1326507024
        %v3692 = vsel %vm3680, %v3674, %v3691
        %v3693 = vsel %vm3679, %v3690, %v3692
        %v3694 = vshll.u32 %v3654, 8
        %v3695 = vmul.u32.u64.compose %v3694, %v3693
        %v3696 = vextract.low.u32 %v3695
        %v3697 = vextract.high.u32 %v3695
        %v3698 = vmul.u32.u64.compose %v3694, %v3689
        %v3699 = vextract.low.u32 %v3698
        %v3700 = vextract.high.u32 %v3698
        %v3701 = vmul.u32 %v3694, %v3685
        %v3702 = vadd.s32 %v3697, %v3699
        %vm3703 = vc.u32 %v3697, %v3699
        %v3704 = vadd.s32 %v3700, 1
        %v3705 = vsel %vm3703, %v3704, %v3700
        %v3706 = vadd.s32 %v3701, %v3705
        %v3707 = vadd.s32 %v3706, 536870912
        %v3708 = vshrl.u32 %v3707, 30
        %v3709 = vshll.u32 %v3708, 30
        %v3710 = vsub.s32 %v3706, %v3709
        %vm3711 = vcmp.lt.s32.totalorder %v3710, 0
        %v3712 = vsub.s32 0, %v3710
        %v3713 = vsel %vm3711, %v3712, %v3710
        %v3714 = vclz %v3713
        %v3715 = vsub.s32 %v3714, 2
        %vm3716 = vcmp.gt.s32.totalorder 0, %v3715
        %v3717 = vsel %vm3716, 0, %v3715
        %v3718 = vsub.s32 32, %v3717
        %v3719 = vshll.u32 %v3710, %v3717
        %v3720 = vshrl.u32 %v3702, %v3718
        %v3721 = vor.u32 %v3719, %v3720
        %v3722 = vsub.s32 4294967266, %v3717
        %v3723 = vadd.s32 %v3722, 127
        %v3724 = vshll.u32 %v3723, 23
        %v3725 = vor.u32 4788187, %v3724
        %v3726 = vand.u32 2147483647, %v3725
        %v3728 = vcvt.s32.f32 %v3721
        %v3729 = vmul.f32 %v3728, %v3726
        %v3730 = vxor.u32 %v3729, 2147483648
        %v3731 = vsel %vm3648, %v3730, %v3729
        %v3732 = vsub.s32 4, %v3708
        %v3733 = vsel %vm3648, %v3732, %v3708
        %v3734 = vsel %vm3647, %v3329, %v3731
        %v3735 = vsel %vm3647, 0, %v3733
        %v3736 = vcosq.f32.pop %v3734
        %v3737 = vsinq.f32.pop %v3734
        %vm3738 = vweird.f32 %v3329
        %v3739 = vadd.s32 %v3735, 3
        %v3740 = vand.u32 %v3739, 3
        %vm3741 = vcmp.lt.s32.totalorder %v3740, 2
        %vm3742 = vcmp.eq.s32.totalorder %v3740, 0
        %v3743 = vxor.u32 %v3737, 2147483648
        %v3744 = vsel %vm3742, %v3736, %v3743
        %vm3745 = vcmp.eq.s32.totalorder %v3740, 2
        %v3746 = vxor.u32 %v3736, 2147483648
        %v3747 = vsel %vm3745, %v3746, %v3737
        %v3748 = vsel %vm3741, %v3744, %v3747
        %v3749 = vsel %vm3738, nan, %v3748
        %v3750 = vlaneseq
        %v3751 = vshrl.u32 %v3750, 7
        %v3752 = vsub.s32 5, %v3751
        %v3753 = vrot.slane %v1068, %v3752
        %v3754 = vmul.f32 %v3753, %v3645
        %v3755 = vmul.f32 %v3753, %v3749
        %v3756 = vsub.f32 %v3540, %v3754
        %v3757 = vsub.f32 %v3541, %v3755
        %v3758 = vmul.f32 %v3321, %v3756
        %v3759 = vmul.f32 %v3323, %v3757
        %v3760 = vadd.f32 %v3312, %v3758
        %v3761 = vadd.f32 %v3313, %v3759
        %v3762 = vlaneseq
        %v3763 = vshrl.u32 %v3762, 7
        %v3764 = vsub.s32 6, %v3763
        %v3765 = vrot.slane %v835, %v3764
        %v3766 = vmul.f32 %v1072, %v3765
        %v3767 = vmul.f32 %v1073, %v3765
        %v3768 = vmul.f32 %v3766, 1.442695
        %v3769 = vpow.pop %v3768
        %v3770 = vmul.f32 %v3767, 1.442695
        %v3771 = vpow.pop %v3770
        %v3772 = vlaneseq
        %v3773 = vshrl.u32 %v3772, 7
        %v3774 = vsub.s32 6, %v3773
        %v3775 = vrot.slane %v836, %v3774
        %v3776 = vmul.f32 %v1072, %v3775
        %v3777 = vmul.f32 %v1073, %v3775
        %v3778 = vand.u32 2147483647, %v3776
        %vm3779 = vcmp.le.f32.partialorder %v3778, 0.7853982
        %vm3780 = vcmp.lt.s32.totalorder %v3776, 0
        %v3781 = vand.u32 %v3776, 2139095040
        %v3782 = vshrl.u32 %v3781, 23
        %v3783 = vsub.s32 %v3782, 127
        %v3784 = vand.u32 2147483647, %v3776
        %v3785 = vand.u32 %v3784, 8388607
        %v3786 = vor.u32 %v3785, 8388608
        %v3787 = vsub.s32 0, %v3786
        %v3788 = vadd.s32 %v3783, 1
        %vm3789 = vcmp.gt.s32.totalorder %v3788, 0
        %v3790 = vsel %vm3789, %v3788, 0
        %v3791 = vshrl.u32 %v3790, 5
        %v3792 = vand.u32 %v3790, 31
        %v3793 = vsub.s32 32, %v3792
        %v3794 = vshrl.u32 683565275, %v3793
        %v3795 = vshll.u32 683565275, %v3792
        %v3796 = vshrl.u32 2475754826, %v3793
        %v3797 = vor.u32 %v3795, %v3796
        %v3798 = vshll.u32 2475754826, %v3792
        %v3799 = vshrl.u32 2131351028, %v3793
        %v3800 = vor.u32 %v3798, %v3799
        %v3801 = vshll.u32 2131351028, %v3792
        %v3802 = vshrl.u32 2102212464, %v3793
        %v3803 = vor.u32 %v3801, %v3802
        %v3804 = vshll.u32 2102212464, %v3792
        %v3805 = vshrl.u32 920167782, %v3793
        %v3806 = vor.u32 %v3804, %v3805
        %v3807 = vshll.u32 920167782, %v3792
        %v3808 = vshrl.u32 1326507024, %v3793
        %v3809 = vor.u32 %v3807, %v3808
        %vm3810 = vcmp.lt.s32.totalorder %v3791, 1
        %vm3811 = vcmp.lt.s32.totalorder %v3791, 2
        %vm3812 = vcmp.lt.s32.totalorder %v3791, 3
        %vm3813 = vcmp.lt.s32.totalorder %v3791, 4
        %v3814 = vsel %vm3810, %v3794, %v3797
        %v3815 = vsel %vm3813, %v3803, 2102212464
        %v3816 = vsel %vm3812, %v3800, %v3815
        %v3817 = vsel %vm3811, %v3814, %v3816
        %v3818 = vsel %vm3810, %v3797, %v3800
        %v3819 = vsel %vm3813, %v3806, 920167782
        %v3820 = vsel %vm3812, %v3803, %v3819
        %v3821 = vsel %vm3811, %v3818, %v3820
        %v3822 = vsel %vm3810, %v3800, %v3803
        %v3823 = vsel %vm3813, %v3809, 1326507024
        %v3824 = vsel %vm3812, %v3806, %v3823
        %v3825 = vsel %vm3811, %v3822, %v3824
        %v3826 = vshll.u32 %v3786, 8
        %v3827 = vmul.u32.u64.compose %v3826, %v3825
        %v3828 = vextract.low.u32 %v3827
        %v3829 = vextract.high.u32 %v3827
        %v3830 = vmul.u32.u64.compose %v3826, %v3821
        %v3831 = vextract.low.u32 %v3830
        %v3832 = vextract.high.u32 %v3830
        %v3833 = vmul.u32 %v3826, %v3817
        %v3834 = vadd.s32 %v3829, %v3831
        %vm3835 = vc.u32 %v3829, %v3831
        %v3836 = vadd.s32 %v3832, 1
        %v3837 = vsel %vm3835, %v3836, %v3832
        %v3838 = vadd.s32 %v3833, %v3837
        %v3839 = vadd.s32 %v3838, 536870912
        %v3840 = vshrl.u32 %v3839, 30
        %v3841 = vshll.u32 %v3840, 30
        %v3842 = vsub.s32 %v3838, %v3841
        %vm3843 = vcmp.lt.s32.totalorder %v3842, 0
        %v3844 = vsub.s32 0, %v3842
        %v3845 = vsel %vm3843, %v3844, %v3842
        %v3846 = vclz %v3845
        %v3847 = vsub.s32 %v3846, 2
        %vm3848 = vcmp.gt.s32.totalorder 0, %v3847
        %v3849 = vsel %vm3848, 0, %v3847
        %v3850 = vsub.s32 32, %v3849
        %v3851 = vshll.u32 %v3842, %v3849
        %v3852 = vshrl.u32 %v3834, %v3850
        %v3853 = vor.u32 %v3851, %v3852
        %v3854 = vsub.s32 4294967266, %v3849
        %v3855 = vadd.s32 %v3854, 127
        %v3856 = vshll.u32 %v3855, 23
        %v3857 = vor.u32 4788187, %v3856
        %v3858 = vand.u32 2147483647, %v3857
        %v3860 = vcvt.s32.f32 %v3853
        %v3861 = vmul.f32 %v3860, %v3858
        %v3862 = vxor.u32 %v3861, 2147483648
        %v3863 = vsel %vm3780, %v3862, %v3861
        %v3864 = vsub.s32 4, %v3840
        %v3865 = vsel %vm3780, %v3864, %v3840
        %v3866 = vsel %vm3779, %v3776, %v3863
        %v3867 = vsel %vm3779, 0, %v3865
        %v3868 = vcosq.f32.pop %v3866
        %v3869 = vsinq.f32.pop %v3866
        %vm3870 = vweird.f32 %v3776
        %v3871 = vand.u32 %v3867, 3
        %vm3872 = vcmp.lt.s32.totalorder %v3871, 2
        %vm3873 = vcmp.eq.s32.totalorder %v3871, 0
        %v3874 = vxor.u32 %v3869, 2147483648
        %v3875 = vsel %vm3873, %v3868, %v3874
        %vm3876 = vcmp.eq.s32.totalorder %v3871, 2
        %v3877 = vxor.u32 %v3868, 2147483648
        %v3878 = vsel %vm3876, %v3877, %v3869
        %v3879 = vsel %vm3872, %v3875, %v3878
        %v3880 = vsel %vm3870, nan, %v3879
        %v3881 = vand.u32 2147483647, %v3777
        %vm3882 = vcmp.le.f32.partialorder %v3881, 0.7853982
        %vm3883 = vcmp.lt.s32.totalorder %v3777, 0
        %v3884 = vand.u32 %v3777, 2139095040
        %v3885 = vshrl.u32 %v3884, 23
        %v3886 = vsub.s32 %v3885, 127
        %v3887 = vand.u32 2147483647, %v3777
        %v3888 = vand.u32 %v3887, 8388607
        %v3889 = vor.u32 %v3888, 8388608
        %v3890 = vsub.s32 0, %v3889
        %v3891 = vadd.s32 %v3886, 1
        %vm3892 = vcmp.gt.s32.totalorder %v3891, 0
        %v3893 = vsel %vm3892, %v3891, 0
        %v3894 = vshrl.u32 %v3893, 5
        %v3895 = vand.u32 %v3893, 31
        %v3896 = vsub.s32 32, %v3895
        %v3897 = vshrl.u32 683565275, %v3896
        %v3898 = vshll.u32 683565275, %v3895
        %v3899 = vshrl.u32 2475754826, %v3896
        %v3900 = vor.u32 %v3898, %v3899
        %v3901 = vshll.u32 2475754826, %v3895
        %v3902 = vshrl.u32 2131351028, %v3896
        %v3903 = vor.u32 %v3901, %v3902
        %v3904 = vshll.u32 2131351028, %v3895
        %v3905 = vshrl.u32 2102212464, %v3896
        %v3906 = vor.u32 %v3904, %v3905
        %v3907 = vshll.u32 2102212464, %v3895
        %v3908 = vshrl.u32 920167782, %v3896
        %v3909 = vor.u32 %v3907, %v3908
        %v3910 = vshll.u32 920167782, %v3895
        %v3911 = vshrl.u32 1326507024, %v3896
        %v3912 = vor.u32 %v3910, %v3911
        %vm3913 = vcmp.lt.s32.totalorder %v3894, 1
        %vm3914 = vcmp.lt.s32.totalorder %v3894, 2
        %vm3915 = vcmp.lt.s32.totalorder %v3894, 3
        %vm3916 = vcmp.lt.s32.totalorder %v3894, 4
        %v3917 = vsel %vm3913, %v3897, %v3900
        %v3918 = vsel %vm3916, %v3906, 2102212464
        %v3919 = vsel %vm3915, %v3903, %v3918
        %v3920 = vsel %vm3914, %v3917, %v3919
        %v3921 = vsel %vm3913, %v3900, %v3903
        %v3922 = vsel %vm3916, %v3909, 920167782
        %v3923 = vsel %vm3915, %v3906, %v3922
        %v3924 = vsel %vm3914, %v3921, %v3923
        %v3925 = vsel %vm3913, %v3903, %v3906
        %v3926 = vsel %vm3916, %v3912, 1326507024
        %v3927 = vsel %vm3915, %v3909, %v3926
        %v3928 = vsel %vm3914, %v3925, %v3927
        %v3929 = vshll.u32 %v3889, 8
        %v3930 = vmul.u32.u64.compose %v3929, %v3928
        %v3931 = vextract.low.u32 %v3930
        %v3932 = vextract.high.u32 %v3930
        %v3933 = vmul.u32.u64.compose %v3929, %v3924
        %v3934 = vextract.low.u32 %v3933
        %v3935 = vextract.high.u32 %v3933
        %v3936 = vmul.u32 %v3929, %v3920
        %v3937 = vadd.s32 %v3932, %v3934
        %vm3938 = vc.u32 %v3932, %v3934
        %v3939 = vadd.s32 %v3935, 1
        %v3940 = vsel %vm3938, %v3939, %v3935
        %v3941 = vadd.s32 %v3936, %v3940
        %v3942 = vadd.s32 %v3941, 536870912
        %v3943 = vshrl.u32 %v3942, 30
        %v3944 = vshll.u32 %v3943, 30
        %v3945 = vsub.s32 %v3941, %v3944
        %vm3946 = vcmp.lt.s32.totalorder %v3945, 0
        %v3947 = vsub.s32 0, %v3945
        %v3948 = vsel %vm3946, %v3947, %v3945
        %v3949 = vclz %v3948
        %v3950 = vsub.s32 %v3949, 2
        %vm3951 = vcmp.gt.s32.totalorder 0, %v3950
        %v3952 = vsel %vm3951, 0, %v3950
        %v3953 = vsub.s32 32, %v3952
        %v3954 = vshll.u32 %v3945, %v3952
        %v3955 = vshrl.u32 %v3937, %v3953
        %v3956 = vor.u32 %v3954, %v3955
        %v3957 = vsub.s32 4294967266, %v3952
        %v3958 = vadd.s32 %v3957, 127
        %v3959 = vshll.u32 %v3958, 23
        %v3960 = vor.u32 4788187, %v3959
        %v3961 = vand.u32 2147483647, %v3960
        %v3963 = vcvt.s32.f32 %v3956
        %v3964 = vmul.f32 %v3963, %v3961
        %v3965 = vxor.u32 %v3964, 2147483648
        %v3966 = vsel %vm3883, %v3965, %v3964
        %v3967 = vsub.s32 4, %v3943
        %v3968 = vsel %vm3883, %v3967, %v3943
        %v3969 = vsel %vm3882, %v3777, %v3966
        %v3970 = vsel %vm3882, 0, %v3968
        %v3971 = vcosq.f32.pop %v3969
        %v3972 = vsinq.f32.pop %v3969
        %vm3973 = vweird.f32 %v3777
        %v3974 = vand.u32 %v3970, 3
        %vm3975 = vcmp.lt.s32.totalorder %v3974, 2
        %vm3976 = vcmp.eq.s32.totalorder %v3974, 0
        %v3977 = vxor.u32 %v3972, 2147483648
        %v3978 = vsel %vm3976, %v3971, %v3977
        %vm3979 = vcmp.eq.s32.totalorder %v3974, 2
        %v3980 = vxor.u32 %v3971, 2147483648
        %v3981 = vsel %vm3979, %v3980, %v3972
        %v3982 = vsel %vm3975, %v3978, %v3981
        %v3983 = vsel %vm3973, nan, %v3982
        %v3984 = vlaneseq
        %v3985 = vshrl.u32 %v3984, 7
        %v3986 = vsub.s32 6, %v3985
        %v3987 = vrot.slane %v1065, %v3986
        %v3988 = vmul.f32 %v3987, %v3880
        %v3989 = vmul.f32 %v3987, %v3983
        %v3990 = vand.u32 2147483647, %v3776
        %vm3991 = vcmp.le.f32.partialorder %v3990, 0.7853982
        %vm3992 = vcmp.lt.s32.totalorder %v3776, 0
        %v3993 = vand.u32 %v3776, 2139095040
        %v3994 = vshrl.u32 %v3993, 23
        %v3995 = vsub.s32 %v3994, 127
        %v3996 = vand.u32 2147483647, %v3776
        %v3997 = vand.u32 %v3996, 8388607
        %v3998 = vor.u32 %v3997, 8388608
        %v3999 = vsub.s32 0, %v3998
        %v4000 = vadd.s32 %v3995, 1
        %vm4001 = vcmp.gt.s32.totalorder %v4000, 0
        %v4002 = vsel %vm4001, %v4000, 0
        %v4003 = vshrl.u32 %v4002, 5
        %v4004 = vand.u32 %v4002, 31
        %v4005 = vsub.s32 32, %v4004
        %v4006 = vshrl.u32 683565275, %v4005
        %v4007 = vshll.u32 683565275, %v4004
        %v4008 = vshrl.u32 2475754826, %v4005
        %v4009 = vor.u32 %v4007, %v4008
        %v4010 = vshll.u32 2475754826, %v4004
        %v4011 = vshrl.u32 2131351028, %v4005
        %v4012 = vor.u32 %v4010, %v4011
        %v4013 = vshll.u32 2131351028, %v4004
        %v4014 = vshrl.u32 2102212464, %v4005
        %v4015 = vor.u32 %v4013, %v4014
        %v4016 = vshll.u32 2102212464, %v4004
        %v4017 = vshrl.u32 920167782, %v4005
        %v4018 = vor.u32 %v4016, %v4017
        %v4019 = vshll.u32 920167782, %v4004
        %v4020 = vshrl.u32 1326507024, %v4005
        %v4021 = vor.u32 %v4019, %v4020
        %vm4022 = vcmp.lt.s32.totalorder %v4003, 1
        %vm4023 = vcmp.lt.s32.totalorder %v4003, 2
        %vm4024 = vcmp.lt.s32.totalorder %v4003, 3
        %vm4025 = vcmp.lt.s32.totalorder %v4003, 4
        %v4026 = vsel %vm4022, %v4006, %v4009
        %v4027 = vsel %vm4025, %v4015, 2102212464
        %v4028 = vsel %vm4024, %v4012, %v4027
        %v4029 = vsel %vm4023, %v4026, %v4028
        %v4030 = vsel %vm4022, %v4009, %v4012
        %v4031 = vsel %vm4025, %v4018, 920167782
        %v4032 = vsel %vm4024, %v4015, %v4031
        %v4033 = vsel %vm4023, %v4030, %v4032
        %v4034 = vsel %vm4022, %v4012, %v4015
        %v4035 = vsel %vm4025, %v4021, 1326507024
        %v4036 = vsel %vm4024, %v4018, %v4035
        %v4037 = vsel %vm4023, %v4034, %v4036
        %v4038 = vshll.u32 %v3998, 8
        %v4039 = vmul.u32.u64.compose %v4038, %v4037
        %v4040 = vextract.low.u32 %v4039
        %v4041 = vextract.high.u32 %v4039
        %v4042 = vmul.u32.u64.compose %v4038, %v4033
        %v4043 = vextract.low.u32 %v4042
        %v4044 = vextract.high.u32 %v4042
        %v4045 = vmul.u32 %v4038, %v4029
        %v4046 = vadd.s32 %v4041, %v4043
        %vm4047 = vc.u32 %v4041, %v4043
        %v4048 = vadd.s32 %v4044, 1
        %v4049 = vsel %vm4047, %v4048, %v4044
        %v4050 = vadd.s32 %v4045, %v4049
        %v4051 = vadd.s32 %v4050, 536870912
        %v4052 = vshrl.u32 %v4051, 30
        %v4053 = vshll.u32 %v4052, 30
        %v4054 = vsub.s32 %v4050, %v4053
        %vm4055 = vcmp.lt.s32.totalorder %v4054, 0
        %v4056 = vsub.s32 0, %v4054
        %v4057 = vsel %vm4055, %v4056, %v4054
        %v4058 = vclz %v4057
        %v4059 = vsub.s32 %v4058, 2
        %vm4060 = vcmp.gt.s32.totalorder 0, %v4059
        %v4061 = vsel %vm4060, 0, %v4059
        %v4062 = vsub.s32 32, %v4061
        %v4063 = vshll.u32 %v4054, %v4061
        %v4064 = vshrl.u32 %v4046, %v4062
        %v4065 = vor.u32 %v4063, %v4064
        %v4066 = vsub.s32 4294967266, %v4061
        %v4067 = vadd.s32 %v4066, 127
        %v4068 = vshll.u32 %v4067, 23
        %v4069 = vor.u32 4788187, %v4068
        %v4070 = vand.u32 2147483647, %v4069
        %v4072 = vcvt.s32.f32 %v4065
        %v4073 = vmul.f32 %v4072, %v4070
        %v4074 = vxor.u32 %v4073, 2147483648
        %v4075 = vsel %vm3992, %v4074, %v4073
        %v4076 = vsub.s32 4, %v4052
        %v4077 = vsel %vm3992, %v4076, %v4052
        %v4078 = vsel %vm3991, %v3776, %v4075
        %v4079 = vsel %vm3991, 0, %v4077
        %v4080 = vcosq.f32.pop %v4078
        %v4081 = vsinq.f32.pop %v4078
        %vm4082 = vweird.f32 %v3776
        %v4083 = vadd.s32 %v4079, 3
        %v4084 = vand.u32 %v4083, 3
        %vm4085 = vcmp.lt.s32.totalorder %v4084, 2
        %vm4086 = vcmp.eq.s32.totalorder %v4084, 0
        %v4087 = vxor.u32 %v4081, 2147483648
        %v4088 = vsel %vm4086, %v4080, %v4087
        %vm4089 = vcmp.eq.s32.totalorder %v4084, 2
        %v4090 = vxor.u32 %v4080, 2147483648
        %v4091 = vsel %vm4089, %v4090, %v4081
        %v4092 = vsel %vm4085, %v4088, %v4091
        %v4093 = vsel %vm4082, nan, %v4092
        %v4094 = vand.u32 2147483647, %v3777
        %vm4095 = vcmp.le.f32.partialorder %v4094, 0.7853982
        %vm4096 = vcmp.lt.s32.totalorder %v3777, 0
        %v4097 = vand.u32 %v3777, 2139095040
        %v4098 = vshrl.u32 %v4097, 23
        %v4099 = vsub.s32 %v4098, 127
        %v4100 = vand.u32 2147483647, %v3777
        %v4101 = vand.u32 %v4100, 8388607
        %v4102 = vor.u32 %v4101, 8388608
        %v4103 = vsub.s32 0, %v4102
        %v4104 = vadd.s32 %v4099, 1
        %vm4105 = vcmp.gt.s32.totalorder %v4104, 0
        %v4106 = vsel %vm4105, %v4104, 0
        %v4107 = vshrl.u32 %v4106, 5
        %v4108 = vand.u32 %v4106, 31
        %v4109 = vsub.s32 32, %v4108
        %v4110 = vshrl.u32 683565275, %v4109
        %v4111 = vshll.u32 683565275, %v4108
        %v4112 = vshrl.u32 2475754826, %v4109
        %v4113 = vor.u32 %v4111, %v4112
        %v4114 = vshll.u32 2475754826, %v4108
        %v4115 = vshrl.u32 2131351028, %v4109
        %v4116 = vor.u32 %v4114, %v4115
        %v4117 = vshll.u32 2131351028, %v4108
        %v4118 = vshrl.u32 2102212464, %v4109
        %v4119 = vor.u32 %v4117, %v4118
        %v4120 = vshll.u32 2102212464, %v4108
        %v4121 = vshrl.u32 920167782, %v4109
        %v4122 = vor.u32 %v4120, %v4121
        %v4123 = vshll.u32 920167782, %v4108
        %v4124 = vshrl.u32 1326507024, %v4109
        %v4125 = vor.u32 %v4123, %v4124
        %vm4126 = vcmp.lt.s32.totalorder %v4107, 1
        %vm4127 = vcmp.lt.s32.totalorder %v4107, 2
        %vm4128 = vcmp.lt.s32.totalorder %v4107, 3
        %vm4129 = vcmp.lt.s32.totalorder %v4107, 4
        %v4130 = vsel %vm4126, %v4110, %v4113
        %v4131 = vsel %vm4129, %v4119, 2102212464
        %v4132 = vsel %vm4128, %v4116, %v4131
        %v4133 = vsel %vm4127, %v4130, %v4132
        %v4134 = vsel %vm4126, %v4113, %v4116
        %v4135 = vsel %vm4129, %v4122, 920167782
        %v4136 = vsel %vm4128, %v4119, %v4135
        %v4137 = vsel %vm4127, %v4134, %v4136
        %v4138 = vsel %vm4126, %v4116, %v4119
        %v4139 = vsel %vm4129, %v4125, 1326507024
        %v4140 = vsel %vm4128, %v4122, %v4139
        %v4141 = vsel %vm4127, %v4138, %v4140
        %v4142 = vshll.u32 %v4102, 8
        %v4143 = vmul.u32.u64.compose %v4142, %v4141
        %v4144 = vextract.low.u32 %v4143
        %v4145 = vextract.high.u32 %v4143
        %v4146 = vmul.u32.u64.compose %v4142, %v4137
        %v4147 = vextract.low.u32 %v4146
        %v4148 = vextract.high.u32 %v4146
        %v4149 = vmul.u32 %v4142, %v4133
        %v4150 = vadd.s32 %v4145, %v4147
        %vm4151 = vc.u32 %v4145, %v4147
        %v4152 = vadd.s32 %v4148, 1
        %v4153 = vsel %vm4151, %v4152, %v4148
        %v4154 = vadd.s32 %v4149, %v4153
        %v4155 = vadd.s32 %v4154, 536870912
        %v4156 = vshrl.u32 %v4155, 30
        %v4157 = vshll.u32 %v4156, 30
        %v4158 = vsub.s32 %v4154, %v4157
        %vm4159 = vcmp.lt.s32.totalorder %v4158, 0
        %v4160 = vsub.s32 0, %v4158
        %v4161 = vsel %vm4159, %v4160, %v4158
        %v4162 = vclz %v4161
        %v4163 = vsub.s32 %v4162, 2
        %vm4164 = vcmp.gt.s32.totalorder 0, %v4163
        %v4165 = vsel %vm4164, 0, %v4163
        %v4166 = vsub.s32 32, %v4165
        %v4167 = vshll.u32 %v4158, %v4165
        %v4168 = vshrl.u32 %v4150, %v4166
        %v4169 = vor.u32 %v4167, %v4168
        %v4170 = vsub.s32 4294967266, %v4165
        %v4171 = vadd.s32 %v4170, 127
        %v4172 = vshll.u32 %v4171, 23
        %v4173 = vor.u32 4788187, %v4172
        %v4174 = vand.u32 2147483647, %v4173
        %v4176 = vcvt.s32.f32 %v4169
        %v4177 = vmul.f32 %v4176, %v4174
        %v4178 = vxor.u32 %v4177, 2147483648
        %v4179 = vsel %vm4096, %v4178, %v4177
        %v4180 = vsub.s32 4, %v4156
        %v4181 = vsel %vm4096, %v4180, %v4156
        %v4182 = vsel %vm4095, %v3777, %v4179
        %v4183 = vsel %vm4095, 0, %v4181
        %v4184 = vcosq.f32.pop %v4182
        %v4185 = vsinq.f32.pop %v4182
        %vm4186 = vweird.f32 %v3777
        %v4187 = vadd.s32 %v4183, 3
        %v4188 = vand.u32 %v4187, 3
        %vm4189 = vcmp.lt.s32.totalorder %v4188, 2
        %vm4190 = vcmp.eq.s32.totalorder %v4188, 0
        %v4191 = vxor.u32 %v4185, 2147483648
        %v4192 = vsel %vm4190, %v4184, %v4191
        %vm4193 = vcmp.eq.s32.totalorder %v4188, 2
        %v4194 = vxor.u32 %v4184, 2147483648
        %v4195 = vsel %vm4193, %v4194, %v4185
        %v4196 = vsel %vm4189, %v4192, %v4195
        %v4197 = vsel %vm4186, nan, %v4196
        %v4198 = vlaneseq
        %v4199 = vshrl.u32 %v4198, 7
        %v4200 = vsub.s32 6, %v4199
        %v4201 = vrot.slane %v1068, %v4200
        %v4202 = vmul.f32 %v4201, %v4093
        %v4203 = vmul.f32 %v4201, %v4197
        %v4204 = vsub.f32 %v3988, %v4202
        %v4205 = vsub.f32 %v3989, %v4203
        %v4206 = vmul.f32 %v3769, %v4204
        %v4207 = vmul.f32 %v3771, %v4205
        %v4208 = vadd.f32 %v3760, %v4206
        %v4209 = vadd.f32 %v3761, %v4207
        %v4210 = vlaneseq
        %v4211 = vshrl.u32 %v4210, 7
        %v4212 = vsub.s32 7, %v4211
        %v4213 = vrot.slane %v835, %v4212
        %v4214 = vmul.f32 %v1072, %v4213
        %v4215 = vmul.f32 %v1073, %v4213
        %v4216 = vmul.f32 %v4214, 1.442695
        %v4217 = vpow.pop %v4216
        %v4218 = vmul.f32 %v4215, 1.442695
        %v4219 = vpow.pop %v4218
        %v4220 = vlaneseq
        %v4221 = vshrl.u32 %v4220, 7
        %v4222 = vsub.s32 7, %v4221
        %v4223 = vrot.slane %v836, %v4222
        %v4224 = vmul.f32 %v1072, %v4223
        %v4225 = vmul.f32 %v1073, %v4223
        %v4226 = vand.u32 2147483647, %v4224
        %vm4227 = vcmp.le.f32.partialorder %v4226, 0.7853982
        %vm4228 = vcmp.lt.s32.totalorder %v4224, 0
        %v4229 = vand.u32 %v4224, 2139095040
        %v4230 = vshrl.u32 %v4229, 23
        %v4231 = vsub.s32 %v4230, 127
        %v4232 = vand.u32 2147483647, %v4224
        %v4233 = vand.u32 %v4232, 8388607
        %v4234 = vor.u32 %v4233, 8388608
        %v4235 = vsub.s32 0, %v4234
        %v4236 = vadd.s32 %v4231, 1
        %vm4237 = vcmp.gt.s32.totalorder %v4236, 0
        %v4238 = vsel %vm4237, %v4236, 0
        %v4239 = vshrl.u32 %v4238, 5
        %v4240 = vand.u32 %v4238, 31
        %v4241 = vsub.s32 32, %v4240
        %v4242 = vshrl.u32 683565275, %v4241
        %v4243 = vshll.u32 683565275, %v4240
        %v4244 = vshrl.u32 2475754826, %v4241
        %v4245 = vor.u32 %v4243, %v4244
        %v4246 = vshll.u32 2475754826, %v4240
        %v4247 = vshrl.u32 2131351028, %v4241
        %v4248 = vor.u32 %v4246, %v4247
        %v4249 = vshll.u32 2131351028, %v4240
        %v4250 = vshrl.u32 2102212464, %v4241
        %v4251 = vor.u32 %v4249, %v4250
        %v4252 = vshll.u32 2102212464, %v4240
        %v4253 = vshrl.u32 920167782, %v4241
        %v4254 = vor.u32 %v4252, %v4253
        %v4255 = vshll.u32 920167782, %v4240
        %v4256 = vshrl.u32 1326507024, %v4241
        %v4257 = vor.u32 %v4255, %v4256
        %vm4258 = vcmp.lt.s32.totalorder %v4239, 1
        %vm4259 = vcmp.lt.s32.totalorder %v4239, 2
        %vm4260 = vcmp.lt.s32.totalorder %v4239, 3
        %vm4261 = vcmp.lt.s32.totalorder %v4239, 4
        %v4262 = vsel %vm4258, %v4242, %v4245
        %v4263 = vsel %vm4261, %v4251, 2102212464
        %v4264 = vsel %vm4260, %v4248, %v4263
        %v4265 = vsel %vm4259, %v4262, %v4264
        %v4266 = vsel %vm4258, %v4245, %v4248
        %v4267 = vsel %vm4261, %v4254, 920167782
        %v4268 = vsel %vm4260, %v4251, %v4267
        %v4269 = vsel %vm4259, %v4266, %v4268
        %v4270 = vsel %vm4258, %v4248, %v4251
        %v4271 = vsel %vm4261, %v4257, 1326507024
        %v4272 = vsel %vm4260, %v4254, %v4271
        %v4273 = vsel %vm4259, %v4270, %v4272
        %v4274 = vshll.u32 %v4234, 8
        %v4275 = vmul.u32.u64.compose %v4274, %v4273
        %v4276 = vextract.low.u32 %v4275
        %v4277 = vextract.high.u32 %v4275
        %v4278 = vmul.u32.u64.compose %v4274, %v4269
        %v4279 = vextract.low.u32 %v4278
        %v4280 = vextract.high.u32 %v4278
        %v4281 = vmul.u32 %v4274, %v4265
        %v4282 = vadd.s32 %v4277, %v4279
        %vm4283 = vc.u32 %v4277, %v4279
        %v4284 = vadd.s32 %v4280, 1
        %v4285 = vsel %vm4283, %v4284, %v4280
        %v4286 = vadd.s32 %v4281, %v4285
        %v4287 = vadd.s32 %v4286, 536870912
        %v4288 = vshrl.u32 %v4287, 30
        %v4289 = vshll.u32 %v4288, 30
        %v4290 = vsub.s32 %v4286, %v4289
        %vm4291 = vcmp.lt.s32.totalorder %v4290, 0
        %v4292 = vsub.s32 0, %v4290
        %v4293 = vsel %vm4291, %v4292, %v4290
        %v4294 = vclz %v4293
        %v4295 = vsub.s32 %v4294, 2
        %vm4296 = vcmp.gt.s32.totalorder 0, %v4295
        %v4297 = vsel %vm4296, 0, %v4295
        %v4298 = vsub.s32 32, %v4297
        %v4299 = vshll.u32 %v4290, %v4297
        %v4300 = vshrl.u32 %v4282, %v4298
        %v4301 = vor.u32 %v4299, %v4300
        %v4302 = vsub.s32 4294967266, %v4297
        %v4303 = vadd.s32 %v4302, 127
        %v4304 = vshll.u32 %v4303, 23
        %v4305 = vor.u32 4788187, %v4304
        %v4306 = vand.u32 2147483647, %v4305
        %v4308 = vcvt.s32.f32 %v4301
        %v4309 = vmul.f32 %v4308, %v4306
        %v4310 = vxor.u32 %v4309, 2147483648
        %v4311 = vsel %vm4228, %v4310, %v4309
        %v4312 = vsub.s32 4, %v4288
        %v4313 = vsel %vm4228, %v4312, %v4288
        %v4314 = vsel %vm4227, %v4224, %v4311
        %v4315 = vsel %vm4227, 0, %v4313
        %v4316 = vcosq.f32.pop %v4314
        %v4317 = vsinq.f32.pop %v4314
        %vm4318 = vweird.f32 %v4224
        %v4319 = vand.u32 %v4315, 3
        %vm4320 = vcmp.lt.s32.totalorder %v4319, 2
        %vm4321 = vcmp.eq.s32.totalorder %v4319, 0
        %v4322 = vxor.u32 %v4317, 2147483648
        %v4323 = vsel %vm4321, %v4316, %v4322
        %vm4324 = vcmp.eq.s32.totalorder %v4319, 2
        %v4325 = vxor.u32 %v4316, 2147483648
        %v4326 = vsel %vm4324, %v4325, %v4317
        %v4327 = vsel %vm4320, %v4323, %v4326
        %v4328 = vsel %vm4318, nan, %v4327
        %v4329 = vand.u32 2147483647, %v4225
        %vm4330 = vcmp.le.f32.partialorder %v4329, 0.7853982
        %vm4331 = vcmp.lt.s32.totalorder %v4225, 0
        %v4332 = vand.u32 %v4225, 2139095040
        %v4333 = vshrl.u32 %v4332, 23
        %v4334 = vsub.s32 %v4333, 127
        %v4335 = vand.u32 2147483647, %v4225
        %v4336 = vand.u32 %v4335, 8388607
        %v4337 = vor.u32 %v4336, 8388608
        %v4338 = vsub.s32 0, %v4337
        %v4339 = vadd.s32 %v4334, 1
        %vm4340 = vcmp.gt.s32.totalorder %v4339, 0
        %v4341 = vsel %vm4340, %v4339, 0
        %v4342 = vshrl.u32 %v4341, 5
        %v4343 = vand.u32 %v4341, 31
        %v4344 = vsub.s32 32, %v4343
        %v4345 = vshrl.u32 683565275, %v4344
        %v4346 = vshll.u32 683565275, %v4343
        %v4347 = vshrl.u32 2475754826, %v4344
        %v4348 = vor.u32 %v4346, %v4347
        %v4349 = vshll.u32 2475754826, %v4343
        %v4350 = vshrl.u32 2131351028, %v4344
        %v4351 = vor.u32 %v4349, %v4350
        %v4352 = vshll.u32 2131351028, %v4343
        %v4353 = vshrl.u32 2102212464, %v4344
        %v4354 = vor.u32 %v4352, %v4353
        %v4355 = vshll.u32 2102212464, %v4343
        %v4356 = vshrl.u32 920167782, %v4344
        %v4357 = vor.u32 %v4355, %v4356
        %v4358 = vshll.u32 920167782, %v4343
        %v4359 = vshrl.u32 1326507024, %v4344
        %v4360 = vor.u32 %v4358, %v4359
        %vm4361 = vcmp.lt.s32.totalorder %v4342, 1
        %vm4362 = vcmp.lt.s32.totalorder %v4342, 2
        %vm4363 = vcmp.lt.s32.totalorder %v4342, 3
        %vm4364 = vcmp.lt.s32.totalorder %v4342, 4
        %v4365 = vsel %vm4361, %v4345, %v4348
        %v4366 = vsel %vm4364, %v4354, 2102212464
        %v4367 = vsel %vm4363, %v4351, %v4366
        %v4368 = vsel %vm4362, %v4365, %v4367
        %v4369 = vsel %vm4361, %v4348, %v4351
        %v4370 = vsel %vm4364, %v4357, 920167782
        %v4371 = vsel %vm4363, %v4354, %v4370
        %v4372 = vsel %vm4362, %v4369, %v4371
        %v4373 = vsel %vm4361, %v4351, %v4354
        %v4374 = vsel %vm4364, %v4360, 1326507024
        %v4375 = vsel %vm4363, %v4357, %v4374
        %v4376 = vsel %vm4362, %v4373, %v4375
        %v4377 = vshll.u32 %v4337, 8
        %v4378 = vmul.u32.u64.compose %v4377, %v4376
        %v4379 = vextract.low.u32 %v4378
        %v4380 = vextract.high.u32 %v4378
        %v4381 = vmul.u32.u64.compose %v4377, %v4372
        %v4382 = vextract.low.u32 %v4381
        %v4383 = vextract.high.u32 %v4381
        %v4384 = vmul.u32 %v4377, %v4368
        %v4385 = vadd.s32 %v4380, %v4382
        %vm4386 = vc.u32 %v4380, %v4382
        %v4387 = vadd.s32 %v4383, 1
        %v4388 = vsel %vm4386, %v4387, %v4383
        %v4389 = vadd.s32 %v4384, %v4388
        %v4390 = vadd.s32 %v4389, 536870912
        %v4391 = vshrl.u32 %v4390, 30
        %v4392 = vshll.u32 %v4391, 30
        %v4393 = vsub.s32 %v4389, %v4392
        %vm4394 = vcmp.lt.s32.totalorder %v4393, 0
        %v4395 = vsub.s32 0, %v4393
        %v4396 = vsel %vm4394, %v4395, %v4393
        %v4397 = vclz %v4396
        %v4398 = vsub.s32 %v4397, 2
        %vm4399 = vcmp.gt.s32.totalorder 0, %v4398
        %v4400 = vsel %vm4399, 0, %v4398
        %v4401 = vsub.s32 32, %v4400
        %v4402 = vshll.u32 %v4393, %v4400
        %v4403 = vshrl.u32 %v4385, %v4401
        %v4404 = vor.u32 %v4402, %v4403
        %v4405 = vsub.s32 4294967266, %v4400
        %v4406 = vadd.s32 %v4405, 127
        %v4407 = vshll.u32 %v4406, 23
        %v4408 = vor.u32 4788187, %v4407
        %v4409 = vand.u32 2147483647, %v4408
        %v4411 = vcvt.s32.f32 %v4404
        %v4412 = vmul.f32 %v4411, %v4409
        %v4413 = vxor.u32 %v4412, 2147483648
        %v4414 = vsel %vm4331, %v4413, %v4412
        %v4415 = vsub.s32 4, %v4391
        %v4416 = vsel %vm4331, %v4415, %v4391
        %v4417 = vsel %vm4330, %v4225, %v4414
        %v4418 = vsel %vm4330, 0, %v4416
        %v4419 = vcosq.f32.pop %v4417
        %v4420 = vsinq.f32.pop %v4417
        %vm4421 = vweird.f32 %v4225
        %v4422 = vand.u32 %v4418, 3
        %vm4423 = vcmp.lt.s32.totalorder %v4422, 2
        %vm4424 = vcmp.eq.s32.totalorder %v4422, 0
        %v4425 = vxor.u32 %v4420, 2147483648
        %v4426 = vsel %vm4424, %v4419, %v4425
        %vm4427 = vcmp.eq.s32.totalorder %v4422, 2
        %v4428 = vxor.u32 %v4419, 2147483648
        %v4429 = vsel %vm4427, %v4428, %v4420
        %v4430 = vsel %vm4423, %v4426, %v4429
        %v4431 = vsel %vm4421, nan, %v4430
        %v4432 = vlaneseq
        %v4433 = vshrl.u32 %v4432, 7
        %v4434 = vsub.s32 7, %v4433
        %v4435 = vrot.slane %v1065, %v4434
        %v4436 = vmul.f32 %v4435, %v4328
        %v4437 = vmul.f32 %v4435, %v4431
        %v4438 = vand.u32 2147483647, %v4224
        %vm4439 = vcmp.le.f32.partialorder %v4438, 0.7853982
        %vm4440 = vcmp.lt.s32.totalorder %v4224, 0
        %v4441 = vand.u32 %v4224, 2139095040
        %v4442 = vshrl.u32 %v4441, 23
        %v4443 = vsub.s32 %v4442, 127
        %v4444 = vand.u32 2147483647, %v4224
        %v4445 = vand.u32 %v4444, 8388607
        %v4446 = vor.u32 %v4445, 8388608
        %v4447 = vsub.s32 0, %v4446
        %v4448 = vadd.s32 %v4443, 1
        %vm4449 = vcmp.gt.s32.totalorder %v4448, 0
        %v4450 = vsel %vm4449, %v4448, 0
        %v4451 = vshrl.u32 %v4450, 5
        %v4452 = vand.u32 %v4450, 31
        %v4453 = vsub.s32 32, %v4452
        %v4454 = vshrl.u32 683565275, %v4453
        %v4455 = vshll.u32 683565275, %v4452
        %v4456 = vshrl.u32 2475754826, %v4453
        %v4457 = vor.u32 %v4455, %v4456
        %v4458 = vshll.u32 2475754826, %v4452
        %v4459 = vshrl.u32 2131351028, %v4453
        %v4460 = vor.u32 %v4458, %v4459
        %v4461 = vshll.u32 2131351028, %v4452
        %v4462 = vshrl.u32 2102212464, %v4453
        %v4463 = vor.u32 %v4461, %v4462
        %v4464 = vshll.u32 2102212464, %v4452
        %v4465 = vshrl.u32 920167782, %v4453
        %v4466 = vor.u32 %v4464, %v4465
        %v4467 = vshll.u32 920167782, %v4452
        %v4468 = vshrl.u32 1326507024, %v4453
        %v4469 = vor.u32 %v4467, %v4468
        %vm4470 = vcmp.lt.s32.totalorder %v4451, 1
        %vm4471 = vcmp.lt.s32.totalorder %v4451, 2
        %vm4472 = vcmp.lt.s32.totalorder %v4451, 3
        %vm4473 = vcmp.lt.s32.totalorder %v4451, 4
        %v4474 = vsel %vm4470, %v4454, %v4457
        %v4475 = vsel %vm4473, %v4463, 2102212464
        %v4476 = vsel %vm4472, %v4460, %v4475
        %v4477 = vsel %vm4471, %v4474, %v4476
        %v4478 = vsel %vm4470, %v4457, %v4460
        %v4479 = vsel %vm4473, %v4466, 920167782
        %v4480 = vsel %vm4472, %v4463, %v4479
        %v4481 = vsel %vm4471, %v4478, %v4480
        %v4482 = vsel %vm4470, %v4460, %v4463
        %v4483 = vsel %vm4473, %v4469, 1326507024
        %v4484 = vsel %vm4472, %v4466, %v4483
        %v4485 = vsel %vm4471, %v4482, %v4484
        %v4486 = vshll.u32 %v4446, 8
        %v4487 = vmul.u32.u64.compose %v4486, %v4485
        %v4488 = vextract.low.u32 %v4487
        %v4489 = vextract.high.u32 %v4487
        %v4490 = vmul.u32.u64.compose %v4486, %v4481
        %v4491 = vextract.low.u32 %v4490
        %v4492 = vextract.high.u32 %v4490
        %v4493 = vmul.u32 %v4486, %v4477
        %v4494 = vadd.s32 %v4489, %v4491
        %vm4495 = vc.u32 %v4489, %v4491
        %v4496 = vadd.s32 %v4492, 1
        %v4497 = vsel %vm4495, %v4496, %v4492
        %v4498 = vadd.s32 %v4493, %v4497
        %v4499 = vadd.s32 %v4498, 536870912
        %v4500 = vshrl.u32 %v4499, 30
        %v4501 = vshll.u32 %v4500, 30
        %v4502 = vsub.s32 %v4498, %v4501
        %vm4503 = vcmp.lt.s32.totalorder %v4502, 0
        %v4504 = vsub.s32 0, %v4502
        %v4505 = vsel %vm4503, %v4504, %v4502
        %v4506 = vclz %v4505
        %v4507 = vsub.s32 %v4506, 2
        %vm4508 = vcmp.gt.s32.totalorder 0, %v4507
        %v4509 = vsel %vm4508, 0, %v4507
        %v4510 = vsub.s32 32, %v4509
        %v4511 = vshll.u32 %v4502, %v4509
        %v4512 = vshrl.u32 %v4494, %v4510
        %v4513 = vor.u32 %v4511, %v4512
        %v4514 = vsub.s32 4294967266, %v4509
        %v4515 = vadd.s32 %v4514, 127
        %v4516 = vshll.u32 %v4515, 23
        %v4517 = vor.u32 4788187, %v4516
        %v4518 = vand.u32 2147483647, %v4517
        %v4520 = vcvt.s32.f32 %v4513
        %v4521 = vmul.f32 %v4520, %v4518
        %v4522 = vxor.u32 %v4521, 2147483648
        %v4523 = vsel %vm4440, %v4522, %v4521
        %v4524 = vsub.s32 4, %v4500
        %v4525 = vsel %vm4440, %v4524, %v4500
        %v4526 = vsel %vm4439, %v4224, %v4523
        %v4527 = vsel %vm4439, 0, %v4525
        %v4528 = vcosq.f32.pop %v4526
        %v4529 = vsinq.f32.pop %v4526
        %vm4530 = vweird.f32 %v4224
        %v4531 = vadd.s32 %v4527, 3
        %v4532 = vand.u32 %v4531, 3
        %vm4533 = vcmp.lt.s32.totalorder %v4532, 2
        %vm4534 = vcmp.eq.s32.totalorder %v4532, 0
        %v4535 = vxor.u32 %v4529, 2147483648
        %v4536 = vsel %vm4534, %v4528, %v4535
        %vm4537 = vcmp.eq.s32.totalorder %v4532, 2
        %v4538 = vxor.u32 %v4528, 2147483648
        %v4539 = vsel %vm4537, %v4538, %v4529
        %v4540 = vsel %vm4533, %v4536, %v4539
        %v4541 = vsel %vm4530, nan, %v4540
        %v4542 = vand.u32 2147483647, %v4225
        %vm4543 = vcmp.le.f32.partialorder %v4542, 0.7853982
        %vm4544 = vcmp.lt.s32.totalorder %v4225, 0
        %v4545 = vand.u32 %v4225, 2139095040
        %v4546 = vshrl.u32 %v4545, 23
        %v4547 = vsub.s32 %v4546, 127
        %v4548 = vand.u32 2147483647, %v4225
        %v4549 = vand.u32 %v4548, 8388607
        %v4550 = vor.u32 %v4549, 8388608
        %v4551 = vsub.s32 0, %v4550
        %v4552 = vadd.s32 %v4547, 1
        %vm4553 = vcmp.gt.s32.totalorder %v4552, 0
        %v4554 = vsel %vm4553, %v4552, 0
        %v4555 = vshrl.u32 %v4554, 5
        %v4556 = vand.u32 %v4554, 31
        %v4557 = vsub.s32 32, %v4556
        %v4558 = vshrl.u32 683565275, %v4557
        %v4559 = vshll.u32 683565275, %v4556
        %v4560 = vshrl.u32 2475754826, %v4557
        %v4561 = vor.u32 %v4559, %v4560
        %v4562 = vshll.u32 2475754826, %v4556
        %v4563 = vshrl.u32 2131351028, %v4557
        %v4564 = vor.u32 %v4562, %v4563
        %v4565 = vshll.u32 2131351028, %v4556
        %v4566 = vshrl.u32 2102212464, %v4557
        %v4567 = vor.u32 %v4565, %v4566
        %v4568 = vshll.u32 2102212464, %v4556
        %v4569 = vshrl.u32 920167782, %v4557
        %v4570 = vor.u32 %v4568, %v4569
        %v4571 = vshll.u32 920167782, %v4556
        %v4572 = vshrl.u32 1326507024, %v4557
        %v4573 = vor.u32 %v4571, %v4572
        %vm4574 = vcmp.lt.s32.totalorder %v4555, 1
        %vm4575 = vcmp.lt.s32.totalorder %v4555, 2
        %vm4576 = vcmp.lt.s32.totalorder %v4555, 3
        %vm4577 = vcmp.lt.s32.totalorder %v4555, 4
        %v4578 = vsel %vm4574, %v4558, %v4561
        %v4579 = vsel %vm4577, %v4567, 2102212464
        %v4580 = vsel %vm4576, %v4564, %v4579
        %v4581 = vsel %vm4575, %v4578, %v4580
        %v4582 = vsel %vm4574, %v4561, %v4564
        %v4583 = vsel %vm4577, %v4570, 920167782
        %v4584 = vsel %vm4576, %v4567, %v4583
        %v4585 = vsel %vm4575, %v4582, %v4584
        %v4586 = vsel %vm4574, %v4564, %v4567
        %v4587 = vsel %vm4577, %v4573, 1326507024
        %v4588 = vsel %vm4576, %v4570, %v4587
        %v4589 = vsel %vm4575, %v4586, %v4588
        %v4590 = vshll.u32 %v4550, 8
        %v4591 = vmul.u32.u64.compose %v4590, %v4589
        %v4592 = vextract.low.u32 %v4591
        %v4593 = vextract.high.u32 %v4591
        %v4594 = vmul.u32.u64.compose %v4590, %v4585
        %v4595 = vextract.low.u32 %v4594
        %v4596 = vextract.high.u32 %v4594
        %v4597 = vmul.u32 %v4590, %v4581
        %v4598 = vadd.s32 %v4593, %v4595
        %vm4599 = vc.u32 %v4593, %v4595
        %v4600 = vadd.s32 %v4596, 1
        %v4601 = vsel %vm4599, %v4600, %v4596
        %v4602 = vadd.s32 %v4597, %v4601
        %v4603 = vadd.s32 %v4602, 536870912
        %v4604 = vshrl.u32 %v4603, 30
        %v4605 = vshll.u32 %v4604, 30
        %v4606 = vsub.s32 %v4602, %v4605
        %vm4607 = vcmp.lt.s32.totalorder %v4606, 0
        %v4608 = vsub.s32 0, %v4606
        %v4609 = vsel %vm4607, %v4608, %v4606
        %v4610 = vclz %v4609
        %v4611 = vsub.s32 %v4610, 2
        %vm4612 = vcmp.gt.s32.totalorder 0, %v4611
        %v4613 = vsel %vm4612, 0, %v4611
        %v4614 = vsub.s32 32, %v4613
        %v4615 = vshll.u32 %v4606, %v4613
        %v4616 = vshrl.u32 %v4598, %v4614
        %v4617 = vor.u32 %v4615, %v4616
        %v4618 = vsub.s32 4294967266, %v4613
        %v4619 = vadd.s32 %v4618, 127
        %v4620 = vshll.u32 %v4619, 23
        %v4621 = vor.u32 4788187, %v4620
        %v4622 = vand.u32 2147483647, %v4621
        %v4624 = vcvt.s32.f32 %v4617
        %v4625 = vmul.f32 %v4624, %v4622
        %v4626 = vxor.u32 %v4625, 2147483648
        %v4627 = vsel %vm4544, %v4626, %v4625
        %v4628 = vsub.s32 4, %v4604
        %v4629 = vsel %vm4544, %v4628, %v4604
        %v4630 = vsel %vm4543, %v4225, %v4627
        %v4631 = vsel %vm4543, 0, %v4629
        %v4632 = vcosq.f32.pop %v4630
        %v4633 = vsinq.f32.pop %v4630
        %vm4634 = vweird.f32 %v4225
        %v4635 = vadd.s32 %v4631, 3
        %v4636 = vand.u32 %v4635, 3
        %vm4637 = vcmp.lt.s32.totalorder %v4636, 2
        %vm4638 = vcmp.eq.s32.totalorder %v4636, 0
        %v4639 = vxor.u32 %v4633, 2147483648
        %v4640 = vsel %vm4638, %v4632, %v4639
        %vm4641 = vcmp.eq.s32.totalorder %v4636, 2
        %v4642 = vxor.u32 %v4632, 2147483648
        %v4643 = vsel %vm4641, %v4642, %v4633
        %v4644 = vsel %vm4637, %v4640, %v4643
        %v4645 = vsel %vm4634, nan, %v4644
        %v4646 = vlaneseq
        %v4647 = vshrl.u32 %v4646, 7
        %v4648 = vsub.s32 7, %v4647
        %v4649 = vrot.slane %v1068, %v4648
        %v4650 = vmul.f32 %v4649, %v4541
        %v4651 = vmul.f32 %v4649, %v4645
        %v4652 = vsub.f32 %v4436, %v4650
        %v4653 = vsub.f32 %v4437, %v4651
        %v4654 = vmul.f32 %v4217, %v4652
        %v4655 = vmul.f32 %v4219, %v4653
        %v4656 = vadd.f32 %v4208, %v4654
        %v4657 = vadd.f32 %v4209, %v4655
        %v4658 = vld [vmem:[#allocation2] sm:$0xff]
        %v4659 = vld [vmem:[#allocation2 + $0x8] sm:$0xff]
        %v4660 = vld [vmem:[#allocation2 + $0x10] sm:$0xff]
        %v4661 = vld [vmem:[#allocation2 + $0x18] sm:$0xff]
        %vm4662 = vcmask 261120
        %v4663 = vsel %vm4662, %v4658, 0.0
        %4664 = vadd.xlane.f32.xlu0 %v4663
        %v4665 = vpop.xlane.xlu0 %4664
        %v4666 = vsel %vm4662, %v4659, 0.0
        %4667 = vadd.xlane.f32.xlu0 %v4666
        %v4668 = vpop.xlane.xlu0 %4667
        %v4669 = vsel %vm4662, %v4660, 0.0
        %4670 = vadd.xlane.f32.xlu0 %v4669
        %v4671 = vpop.xlane.xlu0 %4670
        %v4672 = vsel %vm4662, %v4661, 0.0
        %4673 = vadd.xlane.f32.xlu0 %v4672
        %v4674 = vpop.xlane.xlu0 %4673
        %v4675 = vrcp.pop 32.0
        %v4676 = vmul.f32 %v4665, %v4675
        %v4677 = vmul.f32 %v4668, %v4675
        %v4678 = vmul.f32 %v4671, %v4675
        %v4679 = vmul.f32 %v4674, %v4675
        %v4680 = vsub.f32 %v4658, %v4676
        %v4681 = vsub.f32 %v4659, %v4677
        %v4682 = vsub.f32 %v4660, %v4678
        %v4683 = vsub.f32 %v4661, %v4679
        %v4684 = vmul.f32 %v4680, %v4680
        %v4685 = vmul.f32 %v4681, %v4681
        %v4686 = vmul.f32 %v4682, %v4682
        %v4687 = vmul.f32 %v4683, %v4683
        %v4688 = vsel %vm4662, %v4684, 0.0
        %4689 = vadd.xlane.f32.xlu0 %v4688
        %v4690 = vpop.xlane.xlu0 %4689
        %v4691 = vsel %vm4662, %v4685, 0.0
        %4692 = vadd.xlane.f32.xlu0 %v4691
        %v4693 = vpop.xlane.xlu0 %4692
        %v4694 = vsel %vm4662, %v4686, 0.0
        %4695 = vadd.xlane.f32.xlu0 %v4694
        %v4696 = vpop.xlane.xlu0 %4695
        %v4697 = vsel %vm4662, %v4687, 0.0
        %4698 = vadd.xlane.f32.xlu0 %v4697
        %v4699 = vpop.xlane.xlu0 %4698
        %v4700 = vmul.f32 %v4690, %v4675
        %v4701 = vmul.f32 %v4693, %v4675
        %v4702 = vmul.f32 %v4696, %v4675
        %v4703 = vmul.f32 %v4699, %v4675
        %v4704 = vadd.f32 %v4700, 1e-05
        %v4705 = vadd.f32 %v4701, 1e-05
        %v4706 = vadd.f32 %v4702, 1e-05
        %v4707 = vadd.f32 %v4703, 1e-05
        %v4708 = vrsqrt.pop %v4704
        %v4709 = vrsqrt.pop %v4705
        %v4710 = vrsqrt.pop %v4706
        %v4711 = vrsqrt.pop %v4707
        %v4712 = vmul.f32 %v4680, %v4708
        %v4713 = vmul.f32 %v4681, %v4709
        %v4714 = vmul.f32 %v4682, %v4710
        %v4715 = vmul.f32 %v4683, %v4711
        %v4716 = vld [vmem:[%s761] sm:$0x1]
        %v4718 = vlaneseq
        %v4719 = vshrl.u32 %v4718, 7
        %v4720 = vsub.s32 0, %v4719
        %v4721 = vrot.slane %v4716, %v4720
        %v4723 = vmul.f32 %v4712, %v4721
        %v4724 = vmul.f32 %v4713, %v4721
        %v4725 = vmul.f32 %v4714, %v4721
        %v4726 = vmul.f32 %v4715, %v4721
        %v4727 = vld [vmem:[%s764] sm:$0x1]
        %v4729 = vlaneseq
        %v4730 = vshrl.u32 %v4729, 7
        %v4731 = vsub.s32 0, %v4730
        %v4732 = vrot.slane %v4727, %v4731
        %v4734 = vadd.f32 %v4723, %v4732
        %v4735 = vadd.f32 %v4724, %v4732
        %v4736 = vadd.f32 %v4725, %v4732
        %v4737 = vadd.f32 %v4726, %v4732
        %v4738 = vld [vmem:[%s648] sm:$0x1]
        %v4740 = vlaneseq
        %v4741 = vshrl.u32 %v4740, 7
        %v4742 = vsub.s32 0, %v4741
        %v4743 = vrot.slane %v4738, %v4742
        %v4745 = vmul.f32 %v4743, %v4734
        %v4746 = vmul.f32 %v4743, %v4735
        %v4747 = vmul.f32 %v4743, %v4736
        %v4748 = vmul.f32 %v4743, %v4737
        %v4749 = vlaneseq
        %v4750 = vshrl.u32 %v4749, 7
        %v4751 = vsub.s32 0, %v4750
        %v4752 = vrot.slane %v4656, %v4751
        %v4753 = vmul.f32 %v4734, %v4752
        %v4754 = vmul.f32 %v4735, %v4752
        %v4755 = vmul.f32 %v4736, %v4752
        %v4756 = vmul.f32 %v4737, %v4752
        %v4757 = vadd.f32 %v4745, %v4753
        %v4758 = vadd.f32 %v4746, %v4754
        %v4759 = vadd.f32 %v4747, %v4755
        %v4760 = vadd.f32 %v4748, %v4756
        %v4761 = vlaneseq
        %v4762 = vshrl.u32 %v4761, 7
        %v4763 = vsub.s32 1, %v4762
        %v4764 = vrot.slane %v4656, %v4763
        %v4765 = vmul.f32 %v4764, 0.0
        %v4766 = vmul.f32 %v4734, %v4764
        %v4767 = vmul.f32 %v4735, %v4764
        %v4768 = vmul.f32 %v4736, %v4764
        %v4769 = vmul.f32 %v4737, %v4764
        %vm4775 = vcmask 1040384
        %v4776 = vrot.slane %v4765, 7
        %v4777 = vrot.slane %v4766, 7
        %v4778 = vsel %vm4775, %v4776, %v4777
        %v4779 = vrot.slane %v4767, 7
        %v4780 = vsel %vm4775, %v4777, %v4779
        %v4781 = vrot.slane %v4768, 7
        %v4782 = vsel %vm4775, %v4776, %v4781
        %v4783 = vrot.slane %v4769, 7
        %v4784 = vsel %vm4775, %v4781, %v4783
        %v4789 = vadd.f32 %v4757, %v4778
        %v4790 = vadd.f32 %v4758, %v4780
        %v4791 = vadd.f32 %v4759, %v4782
        %v4792 = vadd.f32 %v4760, %v4784
        %v4793 = vlaneseq
        %v4794 = vshrl.u32 %v4793, 7
        %v4795 = vsub.s32 2, %v4794
        %v4796 = vrot.slane %v4656, %v4795
        %v4797 = vmul.f32 %v4796, 0.0
        %v4798 = vmul.f32 %v4734, %v4796
        %v4799 = vmul.f32 %v4735, %v4796
        %v4800 = vmul.f32 %v4736, %v4796
        %v4801 = vmul.f32 %v4737, %v4796
        %vm4807 = vcmask 1041408
        %v4808 = vrot.slane %v4797, 6
        %v4809 = vrot.slane %v4798, 6
        %v4810 = vsel %vm4807, %v4808, %v4809
        %v4811 = vrot.slane %v4799, 6
        %v4812 = vsel %vm4807, %v4809, %v4811
        %v4813 = vrot.slane %v4800, 6
        %v4814 = vsel %vm4807, %v4808, %v4813
        %v4815 = vrot.slane %v4801, 6
        %v4816 = vsel %vm4807, %v4813, %v4815
        %v4821 = vadd.f32 %v4789, %v4810
        %v4822 = vadd.f32 %v4790, %v4812
        %v4823 = vadd.f32 %v4791, %v4814
        %v4824 = vadd.f32 %v4792, %v4816
        %v4825 = vlaneseq
        %v4826 = vshrl.u32 %v4825, 7
        %v4827 = vsub.s32 3, %v4826
        %v4828 = vrot.slane %v4656, %v4827
        %v4829 = vmul.f32 %v4828, 0.0
        %v4830 = vmul.f32 %v4734, %v4828
        %v4831 = vmul.f32 %v4735, %v4828
        %v4832 = vmul.f32 %v4736, %v4828
        %v4833 = vmul.f32 %v4737, %v4828
        %vm4839 = vcmask 1042432
        %v4840 = vrot.slane %v4829, 5
        %v4841 = vrot.slane %v4830, 5
        %v4842 = vsel %vm4839, %v4840, %v4841
        %v4843 = vrot.slane %v4831, 5
        %v4844 = vsel %vm4839, %v4841, %v4843
        %v4845 = vrot.slane %v4832, 5
        %v4846 = vsel %vm4839, %v4840, %v4845
        %v4847 = vrot.slane %v4833, 5
        %v4848 = vsel %vm4839, %v4845, %v4847
        %v4853 = vadd.f32 %v4821, %v4842
        %v4854 = vadd.f32 %v4822, %v4844
        %v4855 = vadd.f32 %v4823, %v4846
        %v4856 = vadd.f32 %v4824, %v4848
        %v4857 = vlaneseq
        %v4858 = vshrl.u32 %v4857, 7
        %v4859 = vsub.s32 4, %v4858
        %v4860 = vrot.slane %v4656, %v4859
        %v4861 = vmul.f32 %v4860, 0.0
        %v4862 = vmul.f32 %v4734, %v4860
        %v4863 = vmul.f32 %v4735, %v4860
        %v4864 = vmul.f32 %v4736, %v4860
        %v4865 = vmul.f32 %v4737, %v4860
        %vm4871 = vcmask 1043456
        %v4872 = vrot.slane %v4861, 4
        %v4873 = vrot.slane %v4862, 4
        %v4874 = vsel %vm4871, %v4872, %v4873
        %v4875 = vrot.slane %v4863, 4
        %v4876 = vsel %vm4871, %v4873, %v4875
        %v4877 = vrot.slane %v4864, 4
        %v4878 = vsel %vm4871, %v4872, %v4877
        %v4879 = vrot.slane %v4865, 4
        %v4880 = vsel %vm4871, %v4877, %v4879
        %v4885 = vadd.f32 %v4853, %v4874
        %v4886 = vadd.f32 %v4854, %v4876
        %v4887 = vadd.f32 %v4855, %v4878
        %v4888 = vadd.f32 %v4856, %v4880
        %v4889 = vlaneseq
        %v4890 = vshrl.u32 %v4889, 7
        %v4891 = vsub.s32 5, %v4890
        %v4892 = vrot.slane %v4656, %v4891
        %v4893 = vmul.f32 %v4892, 0.0
        %v4894 = vmul.f32 %v4734, %v4892
        %v4895 = vmul.f32 %v4735, %v4892
        %v4896 = vmul.f32 %v4736, %v4892
        %v4897 = vmul.f32 %v4737, %v4892
        %vm4903 = vcmask 1044480
        %v4904 = vrot.slane %v4893, 3
        %v4905 = vrot.slane %v4894, 3
        %v4906 = vsel %vm4903, %v4904, %v4905
        %v4907 = vrot.slane %v4895, 3
        %v4908 = vsel %vm4903, %v4905, %v4907
        %v4909 = vrot.slane %v4896, 3
        %v4910 = vsel %vm4903, %v4904, %v4909
        %v4911 = vrot.slane %v4897, 3
        %v4912 = vsel %vm4903, %v4909, %v4911
        %v4917 = vadd.f32 %v4885, %v4906
        %v4918 = vadd.f32 %v4886, %v4908
        %v4919 = vadd.f32 %v4887, %v4910
        %v4920 = vadd.f32 %v4888, %v4912
        %v4921 = vlaneseq
        %v4922 = vshrl.u32 %v4921, 7
        %v4923 = vsub.s32 6, %v4922
        %v4924 = vrot.slane %v4656, %v4923
        %v4925 = vmul.f32 %v4924, 0.0
        %v4926 = vmul.f32 %v4734, %v4924
        %v4927 = vmul.f32 %v4735, %v4924
        %v4928 = vmul.f32 %v4736, %v4924
        %v4929 = vmul.f32 %v4737, %v4924
        %vm4935 = vcmask 1045504
        %v4936 = vrot.slane %v4925, 2
        %v4937 = vrot.slane %v4926, 2
        %v4938 = vsel %vm4935, %v4936, %v4937
        %v4939 = vrot.slane %v4927, 2
        %v4940 = vsel %vm4935, %v4937, %v4939
        %v4941 = vrot.slane %v4928, 2
        %v4942 = vsel %vm4935, %v4936, %v4941
        %v4943 = vrot.slane %v4929, 2
        %v4944 = vsel %vm4935, %v4941, %v4943
        %v4949 = vadd.f32 %v4917, %v4938
        %v4950 = vadd.f32 %v4918, %v4940
        %v4951 = vadd.f32 %v4919, %v4942
        %v4952 = vadd.f32 %v4920, %v4944
        %v4953 = vlaneseq
        %v4954 = vshrl.u32 %v4953, 7
        %v4955 = vsub.s32 7, %v4954
        %v4956 = vrot.slane %v4656, %v4955
        %v4957 = vmul.f32 %v4956, 0.0
        %v4958 = vmul.f32 %v4734, %v4956
        %v4959 = vmul.f32 %v4735, %v4956
        %v4960 = vmul.f32 %v4736, %v4956
        %v4961 = vmul.f32 %v4737, %v4956
        %vm4967 = vcmask 1046528
        %v4968 = vrot.slane %v4957, 1
        %v4969 = vrot.slane %v4958, 1
        %v4970 = vsel %vm4967, %v4968, %v4969
        %v4971 = vrot.slane %v4959, 1
        %v4972 = vsel %vm4967, %v4969, %v4971
        %v4973 = vrot.slane %v4960, 1
        %v4974 = vsel %vm4967, %v4968, %v4973
        %v4975 = vrot.slane %v4961, 1
        %v4976 = vsel %vm4967, %v4973, %v4975
        %v4981 = vadd.f32 %v4949, %v4970
        %v4982 = vadd.f32 %v4950, %v4972
        %v4983 = vadd.f32 %v4951, %v4974
        %v4984 = vadd.f32 %v4952, %v4976
        %v4985 = vlaneseq
        %v4986 = vshrl.u32 %v4985, 7
        %v4987 = vsub.s32 0, %v4986
        %v4988 = vrot.slane %v4657, %v4987
        %v4989 = vmul.f32 %v4988, 0.0
        %v4990 = vmul.f32 %v4734, %v4988
        %v4991 = vmul.f32 %v4736, %v4988
        %v4992 = vadd.f32 %v4981, %v4989
        %v4993 = vadd.f32 %v4982, %v4990
        %v4994 = vadd.f32 %v4983, %v4989
        %v4995 = vadd.f32 %v4984, %v4991
        %v4996 = vlaneseq
        %v4997 = vshrl.u32 %v4996, 7
        %v4998 = vsub.s32 1, %v4997
        %v4999 = vrot.slane %v4657, %v4998
        %v5000 = vmul.f32 %v4999, 0.0
        %v5001 = vmul.f32 %v4734, %v4999
        %v5002 = vmul.f32 %v4736, %v4999
        %v5006 = vrot.slane %v5000, 7
        %v5007 = vsel %vm4775, %v5006, %v5006
        %v5008 = vrot.slane %v5001, 7
        %v5009 = vsel %vm4775, %v5006, %v5008
        %v5010 = vrot.slane %v5002, 7
        %v5011 = vsel %vm4775, %v5006, %v5010
        %v5015 = vadd.f32 %v4992, %v5007
        %v5016 = vadd.f32 %v4993, %v5009
        %v5017 = vadd.f32 %v4994, %v5007
        %v5018 = vadd.f32 %v4995, %v5011
        %v5019 = vlaneseq
        %v5020 = vshrl.u32 %v5019, 7
        %v5021 = vsub.s32 2, %v5020
        %v5022 = vrot.slane %v4657, %v5021
        %v5023 = vmul.f32 %v5022, 0.0
        %v5024 = vmul.f32 %v4734, %v5022
        %v5025 = vmul.f32 %v4736, %v5022
        %v5029 = vrot.slane %v5023, 6
        %v5030 = vsel %vm4807, %v5029, %v5029
        %v5031 = vrot.slane %v5024, 6
        %v5032 = vsel %vm4807, %v5029, %v5031
        %v5033 = vrot.slane %v5025, 6
        %v5034 = vsel %vm4807, %v5029, %v5033
        %v5038 = vadd.f32 %v5015, %v5030
        %v5039 = vadd.f32 %v5016, %v5032
        %v5040 = vadd.f32 %v5017, %v5030
        %v5041 = vadd.f32 %v5018, %v5034
        %v5042 = vlaneseq
        %v5043 = vshrl.u32 %v5042, 7
        %v5044 = vsub.s32 3, %v5043
        %v5045 = vrot.slane %v4657, %v5044
        %v5046 = vmul.f32 %v5045, 0.0
        %v5047 = vmul.f32 %v4734, %v5045
        %v5048 = vmul.f32 %v4736, %v5045
        %v5052 = vrot.slane %v5046, 5
        %v5053 = vsel %vm4839, %v5052, %v5052
        %v5054 = vrot.slane %v5047, 5
        %v5055 = vsel %vm4839, %v5052, %v5054
        %v5056 = vrot.slane %v5048, 5
        %v5057 = vsel %vm4839, %v5052, %v5056
        %v5061 = vadd.f32 %v5038, %v5053
        %v5062 = vadd.f32 %v5039, %v5055
        %v5063 = vadd.f32 %v5040, %v5053
        %v5064 = vadd.f32 %v5041, %v5057
        %v5065 = vlaneseq
        %v5066 = vshrl.u32 %v5065, 7
        %v5067 = vsub.s32 4, %v5066
        %v5068 = vrot.slane %v4657, %v5067
        %v5069 = vmul.f32 %v5068, 0.0
        %v5070 = vmul.f32 %v4734, %v5068
        %v5071 = vmul.f32 %v4736, %v5068
        %v5075 = vrot.slane %v5069, 4
        %v5076 = vsel %vm4871, %v5075, %v5075
        %v5077 = vrot.slane %v5070, 4
        %v5078 = vsel %vm4871, %v5075, %v5077
        %v5079 = vrot.slane %v5071, 4
        %v5080 = vsel %vm4871, %v5075, %v5079
        %v5084 = vadd.f32 %v5061, %v5076
        %v5085 = vadd.f32 %v5062, %v5078
        %v5086 = vadd.f32 %v5063, %v5076
        %v5087 = vadd.f32 %v5064, %v5080
        %v5088 = vlaneseq
        %v5089 = vshrl.u32 %v5088, 7
        %v5090 = vsub.s32 5, %v5089
        %v5091 = vrot.slane %v4657, %v5090
        %v5092 = vmul.f32 %v5091, 0.0
        %v5093 = vmul.f32 %v4734, %v5091
        %v5094 = vmul.f32 %v4736, %v5091
        %v5098 = vrot.slane %v5092, 3
        %v5099 = vsel %vm4903, %v5098, %v5098
        %v5100 = vrot.slane %v5093, 3
        %v5101 = vsel %vm4903, %v5098, %v5100
        %v5102 = vrot.slane %v5094, 3
        %v5103 = vsel %vm4903, %v5098, %v5102
        %v5107 = vadd.f32 %v5084, %v5099
        %v5108 = vadd.f32 %v5085, %v5101
        %v5109 = vadd.f32 %v5086, %v5099
        %v5110 = vadd.f32 %v5087, %v5103
        %v5111 = vlaneseq
        %v5112 = vshrl.u32 %v5111, 7
        %v5113 = vsub.s32 6, %v5112
        %v5114 = vrot.slane %v4657, %v5113
        %v5115 = vmul.f32 %v5114, 0.0
        %v5116 = vmul.f32 %v4734, %v5114
        %v5117 = vmul.f32 %v4736, %v5114
        %v5121 = vrot.slane %v5115, 2
        %v5122 = vsel %vm4935, %v5121, %v5121
        %v5123 = vrot.slane %v5116, 2
        %v5124 = vsel %vm4935, %v5121, %v5123
        %v5125 = vrot.slane %v5117, 2
        %v5126 = vsel %vm4935, %v5121, %v5125
        %v5130 = vadd.f32 %v5107, %v5122
        %v5131 = vadd.f32 %v5108, %v5124
        %v5132 = vadd.f32 %v5109, %v5122
        %v5133 = vadd.f32 %v5110, %v5126
        %v5134 = vlaneseq
        %v5135 = vshrl.u32 %v5134, 7
        %v5136 = vsub.s32 7, %v5135
        %v5137 = vrot.slane %v4657, %v5136
        %v5138 = vmul.f32 %v5137, 0.0
        %v5139 = vmul.f32 %v4734, %v5137
        %v5140 = vmul.f32 %v4736, %v5137
        %v5144 = vrot.slane %v5138, 1
        %v5145 = vsel %vm4967, %v5144, %v5144
        %v5146 = vrot.slane %v5139, 1
        %v5147 = vsel %vm4967, %v5144, %v5146
        %v5148 = vrot.slane %v5140, 1
        %v5149 = vsel %vm4967, %v5144, %v5148
        %v5153 = vadd.f32 %v5130, %v5145
        %v5154 = vadd.f32 %v5131, %v5147
        %v5155 = vadd.f32 %v5132, %v5145
        %v5156 = vadd.f32 %v5133, %v5149
        %v5157 = vmul.f32 %v5153, 0.5
        %v5158 = vmul.f32 %v5154, 0.5
        %v5159 = vmul.f32 %v5155, 0.5
        %v5160 = vmul.f32 %v5156, 0.5
        %v5161 = vmul.f32 %v5153, 0.70710677
        %v5162 = vmul.f32 %v5154, 0.70710677
        %v5163 = vmul.f32 %v5155, 0.70710677
        %v5164 = vmul.f32 %v5156, 0.70710677
        %v5165 = vand.u32 2147483647, %v5161
        %v5166 = vand.u32 2147483647, %v5162
        %v5167 = vand.u32 2147483647, %v5163
        %v5168 = vand.u32 2147483647, %v5164
        %v5169 = vmul.f32 %v5165, 0.3275911
        %v5170 = vmul.f32 %v5166, 0.3275911
        %v5171 = vmul.f32 %v5167, 0.3275911
        %v5172 = vmul.f32 %v5168, 0.3275911
        %v5173 = vadd.f32 %v5169, 1.0
        %v5174 = vadd.f32 %v5170, 1.0
        %v5175 = vadd.f32 %v5171, 1.0
        %v5176 = vadd.f32 %v5172, 1.0
        %v5177 = vrcp.pop %v5173
        %v5178 = vmul.f32 1.0, %v5177
        %v5179 = vrcp.pop %v5174
        %v5180 = vmul.f32 1.0, %v5179
        %v5181 = vrcp.pop %v5175
        %v5182 = vmul.f32 1.0, %v5181
        %v5183 = vrcp.pop %v5176
        %v5184 = vmul.f32 1.0, %v5183
        %v5185 = vmul.f32 %v5178, 1.0614054
        %v5186 = vmul.f32 %v5180, 1.0614054
        %v5187 = vmul.f32 %v5182, 1.0614054
        %v5188 = vmul.f32 %v5184, 1.0614054
        %v5189 = vadd.f32 %v5185, -1.4531521
        %v5190 = vadd.f32 %v5186, -1.4531521
        %v5191 = vadd.f32 %v5187, -1.4531521
        %v5192 = vadd.f32 %v5188, -1.4531521
        %v5193 = vmul.f32 %v5178, %v5189
        %v5194 = vmul.f32 %v5180, %v5190
        %v5195 = vmul.f32 %v5182, %v5191
        %v5196 = vmul.f32 %v5184, %v5192
        %v5197 = vadd.f32 %v5193, 1.4214138
        %v5198 = vadd.f32 %v5194, 1.4214138
        %v5199 = vadd.f32 %v5195, 1.4214138
        %v5200 = vadd.f32 %v5196, 1.4214138
        %v5201 = vmul.f32 %v5178, %v5197
        %v5202 = vmul.f32 %v5180, %v5198
        %v5203 = vmul.f32 %v5182, %v5199
        %v5204 = vmul.f32 %v5184, %v5200
        %v5205 = vadd.f32 %v5201, -0.28449672
        %v5206 = vadd.f32 %v5202, -0.28449672
        %v5207 = vadd.f32 %v5203, -0.28449672
        %v5208 = vadd.f32 %v5204, -0.28449672
        %v5209 = vmul.f32 %v5178, %v5205
        %v5210 = vmul.f32 %v5180, %v5206
        %v5211 = vmul.f32 %v5182, %v5207
        %v5212 = vmul.f32 %v5184, %v5208
        %v5213 = vadd.f32 %v5209, 0.2548296
        %v5214 = vadd.f32 %v5210, 0.2548296
        %v5215 = vadd.f32 %v5211, 0.2548296
        %v5216 = vadd.f32 %v5212, 0.2548296
        %v5217 = vmul.f32 %v5178, %v5213
        %v5218 = vmul.f32 %v5180, %v5214
        %v5219 = vmul.f32 %v5182, %v5215
        %v5220 = vmul.f32 %v5184, %v5216
        %v5221 = vsub.f32 0.0, %v5161
        %v5222 = vsub.f32 0.0, %v5162
        %v5223 = vsub.f32 0.0, %v5163
        %v5224 = vsub.f32 0.0, %v5164
        %v5225 = vmul.f32 %v5221, %v5161
        %v5226 = vmul.f32 %v5222, %v5162
        %v5227 = vmul.f32 %v5223, %v5163
        %v5228 = vmul.f32 %v5224, %v5164
        %v5229 = vmul.f32 %v5225, 1.442695
        %v5230 = vpow.pop %v5229
        %v5231 = vmul.f32 %v5226, 1.442695
        %v5232 = vpow.pop %v5231
        %v5233 = vmul.f32 %v5227, 1.442695
        %v5234 = vpow.pop %v5233
        %v5235 = vmul.f32 %v5228, 1.442695
        %v5236 = vpow.pop %v5235
        %v5237 = vmul.f32 %v5217, %v5230
        %v5238 = vmul.f32 %v5218, %v5232
        %v5239 = vmul.f32 %v5219, %v5234
        %v5240 = vmul.f32 %v5220, %v5236
        %v5241 = vsub.f32 1.0, %v5237
        %v5242 = vsub.f32 1.0, %v5238
        %v5243 = vsub.f32 1.0, %v5239
        %v5244 = vsub.f32 1.0, %v5240
        %vm5245 = vcmp.ge.f32.partialorder %v5161, 0.0
        %vm5246 = vcmp.ge.f32.partialorder %v5162, 0.0
        %vm5247 = vcmp.ge.f32.partialorder %v5163, 0.0
        %vm5248 = vcmp.ge.f32.partialorder %v5164, 0.0
        %v5249 = vsub.f32 0.0, %v5241
        %v5250 = vsub.f32 0.0, %v5242
        %v5251 = vsub.f32 0.0, %v5243
        %v5252 = vsub.f32 0.0, %v5244
        %v5253 = vsel %vm5245, %v5241, %v5249
        %v5254 = vsel %vm5246, %v5242, %v5250
        %v5255 = vsel %vm5247, %v5243, %v5251
        %v5256 = vsel %vm5248, %v5244, %v5252
        %v5257 = vadd.f32 %v5253, 1.0
        %v5258 = vadd.f32 %v5254, 1.0
        %v5259 = vadd.f32 %v5255, 1.0
        %v5260 = vadd.f32 %v5256, 1.0
        %v5261 = vmul.f32 %v5157, %v5257
        %v5262 = vmul.f32 %v5158, %v5258
        %v5263 = vmul.f32 %v5159, %v5259
        %v5264 = vmul.f32 %v5160, %v5260
        %v5265 = vld [vmem:[%s769] sm:$0xff]
        %v5266 = vld [vmem:[%s769 + $0x8] sm:$0xff]
        %v5267 = vld [vmem:[%s769 + $0x10] sm:$0xff]
        %v5268 = vld [vmem:[%s769 + $0x18] sm:$0xff]
        %v5269 = vld [vmem:[%s656] sm:$0x1]
        %v5271 = vlaneseq
        %v5272 = vshrl.u32 %v5271, 7
        %v5273 = vsub.s32 0, %v5272
        %v5274 = vrot.slane %v5269, %v5273
        %v5277 = vsel %vm4662, %v5261, 0
        %v5280 = vsel %vm4662, %v5262, 0
        %v5283 = vsel %vm4662, %v5263, 0
        %v5286 = vsel %vm4662, %v5264, 0
        %5288 = vmatprep.subr.mxu0 0.0
        %5289 = vmatpush1.msra.mxu0 %v5265
        %5290 = vmatprep.subr.mxu0 0.0
        %5291 = vmatpush1.msra.mxu0 %v5266
        %5292 = vmatprep.subr.mxu0 0.0
        %5293 = vmatpush1.msra.mxu0 %v5267
        %5294 = vmatprep.subr.mxu0 0.0
        %5295 = vmatpush1.msra.mxu0 %v5268
        %5296 = vmatprep.subr.mxu0 0.0
        %5297 = vmatpush1.msra.mxu0 0.0
        %5298 = vmatprep.subr.mxu0 0.0
        %5299 = vmatpush1.msra.mxu0 0.0
        %5300 = vmatprep.subr.mxu0 0.0
        %5301 = vmatpush1.msra.mxu0 0.0
        %5302 = vmatprep.subr.mxu0 0.0
        %5303 = vmatpush1.msra.mxu0 0.0
        %5304 = vmatprep.subr.mxu0 0.0
        %5305 = vmatpush1.msra.mxu0 0.0
        %5306 = vmatprep.subr.mxu0 0.0
        %5307 = vmatpush1.msra.mxu0 0.0
        %5308 = vmatprep.subr.mxu0 0.0
        %5309 = vmatpush1.msra.mxu0 0.0
        %5310 = vmatprep.subr.mxu0 0.0
        %5311 = vmatpush1.msra.mxu0 0.0
        %5312 = vmatprep.subr.mxu0 0.0
        %5313 = vmatpush1.msra.mxu0 0.0
        %5314 = vmatprep.subr.mxu0 0.0
        %5315 = vmatpush1.msra.mxu0 0.0
        %5316 = vmatprep.subr.mxu0 0.0
        %5317 = vmatpush1.msra.mxu0 0.0
        %5318 = vmatprep.subr.mxu0 0.0
        %5319 = vmatpush1.msra.mxu0 0.0
        %5320 = vmatprep.subr.mxu0 0.0
        %5321 = vmatpush1.msra.mxu0 0.0
        %5322 = vmatprep.subr.mxu0 0.0
        %5323 = vmatpush1.msra.mxu0 0.0
        %5324 = vmatprep.subr.mxu0 0.0
        %5325 = vmatpush1.msra.mxu0 0.0
        %5326 = vmatprep.subr.mxu0 0.0
        %5327 = vmatpush1.msra.mxu0 0.0
        %5328 = vmatprep.subr.mxu0 0.0
        %5329 = vmatpush1.msra.mxu0 0.0
        %5330 = vmatprep.subr.mxu0 0.0
        %5331 = vmatpush1.msra.mxu0 0.0
        %5332 = vmatprep.subr.mxu0 0.0
        %5333 = vmatpush1.msra.mxu0 0.0
        %5334 = vmatprep.subr.mxu0 0.0
        %5335 = vmatpush1.msra.mxu0 0.0
        %5336 = vmatprep.subr.mxu0 0.0
        %5337 = vmatpush1.msra.mxu0 0.0
        %5338 = vmatprep.subr.mxu0 0.0
        %5339 = vmatpush1.msra.mxu0 0.0
        %5340 = vmatprep.subr.mxu0 0.0
        %5341 = vmatpush1.msra.mxu0 0.0
        %5342 = vmatprep.subr.mxu0 0.0
        %5343 = vmatpush1.msra.mxu0 0.0
        %5344 = vmatprep.subr.mxu0 0.0
        %5345 = vmatpush1.msra.mxu0 0.0
        %5346 = vmatprep.subr.mxu0 0.0
        %5347 = vmatpush1.msra.mxu0 0.0
        %5348 = vmatprep.subr.mxu0 0.0
        %5349 = vmatpush1.msra.mxu0 0.0
        %5350 = vmatprep.subr.mxu0 0.0
        %5351 = vmatpush1.msra.mxu0 0.0
        %5352 = vmatprep.mubr.f32.mxu0 0.0
        %5353 = vmatmul.mubr.f32.gmra.mrb[0].mxu0 %v5277
        %v5354 = vpop.f32.mrb[0].mxu0
        %v5355 = vadd.f32 %v5274, %v5354
        %v5356 = vpop.f32.mrb[0].mxu0
        %5357 = vmatprep.mubr.f32.mxu0 0.0
        %5358 = vmatmul.mubr.f32.gmra.mrb[0].mxu0 %v5280
        %v5359 = vpop.f32.mrb[0].mxu0
        %v5360 = vadd.f32 %v5274, %v5359
        %v5361 = vpop.f32.mrb[0].mxu0
        %5362 = vmatprep.mubr.f32.mxu0 0.0
        %5363 = vmatmul.mubr.f32.gmra.mrb[0].mxu0 %v5283
        %v5364 = vpop.f32.mrb[0].mxu0
        %v5365 = vadd.f32 %v5274, %v5364
        %v5366 = vpop.f32.mrb[0].mxu0
        %5367 = vmatprep.mubr.f32.mxu0 0.0
        %5368 = vmatmul.mubr.f32.gmra.mrb[0].mxu0 %v5286
        %v5369 = vpop.f32.mrb[0].mxu0
        %v5370 = vadd.f32 %v5274, %v5369
        %v5371 = vpop.f32.mrb[0].mxu0
        %5372 = vdwg.mxu0
        %v5373 = vsub.f32 0.0, %v5355
        %v5374 = vsub.f32 0.0, %v5360
        %v5375 = vsub.f32 0.0, %v5365
        %v5376 = vsub.f32 0.0, %v5370
        %v5377 = vmul.f32 %v5373, 1.442695
        %v5378 = vpow.pop %v5377
        %v5379 = vmul.f32 %v5374, 1.442695
        %v5380 = vpow.pop %v5379
        %v5381 = vmul.f32 %v5375, 1.442695
        %v5382 = vpow.pop %v5381
        %v5383 = vmul.f32 %v5376, 1.442695
        %v5384 = vpow.pop %v5383
        %v5385 = vadd.f32 %v5378, 1.0
        %v5386 = vadd.f32 %v5380, 1.0
        %v5387 = vadd.f32 %v5382, 1.0
        %v5388 = vadd.f32 %v5384, 1.0
        %v5389 = vrcp.pop %v5385
        %v5390 = vmul.f32 1.0, %v5389
        %v5391 = vrcp.pop %v5386
        %v5392 = vmul.f32 1.0, %v5391
        %v5393 = vrcp.pop %v5387
        %v5394 = vmul.f32 1.0, %v5393
        %v5395 = vrcp.pop %v5388
        %v5396 = vmul.f32 1.0, %v5395
        %5401 = vrot.lane.b32.xlu0 %v5390, 96
        %v5402 = vpop.permute.xlu0 %5401
        %5403 = vrot.lane.b32.xlu0 %v5392, 96
        %v5404 = vpop.permute.xlu0 %5403
        %5405 = vrot.lane.b32.xlu0 %v5394, 96
        %v5406 = vpop.permute.xlu0 %5405
        %5407 = vrot.lane.b32.xlu0 %v5396, 96
        %v5408 = vpop.permute.xlu0 %5407
        %v5413 = vmul.f32 %v5355, %v5402
        %v5414 = vmul.f32 %v5360, %v5404
        %v5415 = vmul.f32 %v5365, %v5406
        %v5416 = vmul.f32 %v5370, %v5408
        %v5417 = vadd.f32 %v4658, %v5413
        %v5418 = vadd.f32 %v4659, %v5414
        %v5419 = vadd.f32 %v4660, %v5415
        %v5420 = vadd.f32 %v4661, %v5416
        %5421 = vst.msk [vmem:[#allocation2] sm:$0xff] %vm4662, %v5417
        %5422 = vst.msk [vmem:[#allocation2 + $0x8] sm:$0xff] %vm4662, %v5418
        %5423 = vst.msk [vmem:[#allocation2 + $0x10] sm:$0xff] %vm4662, %v5419
        %5424 = vst.msk [vmem:[#allocation2 + $0x18] sm:$0xff] %vm4662, %v5420
        %p5425 = scmp.eq.s32.totalorder %s39, 1
        // Predicated region
        $region117: #{s4_backbone_forward.1} parent=87 // pred_check
          %p5426 = pneg %p5425
        $region118: #{s4_backbone_forward.1} parent=87 // pred_check_branch
          %5428 = sbr.rel (%p5426) target = $region120
        $region119: #{s4_backbone_forward.1} parent=87 // pred_region
          %v5429 = vld [vmem:[#allocation12] sm:$0x1]
          %v5431 = vlaneseq
          %v5432 = vshrl.u32 %v5431, 7
          %v5433 = vsub.s32 0, %v5432
          %v5434 = vrot.slane %v5429, %v5433
          %v5436 = vmul.f32 %v5417, %v5434
          %v5437 = vmul.f32 %v5418, %v5434
          %v5438 = vmul.f32 %v5419, %v5434
          %v5439 = vmul.f32 %v5420, %v5434
          %v5440 = vsel %vm4662, %v5436, 0.0
          %5441 = vadd.xlane.f32.xlu0 %v5440
          %v5442 = vpop.xlane.xlu0 %5441
          %v5443 = vsel %vm4662, %v5437, 0.0
          %5444 = vadd.xlane.f32.xlu0 %v5443
          %v5445 = vpop.xlane.xlu0 %5444
          %v5446 = vsel %vm4662, %v5438, 0.0
          %5447 = vadd.xlane.f32.xlu0 %v5446
          %v5448 = vpop.xlane.xlu0 %5447
          %v5449 = vsel %vm4662, %v5439, 0.0
          %5450 = vadd.xlane.f32.xlu0 %v5449
          %v5451 = vpop.xlane.xlu0 %5450
          %v5452 = vld [vmem:[#allocation3] sm:$0x1]
          %v5454 = vlaneseq
          %v5455 = vshrl.u32 %v5454, 7
          %v5456 = vsub.s32 0, %v5455
          %v5457 = vrot.slane %v5452, %v5456
          %5458 = vset.pattern.permute.xlu0 0
          %5459 = vperm.xlu0 %5458, %v5457
          %v5460 = vpop.permute.xlu0 %5459
          %v5462 = vadd.f32 %v5442, %v5460
          %v5463 = vadd.f32 %v5445, %v5460
          %v5464 = vadd.f32 %v5448, %v5460
          %v5465 = vadd.f32 %v5451, %v5460
          %v5466 = vld [vmem:[%s15] sm:$0xff]
          %v5467 = vld [vmem:[%s15 + $0x8] sm:$0xff]
          %v5468 = vld [vmem:[#allocation13] sm:$0x1]
          %v5470 = vlaneseq
          %v5471 = vshrl.u32 %v5470, 7
          %v5472 = vsub.s32 0, %v5471
          %v5473 = vrot.slane %v5468, %v5472
          %v5479 = vlaneseq
          %v5480 = vand.u32 %v5479, 127
          %v5481 = vlaneseq
          %v5482 = vshrl.u32 %v5481, 7
          %v5483 = vsub.s32 %v5480, %v5482
          %v5484 = vrot.slane %v5462, %v5483
          %v5485 = vadd.s32 %v5480, 4294967288
          %v5486 = vlaneseq
          %v5487 = vshrl.u32 %v5486, 7
          %v5488 = vsub.s32 %v5485, %v5487
          %v5489 = vrot.slane %v5463, %v5488
          %vm5490 = vcmask 130112
          %v5491 = vsel %vm5490, %v5489, %v5484
          %v5492 = vlaneseq
          %v5493 = vshrl.u32 %v5492, 7
          %v5494 = vsub.s32 %v5480, %v5493
          %v5495 = vrot.slane %v5464, %v5494
          %v5496 = vlaneseq
          %v5497 = vshrl.u32 %v5496, 7
          %v5498 = vsub.s32 %v5485, %v5497
          %v5499 = vrot.slane %v5465, %v5498
          %v5500 = vsel %vm5490, %v5499, %v5495
          %vm5501 = vcmask 1041409
          %v5502 = vsel %vm5501, %v5500, %v5491
          %vm5503 = vcmask 130048
          %v5504 = vsel %vm5503, %v5502, 0
          %5506 = vmatprep.subr.mxu0 0.0
          %5507 = vmatpush1.msra.mxu0 %v5466
          %5508 = vmatprep.subr.mxu0 0.0
          %5509 = vmatpush1.msra.mxu0 %v5467
          %5510 = vmatprep.subr.mxu0 0.0
          %5511 = vmatpush1.msra.mxu0 0.0
          %5512 = vmatprep.subr.mxu0 0.0
          %5513 = vmatpush1.msra.mxu0 0.0
          %5514 = vmatprep.subr.mxu0 0.0
          %5515 = vmatpush1.msra.mxu0 0.0
          %5516 = vmatprep.subr.mxu0 0.0
          %5517 = vmatpush1.msra.mxu0 0.0
          %5518 = vmatprep.subr.mxu0 0.0
          %5519 = vmatpush1.msra.mxu0 0.0
          %5520 = vmatprep.subr.mxu0 0.0
          %5521 = vmatpush1.msra.mxu0 0.0
          %5522 = vmatprep.subr.mxu0 0.0
          %5523 = vmatpush1.msra.mxu0 0.0
          %5524 = vmatprep.subr.mxu0 0.0
          %5525 = vmatpush1.msra.mxu0 0.0
          %5526 = vmatprep.subr.mxu0 0.0
          %5527 = vmatpush1.msra.mxu0 0.0
          %5528 = vmatprep.subr.mxu0 0.0
          %5529 = vmatpush1.msra.mxu0 0.0
          %5530 = vmatprep.subr.mxu0 0.0
          %5531 = vmatpush1.msra.mxu0 0.0
          %5532 = vmatprep.subr.mxu0 0.0
          %5533 = vmatpush1.msra.mxu0 0.0
          %5534 = vmatprep.subr.mxu0 0.0
          %5535 = vmatpush1.msra.mxu0 0.0
          %5536 = vmatprep.subr.mxu0 0.0
          %5537 = vmatpush1.msra.mxu0 0.0
          %5538 = vmatprep.subr.mxu0 0.0
          %5539 = vmatpush1.msra.mxu0 0.0
          %5540 = vmatprep.subr.mxu0 0.0
          %5541 = vmatpush1.msra.mxu0 0.0
          %5542 = vmatprep.subr.mxu0 0.0
          %5543 = vmatpush1.msra.mxu0 0.0
          %5544 = vmatprep.subr.mxu0 0.0
          %5545 = vmatpush1.msra.mxu0 0.0
          %5546 = vmatprep.subr.mxu0 0.0
          %5547 = vmatpush1.msra.mxu0 0.0
          %5548 = vmatprep.subr.mxu0 0.0
          %5549 = vmatpush1.msra.mxu0 0.0
          %5550 = vmatprep.subr.mxu0 0.0
          %5551 = vmatpush1.msra.mxu0 0.0
          %5552 = vmatprep.subr.mxu0 0.0
          %5553 = vmatpush1.msra.mxu0 0.0
          %5554 = vmatprep.subr.mxu0 0.0
          %5555 = vmatpush1.msra.mxu0 0.0
          %5556 = vmatprep.subr.mxu0 0.0
          %5557 = vmatpush1.msra.mxu0 0.0
          %5558 = vmatprep.subr.mxu0 0.0
          %5559 = vmatpush1.msra.mxu0 0.0
          %5560 = vmatprep.subr.mxu0 0.0
          %5561 = vmatpush1.msra.mxu0 0.0
          %5562 = vmatprep.subr.mxu0 0.0
          %5563 = vmatpush1.msra.mxu0 0.0
          %5564 = vmatprep.subr.mxu0 0.0
          %5565 = vmatpush1.msra.mxu0 0.0
          %5566 = vmatprep.subr.mxu0 0.0
          %5567 = vmatpush1.msra.mxu0 0.0
          %5568 = vmatprep.subr.mxu0 0.0
          %5569 = vmatpush1.msra.mxu0 0.0
          %5570 = vmatprep.mubr.f32.mxu0 0.0
          %5571 = vmatmul.mubr.f32.gmra.mrb[0].mxu0 %v5504
          %v5572 = vpop.f32.mrb[0].mxu0
          %v5573 = vadd.f32 %v5473, %v5572
          %v5574 = vpop.f32.mrb[0].mxu0
          %5575 = vdwg.mxu0
          %vm5576 = vcmask 25600
          %5577 = vst.msk [vmem:[#allocation15] sm:$0x3] %vm5576, %v5573
        $region120: #{s4_backbone_forward.1} parent=87 // pred_fallthru
          _
        // Predicated region
        $region121: #{s4_backbone_forward.1} parent=87 // pred_check
          %p5578 = pneg %p459
        $region122: #{s4_backbone_forward.1} parent=87 // pred_check_branch
          %5580 = sbr.rel (%p5578) target = $region124
        $region123: #{s4_backbone_forward.1} parent=87 // pred_region
          %s5582 = ssub.s32 32, 32
          %5583 = vsyncadd [#allocation6], %s5582
          %s5585 = sshll.u32 [#allocation15], 4
          %s5586 = int_to_ptr.vmem [resolvable:$true] %s5585
          %5588 = dma.vmem_to_hbm [thread:$0]  %s5586, 32, %s17, [#allocation6]
        $region124: #{s4_backbone_forward.1} parent=87 // pred_fallthru
          _
        // Predicated region
        $region125: #{s4_backbone_forward.1} parent=87 // pred_check
          %p5589 = pneg %p459
        $region126: #{s4_backbone_forward.1} parent=87 // pred_check_branch
          %5591 = sbr.rel (%p5589) target = $region128
        $region127: #{s4_backbone_forward.1} parent=87 // pred_region
          %5592 = dma.done [#allocation6], 32
        $region128: #{s4_backbone_forward.1} parent=87 // pred_fallthru
          _
      $region88: #{s4_backbone_forward.1} parent=5 // pred_fallthru
        _
      %p5593 = scmp.le.s32.totalorder 2, %s34
      // Predicated region
      $region129: #{s4_backbone_forward.1} parent=5 // pred_check
        %p5594 = pneg %p5593
      $region130: #{s4_backbone_forward.1} parent=5 // pred_check_branch
        %5596 = sbr.rel (%p5594) target = $region132
      $region131: #{s4_backbone_forward.1} parent=5 // pred_region
        %s5597 = ssub.s32 %s34, 2
      $region132: #{s4_backbone_forward.1} parent=5 // pred_fallthru
        _
    $region6: #{s4_backbone_forward.1} parent=1 // loop_footer
      %s38 = sadd.s32 1, %s34
    $region7: #{s4_backbone_forward.1} parent=1 // loop_footer_branch
      %33 = sbr.rel target = $region3
    $region8: #{s4_backbone_forward.1} parent=1 // loop_exit
      _
    %5598 = vsyncpa [#allocation5], 1
    %s5599 = scalar_lea.sflag [#allocation5], 1
    %5600 = vsyncpa %s5599, 1
    %5601 = vsyncpa [#allocation8], 1
    %s5602 = scalar_lea.sflag [#allocation8], 1
    %5603 = vsyncpa %s5602, 1
    %5604 = vsyncpa [#allocation11], 1
    %s5605 = scalar_lea.sflag [#allocation11], 1
    %5606 = vsyncpa %s5605, 1
    %5607 = vsyncpa [#allocation14], 1
    %5608 = vsyncpa [#allocation6], 1
    %s5609 = scalar_lea.sflag [#allocation6], 1
    %5610 = vsyncpa %s5609, 1

</llo_original>
